<compile_context>
chip_gen: v6e
topology: v6e:2x2x1
jax: 0.10.0
libtpu: 0.0.40
codegen_flags: <defaults>
</compile_context>

<pallas_src>
import numpy as np
import jax
import jax.numpy as jnp
from jax.experimental import pallas as pl
from jax.experimental.pallas import tpu as pltpu

# -------- model config (small shapes consistent with the module) --------
FIELD_DIMS = (10, 20, 30, 40, 50, 60, 70, 80)   # 8 fields
NUM_FIELDS = len(FIELD_DIMS)
EMBED_DIM  = 16
ATTEN_DIM  = 32            # atten_embed_dim (divisible by num_heads)
NUM_HEADS  = 2
HEAD_DIM   = ATTEN_DIM // NUM_HEADS
NUM_LAYERS = 3
MLP_DIMS   = (64, 64, 64)
BATCH      = 4
BN_EPS     = 1e-5


def _autoint_kernel(x_emb_ref, lin_vals_ref,
                    w_embA_ref, b_embA_ref,
                    attn_in_w_ref, attn_in_b_ref,
                    attn_out_w_ref, attn_out_b_ref,
                    fc_w_ref,
                    w1_ref, b1_ref, w2_ref, b2_ref, w3_ref, b3_ref,
                    wo_ref, bias_sum_ref,
                    out_ref):
    TB, F, E = x_emb_ref.shape
    A, H, Dh = ATTEN_DIM, NUM_HEADS, HEAD_DIM
    N = TB * F

    x_emb = x_emb_ref[...]                 # (TB, F, E)  -- FRN(identity) already applied
    x2 = x_emb.reshape(N, E)               # layout-preserving: F == sublane count

    # fused atten_embedding | V_res projection: (N, E) @ (E, 2A)
    proj = jnp.dot(x2, w_embA_ref[...], preferred_element_type=jnp.float32) + b_embA_ref[...]
    cross = proj[:, :A]                    # (N, A)
    v_res = proj[:, A:]                    # (N, A)

    # stack of nn.MultiheadAttention(A, H) self-attention layers (dropout off).
    # q-scale is folded into attn_in_w / attn_in_b host-side.
    for l in range(NUM_LAYERS):
        qkv = jnp.dot(cross, attn_in_w_ref[l],
                      preferred_element_type=jnp.float32) + attn_in_b_ref[l]   # (N, 3A)
        acc = None
        for h in range(H):
            qh = qkv[:, h * Dh:(h + 1) * Dh].reshape(TB, F, Dh)
            kh = qkv[:, A + h * Dh: A + (h + 1) * Dh].reshape(TB, F, Dh)
            vh = qkv[:, 2 * A + h * Dh: 2 * A + (h + 1) * Dh].reshape(TB, F, Dh)
            s = jnp.einsum('bqd,bkd->bqk', qh, kh, preferred_element_type=jnp.float32)
            s = s - jnp.max(s, axis=-1, keepdims=True)
            p = jnp.exp(s)
            p = p * pl.reciprocal(jnp.sum(p, axis=-1, keepdims=True), approx=True)
            oh = jnp.einsum('bqk,bkd->bqd', p, vh, preferred_element_type=jnp.float32)
            # per-head slice of the (pre-transposed) output projection -> no concat needed
            contrib = jnp.dot(oh.reshape(N, Dh), attn_out_w_ref[l, h],
                              preferred_element_type=jnp.float32)
            acc = contrib if acc is None else acc + contrib
        cross = acc + attn_out_b_ref[l]                                        # (N, A)

    # residual branch + ReLU
    cross = jnp.maximum(cross + v_res, 0.0)                                    # (N, A)

    # attn_fc: Linear(F*A -> 1) as a VPU multiply + reduce (no degenerate N=1 MXU pass)
    tmp = cross.reshape(TB, F, A) * fc_w_ref[...]                              # (TB, F, A)
    attn_term = jnp.sum(jnp.sum(tmp, axis=-1), axis=-1)                        # (TB,)

    # FeaturesLinear: sum of per-field 1-d embeddings (bias folded into bias_sum)
    lin_term = jnp.sum(lin_vals_ref[...], axis=1)                              # (TB,)

    # MLP: [Linear, BN(eval, folded), ReLU, Dropout(off)] x3 + Linear(->1 as reduce)
    h1 = jnp.maximum(jnp.dot(x_emb.reshape(TB, F * E), w1_ref[...],
                             preferred_element_type=jnp.float32) + b1_ref[...], 0.0)
    h2 = jnp.maximum(jnp.dot(h1, w2_ref[...],
                             preferred_element_type=jnp.float32) + b2_ref[...], 0.0)
    h3 = jnp.maximum(jnp.dot(h2, w3_ref[...],
                             preferred_element_type=jnp.float32) + b3_ref[...], 0.0)
    mlp_term = jnp.sum(h3 * wo_ref[...], axis=-1)                              # (TB,)

    # lane-dense writeback: (1, TB)
    out_ref[...] = (lin_term + attn_term + mlp_term)[None, :] + bias_sum_ref[...]


def prepare_kernel_params(p):
    """Host-side (one-time) weight preprocessing: transpose to (in, out) layout, fuse
    wa|wres, fold q-scale, eval-BN scale, and the three scalar output biases."""
    A, H, Dh = ATTEN_DIM, NUM_HEADS, HEAD_DIM
    scale = 1.0 / float(np.sqrt(Dh))
    # TODO(synk): BN folding assumes default running stats / identity affine; trained BN
    # params would need to be folded the same way (still host-side, same kernel).
    bn = 1.0 / float(np.sqrt(1.0 + BN_EPS))

    w_embA = jnp.concatenate([p['wa'].T, p['wres'].T], axis=1)                 # (E, 2A)
    b_embA = jnp.concatenate([p['ba'], p['bres']], axis=0)[None, :]            # (1, 2A)

    in_w_t = jnp.transpose(p['attn_in_w'], (0, 2, 1))                          # (L, A, 3A)
    in_w_t = in_w_t.at[:, :, :A].multiply(scale)                               # fold q-scale
    in_b = p['attn_in_b'].at[:, :A].multiply(scale)                            # (L, 3A)

    out_w_t = jnp.transpose(p['attn_out_w'], (0, 2, 1)).reshape(
        NUM_LAYERS, H, Dh, A)                                                  # per-head blocks

    return {
        'w_embA': w_embA,
        'b_embA': b_embA,
        'attn_in_w': in_w_t,
        'attn_in_b': in_b[:, None, :],                                         # (L, 1, 3A)
        'attn_out_w': out_w_t,
        'attn_out_b': p['attn_out_b'][:, None, :],                             # (L, 1, A)
        'fc_w': p['fc_w'].reshape(NUM_FIELDS, ATTEN_DIM),                      # (F, A)
        'w1': bn * p['w1'].T, 'b1': (bn * p['b1'])[None, :],
        'w2': bn * p['w2'].T, 'b2': (bn * p['b2'])[None, :],
        'w3': bn * p['w3'].T, 'b3': (bn * p['b3'])[None, :],
        'wo': p['wo'],                                                         # (1, H3)
        'bias_sum': (p['lin_bias'] + p['fc_b'] + p['bo']).reshape(1, 1),
    }


def autoint_plus_frn(x_idx, params):
    """x_idx: (B, NUM_FIELDS) int32 field indices -> (B, 1) f32 prediction."""
    idx = x_idx + params['offsets'][None, :]
    # TODO(synk): embedding gather stays in XLA; fusing it needs a per-row DMA gather
    # (scalar-prefetched indices + pl.ANY table refs) and only pays off at large batch.
    x_emb = jnp.take(params['emb_table'], idx, axis=0)               # (B, F, E)
    # FRN is None in the reference __init__ -> identity refinement.
    lin_vals = jnp.take(params['lin_table'], idx, axis=0)[..., 0]    # (B, F)

    B = x_idx.shape[0]
    F, E = NUM_FIELDS, EMBED_DIM
    TB = B if B <= 128 else 128
    B_pad = ((B + TB - 1) // TB) * TB
    if B_pad != B:
        pad = B_pad - B
        x_emb = jnp.pad(x_emb, ((0, pad), (0, 0), (0, 0)))
        lin_vals = jnp.pad(lin_vals, ((0, pad), (0, 0)))

    kp = params['kernel']
    weight_names = ['w_embA', 'b_embA', 'attn_in_w', 'attn_in_b', 'attn_out_w',
                    'attn_out_b', 'fc_w', 'w1', 'b1', 'w2', 'b2', 'w3', 'b3',
                    'wo', 'bias_sum']
    weights = [kp[n] for n in weight_names]

    def resident_spec(a):
        nd = a.ndim
        return pl.BlockSpec(a.shape, lambda b, _nd=nd: (0,) * _nd)

    in_specs = ([pl.BlockSpec((TB, F, E), lambda b: (b, 0, 0)),
                 pl.BlockSpec((TB, F), lambda b: (b, 0))]
                + [resident_spec(w) for w in weights])

    out = pl.pallas_call(
        _autoint_kernel,
        grid=(B_pad // TB,),
        in_specs=in_specs,
        out_specs=pl.BlockSpec((1, TB), lambda b: (0, b)),
        out_shape=jax.ShapeDtypeStruct((1, B_pad), jnp.float32),
        compiler_params=pltpu.CompilerParams(dimension_semantics=("parallel",)),
    )(x_emb, lin_vals, *weights)

    return out[0, :B].reshape(B, 1)


def init_params(key):
    total = sum(FIELD_DIMS)
    ks = jax.random.split(key, 20)

    def nrm(k, shape, s=0.05):
        return jax.random.normal(k, shape, jnp.float32) * s

    D0 = NUM_FIELDS * EMBED_DIM
    raw = {
        'offsets':    jnp.asarray(np.concatenate(([0], np.cumsum(FIELD_DIMS)[:-1])).astype(np.int32)),
        'emb_table':  nrm(ks[0], (total, EMBED_DIM)),
        'lin_table':  nrm(ks[1], (total, 1)),
        'lin_bias':   jnp.zeros((), jnp.float32),
        'wa':         nrm(ks[2], (ATTEN_DIM, EMBED_DIM)),
        'ba':         nrm(ks[3], (ATTEN_DIM,)),
        'attn_in_w':  nrm(ks[4], (NUM_LAYERS, 3 * ATTEN_DIM, ATTEN_DIM)),
        'attn_in_b':  nrm(ks[5], (NUM_LAYERS, 3 * ATTEN_DIM)),
        'attn_out_w': nrm(ks[6], (NUM_LAYERS, ATTEN_DIM, ATTEN_DIM)),
        'attn_out_b': nrm(ks[7], (NUM_LAYERS, ATTEN_DIM)),
        'wres':       nrm(ks[8], (ATTEN_DIM, EMBED_DIM)),
        'bres':       nrm(ks[9], (ATTEN_DIM,)),
        'fc_w':       nrm(ks[10], (1, NUM_FIELDS * ATTEN_DIM)),
        'fc_b':       jnp.zeros((), jnp.float32),
        'w1':         nrm(ks[11], (MLP_DIMS[0], D0)),
        'b1':         nrm(ks[12], (MLP_DIMS[0],)),
        'w2':         nrm(ks[13], (MLP_DIMS[1], MLP_DIMS[0])),
        'b2':         nrm(ks[14], (MLP_DIMS[1],)),
        'w3':         nrm(ks[15], (MLP_DIMS[2], MLP_DIMS[1])),
        'b3':         nrm(ks[16], (MLP_DIMS[2],)),
        'wo':         nrm(ks[17], (1, MLP_DIMS[2])),
        'bo':         jnp.zeros((), jnp.float32),
    }
    raw['kernel'] = prepare_kernel_params(raw)
    return raw


if __name__ == "__main__":
    key = jax.random.PRNGKey(0)
    pkey, xkey = jax.random.split(key)
    params = init_params(pkey)

    maxvals = jnp.asarray(FIELD_DIMS, jnp.int32)
    x = jax.random.randint(xkey, (BATCH, NUM_FIELDS), 0, 10 ** 9,
                           dtype=jnp.int32) % maxvals[None, :]

    y = jax.jit(autoint_plus_frn)(x, params)
    jax.block_until_ready(y)
    assert y.shape == (BATCH, 1) and y.dtype == jnp.float32
    assert bool(jnp.all(jnp.isfinite(y)))
    print("KERNEL_OK")
</pallas_src>

<mosaic_0001>
module attributes {stable_mosaic.version = 11 : i64} {
  func.func @_autoint_kernel(%arg0: i32, %arg1: memref<4x8x16xf32, #tpu.memory_space<vmem>>, %arg2: memref<4x8xf32, #tpu.memory_space<vmem>>, %arg3: memref<16x64xf32, #tpu.memory_space<vmem>>, %arg4: memref<1x64xf32, #tpu.memory_space<vmem>>, %arg5: memref<3x32x96xf32, #tpu.memory_space<vmem>>, %arg6: memref<3x1x96xf32, #tpu.memory_space<vmem>>, %arg7: memref<3x2x16x32xf32, #tpu.memory_space<vmem>>, %arg8: memref<3x1x32xf32, #tpu.memory_space<vmem>>, %arg9: memref<8x32xf32, #tpu.memory_space<vmem>>, %arg10: memref<128x64xf32, #tpu.memory_space<vmem>>, %arg11: memref<1x64xf32, #tpu.memory_space<vmem>>, %arg12: memref<64x64xf32, #tpu.memory_space<vmem>>, %arg13: memref<1x64xf32, #tpu.memory_space<vmem>>, %arg14: memref<64x64xf32, #tpu.memory_space<vmem>>, %arg15: memref<1x64xf32, #tpu.memory_space<vmem>>, %arg16: memref<1x64xf32, #tpu.memory_space<vmem>>, %arg17: memref<1x1xf32, #tpu.memory_space<vmem>>, %arg18: memref<1x4xf32, #tpu.memory_space<vmem>>) attributes {dimension_semantics = [#tpu.dimension_semantics<parallel>], iteration_bounds = array<i64: 1>, scalar_prefetch = 0 : i64, scratch_operands = 0 : i64, tpu.core_type = #tpu.core_type<tc>, window_params = [{transform_indices = @transform_0, window_bounds = array<i64: 4, 8, 16>}, {transform_indices = @transform_1, window_bounds = array<i64: 4, 8>}, {pipeline_mode = #tpu.pipeline_mode<synchronous>, transform_indices = @transform_2, window_bounds = array<i64: 16, 64>}, {pipeline_mode = #tpu.pipeline_mode<synchronous>, transform_indices = @transform_3, window_bounds = array<i64: 1, 64>}, {pipeline_mode = #tpu.pipeline_mode<synchronous>, transform_indices = @transform_4, window_bounds = array<i64: 3, 32, 96>}, {pipeline_mode = #tpu.pipeline_mode<synchronous>, transform_indices = @transform_5, window_bounds = array<i64: 3, 1, 96>}, {pipeline_mode = #tpu.pipeline_mode<synchronous>, transform_indices = @transform_6, window_bounds = array<i64: 3, 2, 16, 32>}, {pipeline_mode = #tpu.pipeline_mode<synchronous>, transform_indices = @transform_7, window_bounds = array<i64: 3, 1, 32>}, {pipeline_mode = #tpu.pipeline_mode<synchronous>, transform_indices = @transform_8, window_bounds = array<i64: 8, 32>}, {pipeline_mode = #tpu.pipeline_mode<synchronous>, transform_indices = @transform_9, window_bounds = array<i64: 128, 64>}, {pipeline_mode = #tpu.pipeline_mode<synchronous>, transform_indices = @transform_10, window_bounds = array<i64: 1, 64>}, {pipeline_mode = #tpu.pipeline_mode<synchronous>, transform_indices = @transform_11, window_bounds = array<i64: 64, 64>}, {pipeline_mode = #tpu.pipeline_mode<synchronous>, transform_indices = @transform_12, window_bounds = array<i64: 1, 64>}, {pipeline_mode = #tpu.pipeline_mode<synchronous>, transform_indices = @transform_13, window_bounds = array<i64: 64, 64>}, {pipeline_mode = #tpu.pipeline_mode<synchronous>, transform_indices = @transform_14, window_bounds = array<i64: 1, 64>}, {pipeline_mode = #tpu.pipeline_mode<synchronous>, transform_indices = @transform_15, window_bounds = array<i64: 1, 64>}, {pipeline_mode = #tpu.pipeline_mode<synchronous>, transform_indices = @transform_16, window_bounds = array<i64: 1, 1>}, {transform_indices = @transform_17, window_bounds = array<i64: 1, 4>}]} {
    %c0 = arith.constant 0 : index
    %c0_0 = arith.constant 0 : index
    %c0_1 = arith.constant 0 : index
    %0 = vector.load %arg1[%c0, %c0_0, %c0_1] : memref<4x8x16xf32, #tpu.memory_space<vmem>>, vector<4x8x16xf32>
    %1 = vector.shape_cast %0 : vector<4x8x16xf32> to vector<32x16xf32>
    %c0_2 = arith.constant 0 : index
    %c0_3 = arith.constant 0 : index
    %2 = vector.load %arg3[%c0_2, %c0_3] : memref<16x64xf32, #tpu.memory_space<vmem>>, vector<16x64xf32>
    %cst = arith.constant dense<0.000000e+00> : vector<32x64xf32>
    %3 = tpu.matmul %1, %2, %cst {dimension_numbers = #tpu.dot_dimension_numbers<[1], [0], [0], [1], [0, 0, 1, 1], [], []>} : vector<32x16xf32>, vector<16x64xf32>, vector<32x64xf32> -> vector<32x64xf32>
    %c0_4 = arith.constant 0 : index
    %c0_5 = arith.constant 0 : index
    %4 = vector.load %arg4[%c0_4, %c0_5] : memref<1x64xf32, #tpu.memory_space<vmem>>, vector<1x64xf32>
    %5 = vector.broadcast %4 : vector<1x64xf32> to vector<32x64xf32>
    %6 = arith.addf %3, %5 : vector<32x64xf32>
    %7 = vector.extract_strided_slice %6 {offsets = [0, 0], sizes = [32, 32], strides = [1, 1]} : vector<32x64xf32> to vector<32x32xf32>
    %8 = vector.extract_strided_slice %6 {offsets = [0, 32], sizes = [32, 32], strides = [1, 1]} : vector<32x64xf32> to vector<32x32xf32>
    %c0_6 = arith.constant 0 : index
    %c0_7 = arith.constant 0 : index
    %c0_8 = arith.constant 0 : index
    %9 = vector.load %arg5[%c0_6, %c0_7, %c0_8] : memref<3x32x96xf32, #tpu.memory_space<vmem>>, vector<1x32x96xf32>
    %10 = vector.shape_cast %9 : vector<1x32x96xf32> to vector<32x96xf32>
    %cst_9 = arith.constant dense<0.000000e+00> : vector<32x96xf32>
    %11 = tpu.matmul %7, %10, %cst_9 {dimension_numbers = #tpu.dot_dimension_numbers<[1], [0], [0], [1], [0, 0, 1, 1], [], []>} : vector<32x32xf32>, vector<32x96xf32>, vector<32x96xf32> -> vector<32x96xf32>
    %c0_10 = arith.constant 0 : index
    %c0_11 = arith.constant 0 : index
    %c0_12 = arith.constant 0 : index
    %12 = vector.load %arg6[%c0_10, %c0_11, %c0_12] : memref<3x1x96xf32, #tpu.memory_space<vmem>>, vector<1x1x96xf32>
    %13 = vector.shape_cast %12 : vector<1x1x96xf32> to vector<1x96xf32>
    %14 = vector.broadcast %13 : vector<1x96xf32> to vector<32x96xf32>
    %15 = arith.addf %11, %14 : vector<32x96xf32>
    %16 = vector.extract_strided_slice %15 {offsets = [0, 0], sizes = [32, 16], strides = [1, 1]} : vector<32x96xf32> to vector<32x16xf32>
    %17 = vector.shape_cast %16 : vector<32x16xf32> to vector<4x8x16xf32>
    %18 = vector.extract_strided_slice %15 {offsets = [0, 32], sizes = [32, 16], strides = [1, 1]} : vector<32x96xf32> to vector<32x16xf32>
    %19 = vector.shape_cast %18 : vector<32x16xf32> to vector<4x8x16xf32>
    %20 = vector.extract_strided_slice %15 {offsets = [0, 64], sizes = [32, 16], strides = [1, 1]} : vector<32x96xf32> to vector<32x16xf32>
    %21 = vector.shape_cast %20 : vector<32x16xf32> to vector<4x8x16xf32>
    "tpu.trace_start"() <{level = 10 : i32, message = "bqd,bkd->bqk"}> : () -> ()
    %cst_13 = arith.constant dense<0.000000e+00> : vector<4x8x8xf32>
    %22 = tpu.matmul %17, %19, %cst_13 {dimension_numbers = #tpu.dot_dimension_numbers<[2], [2], [1], [1], [0, 0, 0, 1, 1, 1], [0], [0]>} : vector<4x8x16xf32>, vector<4x8x16xf32>, vector<4x8x8xf32> -> vector<4x8x8xf32>
    "tpu.trace_stop"() : () -> ()
    %cst_14 = arith.constant dense<0xFF800000> : vector<4x8xf32>
    %23 = vector.multi_reduction <maximumf>, %22, %cst_14 [2] : vector<4x8x8xf32> to vector<4x8xf32>
    %24 = vector.shape_cast %23 : vector<4x8xf32> to vector<4x8x1xf32>
    %25 = vector.broadcast %24 : vector<4x8x1xf32> to vector<4x8x8xf32>
    %26 = arith.subf %22, %25 : vector<4x8x8xf32>
    %27 = math.exp %26 : vector<4x8x8xf32>
    %cst_15 = arith.constant dense<0.000000e+00> : vector<4x8xf32>
    %28 = vector.multi_reduction <add>, %27, %cst_15 [2] : vector<4x8x8xf32> to vector<4x8xf32>
    %29 = vector.shape_cast %28 : vector<4x8xf32> to vector<4x8x1xf32>
    %30 = tpu.reciprocal %29 {approx = true} : vector<4x8x1xf32> -> vector<4x8x1xf32>
    %31 = vector.broadcast %30 : vector<4x8x1xf32> to vector<4x8x8xf32>
    %32 = arith.mulf %27, %31 : vector<4x8x8xf32>
    "tpu.trace_start"() <{level = 10 : i32, message = "bqk,bkd->bqd"}> : () -> ()
    %cst_16 = arith.constant dense<0.000000e+00> : vector<4x8x16xf32>
    %33 = tpu.matmul %32, %21, %cst_16 {dimension_numbers = #tpu.dot_dimension_numbers<[2], [1], [1], [2], [0, 0, 0, 1, 1, 2], [0], [0]>} : vector<4x8x8xf32>, vector<4x8x16xf32>, vector<4x8x16xf32> -> vector<4x8x16xf32>
    "tpu.trace_stop"() : () -> ()
    %34 = vector.shape_cast %33 : vector<4x8x16xf32> to vector<32x16xf32>
    %c0_17 = arith.constant 0 : index
    %c0_18 = arith.constant 0 : index
    %c0_19 = arith.constant 0 : index
    %c0_20 = arith.constant 0 : index
    %35 = vector.load %arg7[%c0_17, %c0_18, %c0_19, %c0_20] : memref<3x2x16x32xf32, #tpu.memory_space<vmem>>, vector<1x1x16x32xf32>
    %36 = vector.shape_cast %35 : vector<1x1x16x32xf32> to vector<16x32xf32>
    %cst_21 = arith.constant dense<0.000000e+00> : vector<32x32xf32>
    %37 = tpu.matmul %34, %36, %cst_21 {dimension_numbers = #tpu.dot_dimension_numbers<[1], [0], [0], [1], [0, 0, 1, 1], [], []>} : vector<32x16xf32>, vector<16x32xf32>, vector<32x32xf32> -> vector<32x32xf32>
    %38 = vector.extract_strided_slice %15 {offsets = [0, 16], sizes = [32, 16], strides = [1, 1]} : vector<32x96xf32> to vector<32x16xf32>
    %39 = vector.shape_cast %38 : vector<32x16xf32> to vector<4x8x16xf32>
    %40 = vector.extract_strided_slice %15 {offsets = [0, 48], sizes = [32, 16], strides = [1, 1]} : vector<32x96xf32> to vector<32x16xf32>
    %41 = vector.shape_cast %40 : vector<32x16xf32> to vector<4x8x16xf32>
    %42 = vector.extract_strided_slice %15 {offsets = [0, 80], sizes = [32, 16], strides = [1, 1]} : vector<32x96xf32> to vector<32x16xf32>
    %43 = vector.shape_cast %42 : vector<32x16xf32> to vector<4x8x16xf32>
    "tpu.trace_start"() <{level = 10 : i32, message = "bqd,bkd->bqk"}> : () -> ()
    %cst_22 = arith.constant dense<0.000000e+00> : vector<4x8x8xf32>
    %44 = tpu.matmul %39, %41, %cst_22 {dimension_numbers = #tpu.dot_dimension_numbers<[2], [2], [1], [1], [0, 0, 0, 1, 1, 1], [0], [0]>} : vector<4x8x16xf32>, vector<4x8x16xf32>, vector<4x8x8xf32> -> vector<4x8x8xf32>
    "tpu.trace_stop"() : () -> ()
    %cst_23 = arith.constant dense<0xFF800000> : vector<4x8xf32>
    %45 = vector.multi_reduction <maximumf>, %44, %cst_23 [2] : vector<4x8x8xf32> to vector<4x8xf32>
    %46 = vector.shape_cast %45 : vector<4x8xf32> to vector<4x8x1xf32>
    %47 = vector.broadcast %46 : vector<4x8x1xf32> to vector<4x8x8xf32>
    %48 = arith.subf %44, %47 : vector<4x8x8xf32>
    %49 = math.exp %48 : vector<4x8x8xf32>
    %cst_24 = arith.constant dense<0.000000e+00> : vector<4x8xf32>
    %50 = vector.multi_reduction <add>, %49, %cst_24 [2] : vector<4x8x8xf32> to vector<4x8xf32>
    %51 = vector.shape_cast %50 : vector<4x8xf32> to vector<4x8x1xf32>
    %52 = tpu.reciprocal %51 {approx = true} : vector<4x8x1xf32> -> vector<4x8x1xf32>
    %53 = vector.broadcast %52 : vector<4x8x1xf32> to vector<4x8x8xf32>
    %54 = arith.mulf %49, %53 : vector<4x8x8xf32>
    "tpu.trace_start"() <{level = 10 : i32, message = "bqk,bkd->bqd"}> : () -> ()
    %cst_25 = arith.constant dense<0.000000e+00> : vector<4x8x16xf32>
    %55 = tpu.matmul %54, %43, %cst_25 {dimension_numbers = #tpu.dot_dimension_numbers<[2], [1], [1], [2], [0, 0, 0, 1, 1, 2], [0], [0]>} : vector<4x8x8xf32>, vector<4x8x16xf32>, vector<4x8x16xf32> -> vector<4x8x16xf32>
    "tpu.trace_stop"() : () -> ()
    %56 = vector.shape_cast %55 : vector<4x8x16xf32> to vector<32x16xf32>
    %c0_26 = arith.constant 0 : index
    %c1 = arith.constant 1 : index
    %c0_27 = arith.constant 0 : index
    %c0_28 = arith.constant 0 : index
    %57 = vector.load %arg7[%c0_26, %c1, %c0_27, %c0_28] : memref<3x2x16x32xf32, #tpu.memory_space<vmem>>, vector<1x1x16x32xf32>
    %58 = vector.shape_cast %57 : vector<1x1x16x32xf32> to vector<16x32xf32>
    %cst_29 = arith.constant dense<0.000000e+00> : vector<32x32xf32>
    %59 = tpu.matmul %56, %58, %cst_29 {dimension_numbers = #tpu.dot_dimension_numbers<[1], [0], [0], [1], [0, 0, 1, 1], [], []>} : vector<32x16xf32>, vector<16x32xf32>, vector<32x32xf32> -> vector<32x32xf32>
    %60 = arith.addf %37, %59 : vector<32x32xf32>
    %c0_30 = arith.constant 0 : index
    %c0_31 = arith.constant 0 : index
    %c0_32 = arith.constant 0 : index
    %61 = vector.load %arg8[%c0_30, %c0_31, %c0_32] : memref<3x1x32xf32, #tpu.memory_space<vmem>>, vector<1x1x32xf32>
    %62 = vector.shape_cast %61 : vector<1x1x32xf32> to vector<1x32xf32>
    %63 = vector.broadcast %62 : vector<1x32xf32> to vector<32x32xf32>
    %64 = arith.addf %60, %63 : vector<32x32xf32>
    %c1_33 = arith.constant 1 : index
    %c0_34 = arith.constant 0 : index
    %c0_35 = arith.constant 0 : index
    %65 = vector.load %arg5[%c1_33, %c0_34, %c0_35] : memref<3x32x96xf32, #tpu.memory_space<vmem>>, vector<1x32x96xf32>
    %66 = vector.shape_cast %65 : vector<1x32x96xf32> to vector<32x96xf32>
    %cst_36 = arith.constant dense<0.000000e+00> : vector<32x96xf32>
    %67 = tpu.matmul %64, %66, %cst_36 {dimension_numbers = #tpu.dot_dimension_numbers<[1], [0], [0], [1], [0, 0, 1, 1], [], []>} : vector<32x32xf32>, vector<32x96xf32>, vector<32x96xf32> -> vector<32x96xf32>
    %c1_37 = arith.constant 1 : index
    %c0_38 = arith.constant 0 : index
    %c0_39 = arith.constant 0 : index
    %68 = vector.load %arg6[%c1_37, %c0_38, %c0_39] : memref<3x1x96xf32, #tpu.memory_space<vmem>>, vector<1x1x96xf32>
    %69 = vector.shape_cast %68 : vector<1x1x96xf32> to vector<1x96xf32>
    %70 = vector.broadcast %69 : vector<1x96xf32> to vector<32x96xf32>
    %71 = arith.addf %67, %70 : vector<32x96xf32>
    %72 = vector.extract_strided_slice %71 {offsets = [0, 0], sizes = [32, 16], strides = [1, 1]} : vector<32x96xf32> to vector<32x16xf32>
    %73 = vector.shape_cast %72 : vector<32x16xf32> to vector<4x8x16xf32>
    %74 = vector.extract_strided_slice %71 {offsets = [0, 32], sizes = [32, 16], strides = [1, 1]} : vector<32x96xf32> to vector<32x16xf32>
    %75 = vector.shape_cast %74 : vector<32x16xf32> to vector<4x8x16xf32>
    %76 = vector.extract_strided_slice %71 {offsets = [0, 64], sizes = [32, 16], strides = [1, 1]} : vector<32x96xf32> to vector<32x16xf32>
    %77 = vector.shape_cast %76 : vector<32x16xf32> to vector<4x8x16xf32>
    "tpu.trace_start"() <{level = 10 : i32, message = "bqd,bkd->bqk"}> : () -> ()
    %cst_40 = arith.constant dense<0.000000e+00> : vector<4x8x8xf32>
    %78 = tpu.matmul %73, %75, %cst_40 {dimension_numbers = #tpu.dot_dimension_numbers<[2], [2], [1], [1], [0, 0, 0, 1, 1, 1], [0], [0]>} : vector<4x8x16xf32>, vector<4x8x16xf32>, vector<4x8x8xf32> -> vector<4x8x8xf32>
    "tpu.trace_stop"() : () -> ()
    %cst_41 = arith.constant dense<0xFF800000> : vector<4x8xf32>
    %79 = vector.multi_reduction <maximumf>, %78, %cst_41 [2] : vector<4x8x8xf32> to vector<4x8xf32>
    %80 = vector.shape_cast %79 : vector<4x8xf32> to vector<4x8x1xf32>
    %81 = vector.broadcast %80 : vector<4x8x1xf32> to vector<4x8x8xf32>
    %82 = arith.subf %78, %81 : vector<4x8x8xf32>
    %83 = math.exp %82 : vector<4x8x8xf32>
    %cst_42 = arith.constant dense<0.000000e+00> : vector<4x8xf32>
    %84 = vector.multi_reduction <add>, %83, %cst_42 [2] : vector<4x8x8xf32> to vector<4x8xf32>
    %85 = vector.shape_cast %84 : vector<4x8xf32> to vector<4x8x1xf32>
    %86 = tpu.reciprocal %85 {approx = true} : vector<4x8x1xf32> -> vector<4x8x1xf32>
    %87 = vector.broadcast %86 : vector<4x8x1xf32> to vector<4x8x8xf32>
    %88 = arith.mulf %83, %87 : vector<4x8x8xf32>
    "tpu.trace_start"() <{level = 10 : i32, message = "bqk,bkd->bqd"}> : () -> ()
    %cst_43 = arith.constant dense<0.000000e+00> : vector<4x8x16xf32>
    %89 = tpu.matmul %88, %77, %cst_43 {dimension_numbers = #tpu.dot_dimension_numbers<[2], [1], [1], [2], [0, 0, 0, 1, 1, 2], [0], [0]>} : vector<4x8x8xf32>, vector<4x8x16xf32>, vector<4x8x16xf32> -> vector<4x8x16xf32>
    "tpu.trace_stop"() : () -> ()
    %90 = vector.shape_cast %89 : vector<4x8x16xf32> to vector<32x16xf32>
    %c1_44 = arith.constant 1 : index
    %c0_45 = arith.constant 0 : index
    %c0_46 = arith.constant 0 : index
    %c0_47 = arith.constant 0 : index
    %91 = vector.load %arg7[%c1_44, %c0_45, %c0_46, %c0_47] : memref<3x2x16x32xf32, #tpu.memory_space<vmem>>, vector<1x1x16x32xf32>
    %92 = vector.shape_cast %91 : vector<1x1x16x32xf32> to vector<16x32xf32>
    %cst_48 = arith.constant dense<0.000000e+00> : vector<32x32xf32>
    %93 = tpu.matmul %90, %92, %cst_48 {dimension_numbers = #tpu.dot_dimension_numbers<[1], [0], [0], [1], [0, 0, 1, 1], [], []>} : vector<32x16xf32>, vector<16x32xf32>, vector<32x32xf32> -> vector<32x32xf32>
    %94 = vector.extract_strided_slice %71 {offsets = [0, 16], sizes = [32, 16], strides = [1, 1]} : vector<32x96xf32> to vector<32x16xf32>
    %95 = vector.shape_cast %94 : vector<32x16xf32> to vector<4x8x16xf32>
    %96 = vector.extract_strided_slice %71 {offsets = [0, 48], sizes = [32, 16], strides = [1, 1]} : vector<32x96xf32> to vector<32x16xf32>
    %97 = vector.shape_cast %96 : vector<32x16xf32> to vector<4x8x16xf32>
    %98 = vector.extract_strided_slice %71 {offsets = [0, 80], sizes = [32, 16], strides = [1, 1]} : vector<32x96xf32> to vector<32x16xf32>
    %99 = vector.shape_cast %98 : vector<32x16xf32> to vector<4x8x16xf32>
    "tpu.trace_start"() <{level = 10 : i32, message = "bqd,bkd->bqk"}> : () -> ()
    %cst_49 = arith.constant dense<0.000000e+00> : vector<4x8x8xf32>
    %100 = tpu.matmul %95, %97, %cst_49 {dimension_numbers = #tpu.dot_dimension_numbers<[2], [2], [1], [1], [0, 0, 0, 1, 1, 1], [0], [0]>} : vector<4x8x16xf32>, vector<4x8x16xf32>, vector<4x8x8xf32> -> vector<4x8x8xf32>
    "tpu.trace_stop"() : () -> ()
    %cst_50 = arith.constant dense<0xFF800000> : vector<4x8xf32>
    %101 = vector.multi_reduction <maximumf>, %100, %cst_50 [2] : vector<4x8x8xf32> to vector<4x8xf32>
    %102 = vector.shape_cast %101 : vector<4x8xf32> to vector<4x8x1xf32>
    %103 = vector.broadcast %102 : vector<4x8x1xf32> to vector<4x8x8xf32>
    %104 = arith.subf %100, %103 : vector<4x8x8xf32>
    %105 = math.exp %104 : vector<4x8x8xf32>
    %cst_51 = arith.constant dense<0.000000e+00> : vector<4x8xf32>
    %106 = vector.multi_reduction <add>, %105, %cst_51 [2] : vector<4x8x8xf32> to vector<4x8xf32>
    %107 = vector.shape_cast %106 : vector<4x8xf32> to vector<4x8x1xf32>
    %108 = tpu.reciprocal %107 {approx = true} : vector<4x8x1xf32> -> vector<4x8x1xf32>
    %109 = vector.broadcast %108 : vector<4x8x1xf32> to vector<4x8x8xf32>
    %110 = arith.mulf %105, %109 : vector<4x8x8xf32>
    "tpu.trace_start"() <{level = 10 : i32, message = "bqk,bkd->bqd"}> : () -> ()
    %cst_52 = arith.constant dense<0.000000e+00> : vector<4x8x16xf32>
    %111 = tpu.matmul %110, %99, %cst_52 {dimension_numbers = #tpu.dot_dimension_numbers<[2], [1], [1], [2], [0, 0, 0, 1, 1, 2], [0], [0]>} : vector<4x8x8xf32>, vector<4x8x16xf32>, vector<4x8x16xf32> -> vector<4x8x16xf32>
    "tpu.trace_stop"() : () -> ()
    %112 = vector.shape_cast %111 : vector<4x8x16xf32> to vector<32x16xf32>
    %c1_53 = arith.constant 1 : index
    %c1_54 = arith.constant 1 : index
    %c0_55 = arith.constant 0 : index
    %c0_56 = arith.constant 0 : index
    %113 = vector.load %arg7[%c1_53, %c1_54, %c0_55, %c0_56] : memref<3x2x16x32xf32, #tpu.memory_space<vmem>>, vector<1x1x16x32xf32>
    %114 = vector.shape_cast %113 : vector<1x1x16x32xf32> to vector<16x32xf32>
    %cst_57 = arith.constant dense<0.000000e+00> : vector<32x32xf32>
    %115 = tpu.matmul %112, %114, %cst_57 {dimension_numbers = #tpu.dot_dimension_numbers<[1], [0], [0], [1], [0, 0, 1, 1], [], []>} : vector<32x16xf32>, vector<16x32xf32>, vector<32x32xf32> -> vector<32x32xf32>
    %116 = arith.addf %93, %115 : vector<32x32xf32>
    %c1_58 = arith.constant 1 : index
    %c0_59 = arith.constant 0 : index
    %c0_60 = arith.constant 0 : index
    %117 = vector.load %arg8[%c1_58, %c0_59, %c0_60] : memref<3x1x32xf32, #tpu.memory_space<vmem>>, vector<1x1x32xf32>
    %118 = vector.shape_cast %117 : vector<1x1x32xf32> to vector<1x32xf32>
    %119 = vector.broadcast %118 : vector<1x32xf32> to vector<32x32xf32>
    %120 = arith.addf %116, %119 : vector<32x32xf32>
    %c2 = arith.constant 2 : index
    %c0_61 = arith.constant 0 : index
    %c0_62 = arith.constant 0 : index
    %121 = vector.load %arg5[%c2, %c0_61, %c0_62] : memref<3x32x96xf32, #tpu.memory_space<vmem>>, vector<1x32x96xf32>
    %122 = vector.shape_cast %121 : vector<1x32x96xf32> to vector<32x96xf32>
    %cst_63 = arith.constant dense<0.000000e+00> : vector<32x96xf32>
    %123 = tpu.matmul %120, %122, %cst_63 {dimension_numbers = #tpu.dot_dimension_numbers<[1], [0], [0], [1], [0, 0, 1, 1], [], []>} : vector<32x32xf32>, vector<32x96xf32>, vector<32x96xf32> -> vector<32x96xf32>
    %c2_64 = arith.constant 2 : index
    %c0_65 = arith.constant 0 : index
    %c0_66 = arith.constant 0 : index
    %124 = vector.load %arg6[%c2_64, %c0_65, %c0_66] : memref<3x1x96xf32, #tpu.memory_space<vmem>>, vector<1x1x96xf32>
    %125 = vector.shape_cast %124 : vector<1x1x96xf32> to vector<1x96xf32>
    %126 = vector.broadcast %125 : vector<1x96xf32> to vector<32x96xf32>
    %127 = arith.addf %123, %126 : vector<32x96xf32>
    %128 = vector.extract_strided_slice %127 {offsets = [0, 0], sizes = [32, 16], strides = [1, 1]} : vector<32x96xf32> to vector<32x16xf32>
    %129 = vector.shape_cast %128 : vector<32x16xf32> to vector<4x8x16xf32>
    %130 = vector.extract_strided_slice %127 {offsets = [0, 32], sizes = [32, 16], strides = [1, 1]} : vector<32x96xf32> to vector<32x16xf32>
    %131 = vector.shape_cast %130 : vector<32x16xf32> to vector<4x8x16xf32>
    %132 = vector.extract_strided_slice %127 {offsets = [0, 64], sizes = [32, 16], strides = [1, 1]} : vector<32x96xf32> to vector<32x16xf32>
    %133 = vector.shape_cast %132 : vector<32x16xf32> to vector<4x8x16xf32>
    "tpu.trace_start"() <{level = 10 : i32, message = "bqd,bkd->bqk"}> : () -> ()
    %cst_67 = arith.constant dense<0.000000e+00> : vector<4x8x8xf32>
    %134 = tpu.matmul %129, %131, %cst_67 {dimension_numbers = #tpu.dot_dimension_numbers<[2], [2], [1], [1], [0, 0, 0, 1, 1, 1], [0], [0]>} : vector<4x8x16xf32>, vector<4x8x16xf32>, vector<4x8x8xf32> -> vector<4x8x8xf32>
    "tpu.trace_stop"() : () -> ()
    %cst_68 = arith.constant dense<0xFF800000> : vector<4x8xf32>
    %135 = vector.multi_reduction <maximumf>, %134, %cst_68 [2] : vector<4x8x8xf32> to vector<4x8xf32>
    %136 = vector.shape_cast %135 : vector<4x8xf32> to vector<4x8x1xf32>
    %137 = vector.broadcast %136 : vector<4x8x1xf32> to vector<4x8x8xf32>
    %138 = arith.subf %134, %137 : vector<4x8x8xf32>
    %139 = math.exp %138 : vector<4x8x8xf32>
    %cst_69 = arith.constant dense<0.000000e+00> : vector<4x8xf32>
    %140 = vector.multi_reduction <add>, %139, %cst_69 [2] : vector<4x8x8xf32> to vector<4x8xf32>
    %141 = vector.shape_cast %140 : vector<4x8xf32> to vector<4x8x1xf32>
    %142 = tpu.reciprocal %141 {approx = true} : vector<4x8x1xf32> -> vector<4x8x1xf32>
    %143 = vector.broadcast %142 : vector<4x8x1xf32> to vector<4x8x8xf32>
    %144 = arith.mulf %139, %143 : vector<4x8x8xf32>
    "tpu.trace_start"() <{level = 10 : i32, message = "bqk,bkd->bqd"}> : () -> ()
    %cst_70 = arith.constant dense<0.000000e+00> : vector<4x8x16xf32>
    %145 = tpu.matmul %144, %133, %cst_70 {dimension_numbers = #tpu.dot_dimension_numbers<[2], [1], [1], [2], [0, 0, 0, 1, 1, 2], [0], [0]>} : vector<4x8x8xf32>, vector<4x8x16xf32>, vector<4x8x16xf32> -> vector<4x8x16xf32>
    "tpu.trace_stop"() : () -> ()
    %146 = vector.shape_cast %145 : vector<4x8x16xf32> to vector<32x16xf32>
    %c2_71 = arith.constant 2 : index
    %c0_72 = arith.constant 0 : index
    %c0_73 = arith.constant 0 : index
    %c0_74 = arith.constant 0 : index
    %147 = vector.load %arg7[%c2_71, %c0_72, %c0_73, %c0_74] : memref<3x2x16x32xf32, #tpu.memory_space<vmem>>, vector<1x1x16x32xf32>
    %148 = vector.shape_cast %147 : vector<1x1x16x32xf32> to vector<16x32xf32>
    %cst_75 = arith.constant dense<0.000000e+00> : vector<32x32xf32>
    %149 = tpu.matmul %146, %148, %cst_75 {dimension_numbers = #tpu.dot_dimension_numbers<[1], [0], [0], [1], [0, 0, 1, 1], [], []>} : vector<32x16xf32>, vector<16x32xf32>, vector<32x32xf32> -> vector<32x32xf32>
    %150 = vector.extract_strided_slice %127 {offsets = [0, 16], sizes = [32, 16], strides = [1, 1]} : vector<32x96xf32> to vector<32x16xf32>
    %151 = vector.shape_cast %150 : vector<32x16xf32> to vector<4x8x16xf32>
    %152 = vector.extract_strided_slice %127 {offsets = [0, 48], sizes = [32, 16], strides = [1, 1]} : vector<32x96xf32> to vector<32x16xf32>
    %153 = vector.shape_cast %152 : vector<32x16xf32> to vector<4x8x16xf32>
    %154 = vector.extract_strided_slice %127 {offsets = [0, 80], sizes = [32, 16], strides = [1, 1]} : vector<32x96xf32> to vector<32x16xf32>
    %155 = vector.shape_cast %154 : vector<32x16xf32> to vector<4x8x16xf32>
    "tpu.trace_start"() <{level = 10 : i32, message = "bqd,bkd->bqk"}> : () -> ()
    %cst_76 = arith.constant dense<0.000000e+00> : vector<4x8x8xf32>
    %156 = tpu.matmul %151, %153, %cst_76 {dimension_numbers = #tpu.dot_dimension_numbers<[2], [2], [1], [1], [0, 0, 0, 1, 1, 1], [0], [0]>} : vector<4x8x16xf32>, vector<4x8x16xf32>, vector<4x8x8xf32> -> vector<4x8x8xf32>
    "tpu.trace_stop"() : () -> ()
    %cst_77 = arith.constant dense<0xFF800000> : vector<4x8xf32>
    %157 = vector.multi_reduction <maximumf>, %156, %cst_77 [2] : vector<4x8x8xf32> to vector<4x8xf32>
    %158 = vector.shape_cast %157 : vector<4x8xf32> to vector<4x8x1xf32>
    %159 = vector.broadcast %158 : vector<4x8x1xf32> to vector<4x8x8xf32>
    %160 = arith.subf %156, %159 : vector<4x8x8xf32>
    %161 = math.exp %160 : vector<4x8x8xf32>
    %cst_78 = arith.constant dense<0.000000e+00> : vector<4x8xf32>
    %162 = vector.multi_reduction <add>, %161, %cst_78 [2] : vector<4x8x8xf32> to vector<4x8xf32>
    %163 = vector.shape_cast %162 : vector<4x8xf32> to vector<4x8x1xf32>
    %164 = tpu.reciprocal %163 {approx = true} : vector<4x8x1xf32> -> vector<4x8x1xf32>
    %165 = vector.broadcast %164 : vector<4x8x1xf32> to vector<4x8x8xf32>
    %166 = arith.mulf %161, %165 : vector<4x8x8xf32>
    "tpu.trace_start"() <{level = 10 : i32, message = "bqk,bkd->bqd"}> : () -> ()
    %cst_79 = arith.constant dense<0.000000e+00> : vector<4x8x16xf32>
    %167 = tpu.matmul %166, %155, %cst_79 {dimension_numbers = #tpu.dot_dimension_numbers<[2], [1], [1], [2], [0, 0, 0, 1, 1, 2], [0], [0]>} : vector<4x8x8xf32>, vector<4x8x16xf32>, vector<4x8x16xf32> -> vector<4x8x16xf32>
    "tpu.trace_stop"() : () -> ()
    %168 = vector.shape_cast %167 : vector<4x8x16xf32> to vector<32x16xf32>
    %c2_80 = arith.constant 2 : index
    %c1_81 = arith.constant 1 : index
    %c0_82 = arith.constant 0 : index
    %c0_83 = arith.constant 0 : index
    %169 = vector.load %arg7[%c2_80, %c1_81, %c0_82, %c0_83] : memref<3x2x16x32xf32, #tpu.memory_space<vmem>>, vector<1x1x16x32xf32>
    %170 = vector.shape_cast %169 : vector<1x1x16x32xf32> to vector<16x32xf32>
    %cst_84 = arith.constant dense<0.000000e+00> : vector<32x32xf32>
    %171 = tpu.matmul %168, %170, %cst_84 {dimension_numbers = #tpu.dot_dimension_numbers<[1], [0], [0], [1], [0, 0, 1, 1], [], []>} : vector<32x16xf32>, vector<16x32xf32>, vector<32x32xf32> -> vector<32x32xf32>
    %172 = arith.addf %149, %171 : vector<32x32xf32>
    %c2_85 = arith.constant 2 : index
    %c0_86 = arith.constant 0 : index
    %c0_87 = arith.constant 0 : index
    %173 = vector.load %arg8[%c2_85, %c0_86, %c0_87] : memref<3x1x32xf32, #tpu.memory_space<vmem>>, vector<1x1x32xf32>
    %174 = vector.shape_cast %173 : vector<1x1x32xf32> to vector<1x32xf32>
    %175 = vector.broadcast %174 : vector<1x32xf32> to vector<32x32xf32>
    %176 = arith.addf %172, %175 : vector<32x32xf32>
    %177 = arith.addf %176, %8 : vector<32x32xf32>
    %cst_88 = arith.constant 0.000000e+00 : f32
    %178 = vector.broadcast %cst_88 : f32 to vector<32x32xf32>
    %179 = arith.maximumf %177, %178 : vector<32x32xf32>
    %180 = vector.shape_cast %179 : vector<32x32xf32> to vector<4x8x32xf32>
    %c0_89 = arith.constant 0 : index
    %c0_90 = arith.constant 0 : index
    %181 = vector.load %arg9[%c0_89, %c0_90] : memref<8x32xf32, #tpu.memory_space<vmem>>, vector<8x32xf32>
    %182 = vector.shape_cast %181 : vector<8x32xf32> to vector<1x8x32xf32>
    %183 = vector.broadcast %182 : vector<1x8x32xf32> to vector<4x8x32xf32>
    %184 = arith.mulf %180, %183 : vector<4x8x32xf32>
    %cst_91 = arith.constant dense<0.000000e+00> : vector<4x8xf32>
    %185 = vector.multi_reduction <add>, %184, %cst_91 [2] : vector<4x8x32xf32> to vector<4x8xf32>
    %cst_92 = arith.constant dense<0.000000e+00> : vector<4xf32>
    %186 = vector.multi_reduction <add>, %185, %cst_92 [1] : vector<4x8xf32> to vector<4xf32>
    %c0_93 = arith.constant 0 : index
    %c0_94 = arith.constant 0 : index
    %187 = vector.load %arg2[%c0_93, %c0_94] : memref<4x8xf32, #tpu.memory_space<vmem>>, vector<4x8xf32>
    %cst_95 = arith.constant dense<0.000000e+00> : vector<4xf32>
    %188 = vector.multi_reduction <add>, %187, %cst_95 [1] : vector<4x8xf32> to vector<4xf32>
    %189 = vector.shape_cast %0 : vector<4x8x16xf32> to vector<4x128xf32>
    %c0_96 = arith.constant 0 : index
    %c0_97 = arith.constant 0 : index
    %190 = vector.load %arg10[%c0_96, %c0_97] : memref<128x64xf32, #tpu.memory_space<vmem>>, vector<128x64xf32>
    %cst_98 = arith.constant dense<0.000000e+00> : vector<4x64xf32>
    %191 = tpu.matmul %189, %190, %cst_98 {dimension_numbers = #tpu.dot_dimension_numbers<[1], [0], [0], [1], [0, 0, 1, 1], [], []>} : vector<4x128xf32>, vector<128x64xf32>, vector<4x64xf32> -> vector<4x64xf32>
    %c0_99 = arith.constant 0 : index
    %c0_100 = arith.constant 0 : index
    %192 = vector.load %arg11[%c0_99, %c0_100] : memref<1x64xf32, #tpu.memory_space<vmem>>, vector<1x64xf32>
    %193 = vector.broadcast %192 : vector<1x64xf32> to vector<4x64xf32>
    %194 = arith.addf %191, %193 : vector<4x64xf32>
    %cst_101 = arith.constant 0.000000e+00 : f32
    %195 = vector.broadcast %cst_101 : f32 to vector<4x64xf32>
    %196 = arith.maximumf %194, %195 : vector<4x64xf32>
    %c0_102 = arith.constant 0 : index
    %c0_103 = arith.constant 0 : index
    %197 = vector.load %arg12[%c0_102, %c0_103] : memref<64x64xf32, #tpu.memory_space<vmem>>, vector<64x64xf32>
    %cst_104 = arith.constant dense<0.000000e+00> : vector<4x64xf32>
    %198 = tpu.matmul %196, %197, %cst_104 {dimension_numbers = #tpu.dot_dimension_numbers<[1], [0], [0], [1], [0, 0, 1, 1], [], []>} : vector<4x64xf32>, vector<64x64xf32>, vector<4x64xf32> -> vector<4x64xf32>
    %c0_105 = arith.constant 0 : index
    %c0_106 = arith.constant 0 : index
    %199 = vector.load %arg13[%c0_105, %c0_106] : memref<1x64xf32, #tpu.memory_space<vmem>>, vector<1x64xf32>
    %200 = vector.broadcast %199 : vector<1x64xf32> to vector<4x64xf32>
    %201 = arith.addf %198, %200 : vector<4x64xf32>
    %cst_107 = arith.constant 0.000000e+00 : f32
    %202 = vector.broadcast %cst_107 : f32 to vector<4x64xf32>
    %203 = arith.maximumf %201, %202 : vector<4x64xf32>
    %c0_108 = arith.constant 0 : index
    %c0_109 = arith.constant 0 : index
    %204 = vector.load %arg14[%c0_108, %c0_109] : memref<64x64xf32, #tpu.memory_space<vmem>>, vector<64x64xf32>
    %cst_110 = arith.constant dense<0.000000e+00> : vector<4x64xf32>
    %205 = tpu.matmul %203, %204, %cst_110 {dimension_numbers = #tpu.dot_dimension_numbers<[1], [0], [0], [1], [0, 0, 1, 1], [], []>} : vector<4x64xf32>, vector<64x64xf32>, vector<4x64xf32> -> vector<4x64xf32>
    %c0_111 = arith.constant 0 : index
    %c0_112 = arith.constant 0 : index
    %206 = vector.load %arg15[%c0_111, %c0_112] : memref<1x64xf32, #tpu.memory_space<vmem>>, vector<1x64xf32>
    %207 = vector.broadcast %206 : vector<1x64xf32> to vector<4x64xf32>
    %208 = arith.addf %205, %207 : vector<4x64xf32>
    %cst_113 = arith.constant 0.000000e+00 : f32
    %209 = vector.broadcast %cst_113 : f32 to vector<4x64xf32>
    %210 = arith.maximumf %208, %209 : vector<4x64xf32>
    %c0_114 = arith.constant 0 : index
    %c0_115 = arith.constant 0 : index
    %211 = vector.load %arg16[%c0_114, %c0_115] : memref<1x64xf32, #tpu.memory_space<vmem>>, vector<1x64xf32>
    %212 = vector.broadcast %211 : vector<1x64xf32> to vector<4x64xf32>
    %213 = arith.mulf %210, %212 : vector<4x64xf32>
    %cst_116 = arith.constant dense<0.000000e+00> : vector<4xf32>
    %214 = vector.multi_reduction <add>, %213, %cst_116 [1] : vector<4x64xf32> to vector<4xf32>
    %215 = arith.addf %188, %186 : vector<4xf32>
    %216 = arith.addf %215, %214 : vector<4xf32>
    %217 = vector.shape_cast %216 : vector<4xf32> to vector<1x4xf32>
    %c0_117 = arith.constant 0 : index
    %c0_118 = arith.constant 0 : index
    %218 = vector.load %arg17[%c0_117, %c0_118] : memref<1x1xf32, #tpu.memory_space<vmem>>, vector<1x1xf32>
    %219 = vector.broadcast %218 : vector<1x1xf32> to vector<1x4xf32>
    %220 = arith.addf %217, %219 : vector<1x4xf32>
    %c0_119 = arith.constant 0 : index
    %c0_120 = arith.constant 0 : index
    %221 = vector.load %arg18[%c0_119, %c0_120] : memref<1x4xf32, #tpu.memory_space<vmem>>, vector<1x4xf32>
    tpu.vector_store %arg18[%c0_119, %c0_120], %220 {strides = array<i32>} : memref<1x4xf32, #tpu.memory_space<vmem>>, vector<1x4xf32>,
    return
  }
  func.func @transform_0(%arg0: i32) -> (i32, i32, i32) {
    %c0_i32 = arith.constant 0 : i32
    %c0_i32_0 = arith.constant 0 : i32
    %c0_i32_1 = arith.constant 0 : i32
    return %arg0, %c0_i32, %c0_i32_0 : i32, i32, i32
  }
  func.func @transform_1(%arg0: i32) -> (i32, i32) {
    %c0_i32 = arith.constant 0 : i32
    %c0_i32_0 = arith.constant 0 : i32
    return %arg0, %c0_i32 : i32, i32
  }
  func.func @transform_2(%arg0: i32) -> (i32, i32) {
    %c0_i32 = arith.constant 0 : i32
    %c0_i32_0 = arith.constant 0 : i32
    %c0_i32_1 = arith.constant 0 : i32
    return %c0_i32, %c0_i32_0 : i32, i32
  }
  func.func @transform_3(%arg0: i32) -> (i32, i32) {
    %c0_i32 = arith.constant 0 : i32
    %c0_i32_0 = arith.constant 0 : i32
    %c0_i32_1 = arith.constant 0 : i32
    return %c0_i32, %c0_i32_0 : i32, i32
  }
  func.func @transform_4(%arg0: i32) -> (i32, i32, i32) {
    %c0_i32 = arith.constant 0 : i32
    %c0_i32_0 = arith.constant 0 : i32
    %c0_i32_1 = arith.constant 0 : i32
    %c0_i32_2 = arith.constant 0 : i32
    return %c0_i32, %c0_i32_0, %c0_i32_1 : i32, i32, i32
  }
  func.func @transform_5(%arg0: i32) -> (i32, i32, i32) {
    %c0_i32 = arith.constant 0 : i32
    %c0_i32_0 = arith.constant 0 : i32
    %c0_i32_1 = arith.constant 0 : i32
    %c0_i32_2 = arith.constant 0 : i32
    return %c0_i32, %c0_i32_0, %c0_i32_1 : i32, i32, i32
  }
  func.func @transform_6(%arg0: i32) -> (i32, i32, i32, i32) {
    %c0_i32 = arith.constant 0 : i32
    %c0_i32_0 = arith.constant 0 : i32
    %c0_i32_1 = arith.constant 0 : i32
    %c0_i32_2 = arith.constant 0 : i32
    %c0_i32_3 = arith.constant 0 : i32
    return %c0_i32, %c0_i32_0, %c0_i32_1, %c0_i32_2 : i32, i32, i32, i32
  }
  func.func @transform_7(%arg0: i32) -> (i32, i32, i32) {
    %c0_i32 = arith.constant 0 : i32
    %c0_i32_0 = arith.constant 0 : i32
    %c0_i32_1 = arith.constant 0 : i32
    %c0_i32_2 = arith.constant 0 : i32
    return %c0_i32, %c0_i32_0, %c0_i32_1 : i32, i32, i32
  }
  func.func @transform_8(%arg0: i32) -> (i32, i32) {
    %c0_i32 = arith.constant 0 : i32
    %c0_i32_0 = arith.constant 0 : i32
    %c0_i32_1 = arith.constant 0 : i32
    return %c0_i32, %c0_i32_0 : i32, i32
  }
  func.func @transform_9(%arg0: i32) -> (i32, i32) {
    %c0_i32 = arith.constant 0 : i32
    %c0_i32_0 = arith.constant 0 : i32
    %c0_i32_1 = arith.constant 0 : i32
    return %c0_i32, %c0_i32_0 : i32, i32
  }
  func.func @transform_10(%arg0: i32) -> (i32, i32) {
    %c0_i32 = arith.constant 0 : i32
    %c0_i32_0 = arith.constant 0 : i32
    %c0_i32_1 = arith.constant 0 : i32
    return %c0_i32, %c0_i32_0 : i32, i32
  }
  func.func @transform_11(%arg0: i32) -> (i32, i32) {
    %c0_i32 = arith.constant 0 : i32
    %c0_i32_0 = arith.constant 0 : i32
    %c0_i32_1 = arith.constant 0 : i32
    return %c0_i32, %c0_i32_0 : i32, i32
  }
  func.func @transform_12(%arg0: i32) -> (i32, i32) {
    %c0_i32 = arith.constant 0 : i32
    %c0_i32_0 = arith.constant 0 : i32
    %c0_i32_1 = arith.constant 0 : i32
    return %c0_i32, %c0_i32_0 : i32, i32
  }
  func.func @transform_13(%arg0: i32) -> (i32, i32) {
    %c0_i32 = arith.constant 0 : i32
    %c0_i32_0 = arith.constant 0 : i32
    %c0_i32_1 = arith.constant 0 : i32
    return %c0_i32, %c0_i32_0 : i32, i32
  }
  func.func @transform_14(%arg0: i32) -> (i32, i32) {
    %c0_i32 = arith.constant 0 : i32
    %c0_i32_0 = arith.constant 0 : i32
    %c0_i32_1 = arith.constant 0 : i32
    return %c0_i32, %c0_i32_0 : i32, i32
  }
  func.func @transform_15(%arg0: i32) -> (i32, i32) {
    %c0_i32 = arith.constant 0 : i32
    %c0_i32_0 = arith.constant 0 : i32
    %c0_i32_1 = arith.constant 0 : i32
    return %c0_i32, %c0_i32_0 : i32, i32
  }
  func.func @transform_16(%arg0: i32) -> (i32, i32) {
    %c0_i32 = arith.constant 0 : i32
    %c0_i32_0 = arith.constant 0 : i32
    %c0_i32_1 = arith.constant 0 : i32
    return %c0_i32, %c0_i32_0 : i32, i32
  }
  func.func @transform_17(%arg0: i32) -> (i32, i32) {
    %c0_i32 = arith.constant 0 : i32
    %c0_i32_0 = arith.constant 0 : i32
    return %c0_i32, %arg0 : i32, i32
  }
}

</mosaic_0001>

<llo_original>
// kernel: autoint_plus_frn.1
$region0: #{autoint_plus_frn.1}
  #allocation0 [shape = 'u32[]', space=smem, size = 0x4, offset = 0x4, fixed_abs, tag = 'smem constant byte address 0x4 - core index']
  #allocation1 [shape = 'u32[144,128]{1,0:T(1,128)}', space=vmem, size = 0x12000, scoped, tag = 'internal scratch']
  #allocation2 [shape = 'f32[1,1]{1,0:T(1,128)S(1)}', space=vmem, size = 0x200, scoped, tag = 'scoped memory for autoint_plus_frn.1']
  %s0 = inlined_call_operand.vmem [shape: f32[4,8,16], index: 0, kind: input, shape index: {}]
  %s1 = inlined_call_operand.vmem [shape: f32[4,8], index: 1, kind: input, shape index: {}]
  %s2 = inlined_call_operand.vmem [shape: f32[16,64], index: 2, kind: input, shape index: {}]
  %s3 = inlined_call_operand.vmem [shape: f32[1,64], index: 3, kind: input, shape index: {}]
  %s4 = inlined_call_operand.vmem [shape: f32[3,32,96], index: 4, kind: input, shape index: {}]
  %s5 = inlined_call_operand.vmem [shape: f32[3,1,96], index: 5, kind: input, shape index: {}]
  %s6 = inlined_call_operand.vmem [shape: f32[3,2,16,32], index: 6, kind: input, shape index: {}]
  %s7 = inlined_call_operand.vmem [shape: f32[3,1,32], index: 7, kind: input, shape index: {}]
  %s8 = inlined_call_operand.vmem [shape: f32[8,32], index: 8, kind: input, shape index: {}]
  %s9 = inlined_call_operand.vmem [shape: f32[128,64], index: 9, kind: input, shape index: {}]
  %s10 = inlined_call_operand.vmem [shape: f32[1,64], index: 10, kind: input, shape index: {}]
  %s11 = inlined_call_operand.vmem [shape: f32[64,64], index: 11, kind: input, shape index: {}]
  %s12 = inlined_call_operand.vmem [shape: f32[1,64], index: 12, kind: input, shape index: {}]
  %s13 = inlined_call_operand.vmem [shape: f32[64,64], index: 13, kind: input, shape index: {}]
  %s14 = inlined_call_operand.vmem [shape: f32[1,64], index: 14, kind: input, shape index: {}]
  %s15 = inlined_call_operand.vmem [shape: f32[1,64], index: 15, kind: input, shape index: {}]
  %s16 = inlined_call_operand.<no memory space> [shape: f32[1,1], index: 16, kind: input, shape index: {}]
  %s17 = inlined_call_operand.hbm [shape: f32[1,4], index: 17, kind: output, shape index: {}]
  %s18 = sld [smem:[#allocation0]]
  $region78: #{autoint_plus_frn.1} parent=0
    _
  %s20 = ssub.s32 1, %s18
  %s21 = scalar_select 0, %s20, %s18
  %v22 = vstv %s16
  %23 = vst [vmem:[#allocation2] sm:$0x1] %v22
  $region1: #{autoint_plus_frn.1} parent=0
    #allocation3 [shape = 'u8[512]{0}', space=vmem, size = 0x400, scoped, tag = 'output window, operand 0, single buffered']
    #allocation4 [shape = 's32[1]{0}', space=sflag, size = 0x4, scoped, tag = 'scoped memory for autoint_plus_frn.1']
    %24 = vsyncpa [#allocation4], 0
    // Predicated region
    $region2: #{autoint_plus_frn.1} parent=1 // pred_check
      _
    $region3: #{autoint_plus_frn.1} parent=1 // pred_check_branch
      %26 = sbr.rel (0) target = $region5
    $region4: #{autoint_plus_frn.1} parent=1 // pred_region
      _
    $region5: #{autoint_plus_frn.1} parent=1 // pred_fallthru
      _
    // Predicated region
    $region6: #{autoint_plus_frn.1} parent=1 // pred_check
      _
    $region7: #{autoint_plus_frn.1} parent=1 // pred_check_branch
      %28 = sbr.rel (0) target = $region9
    $region8: #{autoint_plus_frn.1} parent=1 // pred_region
      _
    $region9: #{autoint_plus_frn.1} parent=1 // pred_fallthru
      _
    // Predicated region
    $region10: #{autoint_plus_frn.1} parent=1 // pred_check
      _
    $region11: #{autoint_plus_frn.1} parent=1 // pred_check_branch
      %30 = sbr.rel (0) target = $region13
    $region12: #{autoint_plus_frn.1} parent=1 // pred_region
      _
    $region13: #{autoint_plus_frn.1} parent=1 // pred_fallthru
      _
    // Predicated region
    $region14: #{autoint_plus_frn.1} parent=1 // pred_check
      _
    $region15: #{autoint_plus_frn.1} parent=1 // pred_check_branch
      %32 = sbr.rel (0) target = $region17
    $region16: #{autoint_plus_frn.1} parent=1 // pred_region
      _
    $region17: #{autoint_plus_frn.1} parent=1 // pred_fallthru
      _
    // Predicated region
    $region18: #{autoint_plus_frn.1} parent=1 // pred_check
      _
    $region19: #{autoint_plus_frn.1} parent=1 // pred_check_branch
      %34 = sbr.rel (0) target = $region21
    $region20: #{autoint_plus_frn.1} parent=1 // pred_region
      _
    $region21: #{autoint_plus_frn.1} parent=1 // pred_fallthru
      _
    // Predicated region
    $region22: #{autoint_plus_frn.1} parent=1 // pred_check
      _
    $region23: #{autoint_plus_frn.1} parent=1 // pred_check_branch
      %36 = sbr.rel (0) target = $region25
    $region24: #{autoint_plus_frn.1} parent=1 // pred_region
      _
    $region25: #{autoint_plus_frn.1} parent=1 // pred_fallthru
      _
    // Predicated region
    $region26: #{autoint_plus_frn.1} parent=1 // pred_check
      _
    $region27: #{autoint_plus_frn.1} parent=1 // pred_check_branch
      %38 = sbr.rel (0) target = $region29
    $region28: #{autoint_plus_frn.1} parent=1 // pred_region
      _
    $region29: #{autoint_plus_frn.1} parent=1 // pred_fallthru
      _
    // Predicated region
    $region30: #{autoint_plus_frn.1} parent=1 // pred_check
      _
    $region31: #{autoint_plus_frn.1} parent=1 // pred_check_branch
      %40 = sbr.rel (0) target = $region33
    $region32: #{autoint_plus_frn.1} parent=1 // pred_region
      _
    $region33: #{autoint_plus_frn.1} parent=1 // pred_fallthru
      _
    // Predicated region
    $region34: #{autoint_plus_frn.1} parent=1 // pred_check
      _
    $region35: #{autoint_plus_frn.1} parent=1 // pred_check_branch
      %42 = sbr.rel (0) target = $region37
    $region36: #{autoint_plus_frn.1} parent=1 // pred_region
      _
    $region37: #{autoint_plus_frn.1} parent=1 // pred_fallthru
      _
    // Predicated region
    $region38: #{autoint_plus_frn.1} parent=1 // pred_check
      _
    $region39: #{autoint_plus_frn.1} parent=1 // pred_check_branch
      %44 = sbr.rel (0) target = $region41
    $region40: #{autoint_plus_frn.1} parent=1 // pred_region
      _
    $region41: #{autoint_plus_frn.1} parent=1 // pred_fallthru
      _
    // Predicated region
    $region42: #{autoint_plus_frn.1} parent=1 // pred_check
      _
    $region43: #{autoint_plus_frn.1} parent=1 // pred_check_branch
      %46 = sbr.rel (0) target = $region45
    $region44: #{autoint_plus_frn.1} parent=1 // pred_region
      _
    $region45: #{autoint_plus_frn.1} parent=1 // pred_fallthru
      _
    // Predicated region
    $region46: #{autoint_plus_frn.1} parent=1 // pred_check
      _
    $region47: #{autoint_plus_frn.1} parent=1 // pred_check_branch
      %48 = sbr.rel (0) target = $region49
    $region48: #{autoint_plus_frn.1} parent=1 // pred_region
      _
    $region49: #{autoint_plus_frn.1} parent=1 // pred_fallthru
      _
    // Predicated region
    $region50: #{autoint_plus_frn.1} parent=1 // pred_check
      _
    $region51: #{autoint_plus_frn.1} parent=1 // pred_check_branch
      %50 = sbr.rel (0) target = $region53
    $region52: #{autoint_plus_frn.1} parent=1 // pred_region
      _
    $region53: #{autoint_plus_frn.1} parent=1 // pred_fallthru
      _
    // Predicated region
    $region54: #{autoint_plus_frn.1} parent=1 // pred_check
      _
    $region55: #{autoint_plus_frn.1} parent=1 // pred_check_branch
      %52 = sbr.rel (0) target = $region57
    $region56: #{autoint_plus_frn.1} parent=1 // pred_region
      _
    $region57: #{autoint_plus_frn.1} parent=1 // pred_fallthru
      _
    // Predicated region
    $region58: #{autoint_plus_frn.1} parent=1 // pred_check
      _
    $region59: #{autoint_plus_frn.1} parent=1 // pred_check_branch
      %54 = sbr.rel (0) target = $region61
    $region60: #{autoint_plus_frn.1} parent=1 // pred_region
      _
    $region61: #{autoint_plus_frn.1} parent=1 // pred_fallthru
      _
    // Predicated region
    $region62: #{autoint_plus_frn.1} parent=1 // pred_check
      _
    $region63: #{autoint_plus_frn.1} parent=1 // pred_check_branch
      %56 = sbr.rel (0) target = $region65
    $region64: #{autoint_plus_frn.1} parent=1 // pred_region
      _
    $region65: #{autoint_plus_frn.1} parent=1 // pred_fallthru
      _
    // Predicated region
    $region66: #{autoint_plus_frn.1} parent=1 // pred_check
      _
    $region67: #{autoint_plus_frn.1} parent=1 // pred_check_branch
      %58 = sbr.rel (0) target = $region69
    $region68: #{autoint_plus_frn.1} parent=1 // pred_region
      _
    $region69: #{autoint_plus_frn.1} parent=1 // pred_fallthru
      _
    %v59 = vld [vmem:[%s0] sm:$0xff]
    %v60 = vld [vmem:[%s0 + $0x8] sm:$0xff]
    %v61 = vld [vmem:[%s0 + $0x10] sm:$0xff]
    %v62 = vld [vmem:[%s0 + $0x18] sm:$0xff]
    %v63 = vld [vmem:[%s2] sm:$0xff]
    %v64 = vld [vmem:[%s2 + $0x8] sm:$0xff]
    %v65 = vld [vmem:[%s3] sm:$0x1]
    %v67 = vlaneseq
    %v68 = vshrl.u32 %v67, 7
    %v69 = vsub.s32 0, %v68
    %v70 = vrot.slane %v65, %v69
    %vm72 = vcmask 130048
    %v74 = vsel %vm72, %v59, 0
    %v77 = vsel %vm72, %v60, 0
    %v80 = vsel %vm72, %v61, 0
    %v83 = vsel %vm72, %v62, 0
    %85 = vmatprep.subr.mxu0 0.0
    %86 = vmatpush1.msra.mxu0 0.0
    %87 = vmatprep.subr.mxu0 0.0
    %88 = vmatpush1.msra.mxu0 0.0
    %89 = vmatprep.subr.mxu0 0.0
    %90 = vmatpush1.msra.mxu0 0.0
    %91 = vmatprep.subr.mxu0 0.0
    %92 = vmatpush1.msra.mxu0 0.0
    %93 = vmatprep.subr.mxu0 0.0
    %94 = vmatpush1.msra.mxu0 0.0
    %95 = vmatprep.subr.mxu0 0.0
    %96 = vmatpush1.msra.mxu0 0.0
    %97 = vmatprep.subr.mxu0 0.0
    %98 = vmatpush1.msra.mxu0 0.0
    %99 = vmatprep.subr.mxu0 0.0
    %100 = vmatpush1.msra.mxu0 0.0
    %101 = vmatprep.subr.mxu0 0.0
    %102 = vmatpush1.msra.mxu0 0.0
    %103 = vmatprep.subr.mxu0 0.0
    %104 = vmatpush1.msra.mxu0 0.0
    %105 = vmatprep.subr.mxu0 0.0
    %106 = vmatpush1.msra.mxu0 0.0
    %107 = vmatprep.subr.mxu0 0.0
    %108 = vmatpush1.msra.mxu0 0.0
    %109 = vmatprep.subr.mxu0 0.0
    %110 = vmatpush1.msra.mxu0 0.0
    %111 = vmatprep.subr.mxu0 0.0
    %112 = vmatpush1.msra.mxu0 0.0
    %113 = vmatprep.subr.mxu0 0.0
    %114 = vmatpush1.msra.mxu0 %v64
    %115 = vmatprep.subr.mxu0 0.0
    %116 = vmatpush1.msra.mxu0 %v63
    %117 = vmatprep.subr.mxu0 0.0
    %118 = vmatpush2.msra.mxu0 0.0
    %119 = vmatprep.subr.mxu0 0.0
    %120 = vmatpush2.msra.mxu0 0.0
    %121 = vmatprep.subr.mxu0 0.0
    %122 = vmatpush2.msra.mxu0 0.0
    %123 = vmatprep.subr.mxu0 0.0
    %124 = vmatpush2.msra.mxu0 0.0
    %125 = vmatprep.subr.mxu0 0.0
    %126 = vmatpush2.msra.mxu0 0.0
    %127 = vmatprep.subr.mxu0 0.0
    %128 = vmatpush2.msra.mxu0 0.0
    %129 = vmatprep.subr.mxu0 0.0
    %130 = vmatpush2.msra.mxu0 0.0
    %131 = vmatprep.subr.mxu0 0.0
    %132 = vmatpush2.msra.mxu0 0.0
    %133 = vmatprep.subr.mxu0 0.0
    %134 = vmatpush2.msra.mxu0 0.0
    %135 = vmatprep.subr.mxu0 0.0
    %136 = vmatpush2.msra.mxu0 0.0
    %137 = vmatprep.subr.mxu0 0.0
    %138 = vmatpush2.msra.mxu0 0.0
    %139 = vmatprep.subr.mxu0 0.0
    %140 = vmatpush2.msra.mxu0 0.0
    %141 = vmatprep.subr.mxu0 0.0
    %142 = vmatpush2.msra.mxu0 0.0
    %143 = vmatprep.subr.mxu0 0.0
    %144 = vmatpush2.msra.mxu0 0.0
    %145 = vmatprep.subr.mxu0 0.0
    %146 = vmatpush2.msra.mxu0 0.0
    %147 = vmatprep.subr.mxu0 0.0
    %148 = vmatpush2.msra.mxu0 0.0
    %149 = vmatprep.mubr.f32.mxu0 0.0
    %150 = vmatmul.mubr.f32.gmra.mxu0 %v74
    %v151 = vpop.f32.mrf.mxu0
    %v152 = vadd.f32 %v70, %v151
    %v153 = vpop.f32.mrf.mxu0
    %154 = vmatprep.mubr.f32.mxu0 0.0
    %155 = vmatmul.mubr.f32.gmra.mxu0 %v77
    %v156 = vpop.f32.mrf.mxu0
    %v157 = vadd.f32 %v70, %v156
    %v158 = vpop.f32.mrf.mxu0
    %159 = vmatprep.mubr.f32.mxu0 0.0
    %160 = vmatmul.mubr.f32.gmra.mxu0 %v80
    %v161 = vpop.f32.mrf.mxu0
    %v162 = vadd.f32 %v70, %v161
    %v163 = vpop.f32.mrf.mxu0
    %164 = vmatprep.mubr.f32.mxu0 0.0
    %165 = vmatmul.mubr.f32.gmra.mxu0 %v83
    %v166 = vpop.f32.mrf.mxu0
    %v167 = vadd.f32 %v70, %v166
    %v168 = vpop.f32.mrf.mxu0
    %169 = vdwg.mxu0
    %v170 = vld [vmem:[%s4] sm:$0xff]
    %v171 = vld [vmem:[%s4 + $0x8] sm:$0xff]
    %v172 = vld [vmem:[%s4 + $0x10] sm:$0xff]
    %v173 = vld [vmem:[%s4 + $0x18] sm:$0xff]
    %v174 = vld [vmem:[%s5] sm:$0x1]
    %v176 = vlaneseq
    %v177 = vshrl.u32 %v176, 7
    %v178 = vsub.s32 0, %v177
    %v179 = vrot.slane %v174, %v178
    %vm181 = vcmask 261120
    %v183 = vsel %vm181, %v152, 0
    %v186 = vsel %vm181, %v157, 0
    %v189 = vsel %vm181, %v162, 0
    %v192 = vsel %vm181, %v167, 0
    %194 = vmatprep.subr.mxu0 0.0
    %195 = vmatpush1.msra.mxu0 0.0
    %196 = vmatprep.subr.mxu0 0.0
    %197 = vmatpush1.msra.mxu0 0.0
    %198 = vmatprep.subr.mxu0 0.0
    %199 = vmatpush1.msra.mxu0 0.0
    %200 = vmatprep.subr.mxu0 0.0
    %201 = vmatpush1.msra.mxu0 0.0
    %202 = vmatprep.subr.mxu0 0.0
    %203 = vmatpush1.msra.mxu0 0.0
    %204 = vmatprep.subr.mxu0 0.0
    %205 = vmatpush1.msra.mxu0 0.0
    %206 = vmatprep.subr.mxu0 0.0
    %207 = vmatpush1.msra.mxu0 0.0
    %208 = vmatprep.subr.mxu0 0.0
    %209 = vmatpush1.msra.mxu0 0.0
    %210 = vmatprep.subr.mxu0 0.0
    %211 = vmatpush1.msra.mxu0 0.0
    %212 = vmatprep.subr.mxu0 0.0
    %213 = vmatpush1.msra.mxu0 0.0
    %214 = vmatprep.subr.mxu0 0.0
    %215 = vmatpush1.msra.mxu0 0.0
    %216 = vmatprep.subr.mxu0 0.0
    %217 = vmatpush1.msra.mxu0 0.0
    %218 = vmatprep.subr.mxu0 0.0
    %219 = vmatpush1.msra.mxu0 %v173
    %220 = vmatprep.subr.mxu0 0.0
    %221 = vmatpush1.msra.mxu0 %v172
    %222 = vmatprep.subr.mxu0 0.0
    %223 = vmatpush1.msra.mxu0 %v171
    %224 = vmatprep.subr.mxu0 0.0
    %225 = vmatpush1.msra.mxu0 %v170
    %226 = vmatprep.subr.mxu0 0.0
    %227 = vmatpush2.msra.mxu0 0.0
    %228 = vmatprep.subr.mxu0 0.0
    %229 = vmatpush2.msra.mxu0 0.0
    %230 = vmatprep.subr.mxu0 0.0
    %231 = vmatpush2.msra.mxu0 0.0
    %232 = vmatprep.subr.mxu0 0.0
    %233 = vmatpush2.msra.mxu0 0.0
    %234 = vmatprep.subr.mxu0 0.0
    %235 = vmatpush2.msra.mxu0 0.0
    %236 = vmatprep.subr.mxu0 0.0
    %237 = vmatpush2.msra.mxu0 0.0
    %238 = vmatprep.subr.mxu0 0.0
    %239 = vmatpush2.msra.mxu0 0.0
    %240 = vmatprep.subr.mxu0 0.0
    %241 = vmatpush2.msra.mxu0 0.0
    %242 = vmatprep.subr.mxu0 0.0
    %243 = vmatpush2.msra.mxu0 0.0
    %244 = vmatprep.subr.mxu0 0.0
    %245 = vmatpush2.msra.mxu0 0.0
    %246 = vmatprep.subr.mxu0 0.0
    %247 = vmatpush2.msra.mxu0 0.0
    %248 = vmatprep.subr.mxu0 0.0
    %249 = vmatpush2.msra.mxu0 0.0
    %250 = vmatprep.subr.mxu0 0.0
    %251 = vmatpush2.msra.mxu0 0.0
    %252 = vmatprep.subr.mxu0 0.0
    %253 = vmatpush2.msra.mxu0 0.0
    %254 = vmatprep.subr.mxu0 0.0
    %255 = vmatpush2.msra.mxu0 0.0
    %256 = vmatprep.subr.mxu0 0.0
    %257 = vmatpush2.msra.mxu0 0.0
    %258 = vmatprep.mubr.f32.mxu0 0.0
    %259 = vmatmul.mubr.f32.gmra.mxu0 %v183
    %v260 = vpop.f32.mrf.mxu0
    %v261 = vadd.f32 %v179, %v260
    %v262 = vpop.f32.mrf.mxu0
    %263 = vmatprep.mubr.f32.mxu0 0.0
    %264 = vmatmul.mubr.f32.gmra.mxu0 %v186
    %v265 = vpop.f32.mrf.mxu0
    %v266 = vadd.f32 %v179, %v265
    %v267 = vpop.f32.mrf.mxu0
    %268 = vmatprep.mubr.f32.mxu0 0.0
    %269 = vmatmul.mubr.f32.gmra.mxu0 %v189
    %v270 = vpop.f32.mrf.mxu0
    %v271 = vadd.f32 %v179, %v270
    %v272 = vpop.f32.mrf.mxu0
    %273 = vmatprep.mubr.f32.mxu0 0.0
    %274 = vmatmul.mubr.f32.gmra.mxu0 %v192
    %v275 = vpop.f32.mrf.mxu0
    %v276 = vadd.f32 %v179, %v275
    %v277 = vpop.f32.mrf.mxu0
    %278 = vdwg.mxu0
    %280 = vrot.lane.b32.xlu0 %v261, 96
    %v281 = vpop.permute.xlu0 %280
    %v282 = vsel %vm72, %v261, 0
    %v284 = vsel %vm72, %v281, 0
    %286 = vmatprep.subr.mxu0 0.0
    %287 = vmatpush1.xpose.msra.mxu0 0.0
    %288 = vmatprep.subr.mxu0 0.0
    %289 = vmatpush1.xpose.msra.mxu0 0.0
    %290 = vmatprep.subr.mxu0 0.0
    %291 = vmatpush1.xpose.msra.mxu0 0.0
    %292 = vmatprep.subr.mxu0 0.0
    %293 = vmatpush1.xpose.msra.mxu0 0.0
    %294 = vmatprep.subr.mxu0 0.0
    %295 = vmatpush1.xpose.msra.mxu0 0.0
    %296 = vmatprep.subr.mxu0 0.0
    %297 = vmatpush1.xpose.msra.mxu0 0.0
    %298 = vmatprep.subr.mxu0 0.0
    %299 = vmatpush1.xpose.msra.mxu0 0.0
    %300 = vmatprep.subr.mxu0 0.0
    %301 = vmatpush1.xpose.msra.mxu0 0.0
    %302 = vmatprep.subr.mxu0 0.0
    %303 = vmatpush1.xpose.msra.mxu0 0.0
    %304 = vmatprep.subr.mxu0 0.0
    %305 = vmatpush1.xpose.msra.mxu0 0.0
    %306 = vmatprep.subr.mxu0 0.0
    %307 = vmatpush1.xpose.msra.mxu0 0.0
    %308 = vmatprep.subr.mxu0 0.0
    %309 = vmatpush1.xpose.msra.mxu0 0.0
    %310 = vmatprep.subr.mxu0 0.0
    %311 = vmatpush1.xpose.msra.mxu0 0.0
    %312 = vmatprep.subr.mxu0 0.0
    %313 = vmatpush1.xpose.msra.mxu0 0.0
    %314 = vmatprep.subr.mxu0 0.0
    %315 = vmatpush1.xpose.msra.mxu0 0.0
    %316 = vmatprep.subr.mxu0 0.0
    %317 = vmatpush1.xpose.msra.mxu0 %v284
    %318 = vmatprep.subr.mxu0 0.0
    %319 = vmatpush2.xpose.msra.mxu0 0.0
    %320 = vmatprep.subr.mxu0 0.0
    %321 = vmatpush2.xpose.msra.mxu0 0.0
    %322 = vmatprep.subr.mxu0 0.0
    %323 = vmatpush2.xpose.msra.mxu0 0.0
    %324 = vmatprep.subr.mxu0 0.0
    %325 = vmatpush2.xpose.msra.mxu0 0.0
    %326 = vmatprep.subr.mxu0 0.0
    %327 = vmatpush2.xpose.msra.mxu0 0.0
    %328 = vmatprep.subr.mxu0 0.0
    %329 = vmatpush2.xpose.msra.mxu0 0.0
    %330 = vmatprep.subr.mxu0 0.0
    %331 = vmatpush2.xpose.msra.mxu0 0.0
    %332 = vmatprep.subr.mxu0 0.0
    %333 = vmatpush2.xpose.msra.mxu0 0.0
    %334 = vmatprep.subr.mxu0 0.0
    %335 = vmatpush2.xpose.msra.mxu0 0.0
    %336 = vmatprep.subr.mxu0 0.0
    %337 = vmatpush2.xpose.msra.mxu0 0.0
    %338 = vmatprep.subr.mxu0 0.0
    %339 = vmatpush2.xpose.msra.mxu0 0.0
    %340 = vmatprep.subr.mxu0 0.0
    %341 = vmatpush2.xpose.msra.mxu0 0.0
    %342 = vmatprep.subr.mxu0 0.0
    %343 = vmatpush2.xpose.msra.mxu0 0.0
    %344 = vmatprep.subr.mxu0 0.0
    %345 = vmatpush2.xpose.msra.mxu0 0.0
    %346 = vmatprep.subr.mxu0 0.0
    %347 = vmatpush2.xpose.msra.mxu0 0.0
    %348 = vmatprep.subr.mxu0 0.0
    %349 = vmatpush2.xpose.msra.mxu0 0.0
    %350 = vmatprep.mubr.f32.mxu0 0.0
    %351 = vmatmul.mubr.f32.gmra.mxu0 %v282
    %v352 = vpop.f32.mrf.mxu0
    %v353 = vadd.f32 0.0, %v352
    %v354 = vpop.f32.mrf.mxu0
    %355 = vdwg.mxu0
    %357 = vrot.lane.b32.xlu0 %v266, 96
    %v358 = vpop.permute.xlu0 %357
    %v359 = vsel %vm72, %v266, 0
    %v361 = vsel %vm72, %v358, 0
    %363 = vmatprep.subr.mxu0 0.0
    %364 = vmatpush1.xpose.msra.mxu0 0.0
    %365 = vmatprep.subr.mxu0 0.0
    %366 = vmatpush1.xpose.msra.mxu0 0.0
    %367 = vmatprep.subr.mxu0 0.0
    %368 = vmatpush1.xpose.msra.mxu0 0.0
    %369 = vmatprep.subr.mxu0 0.0
    %370 = vmatpush1.xpose.msra.mxu0 0.0
    %371 = vmatprep.subr.mxu0 0.0
    %372 = vmatpush1.xpose.msra.mxu0 0.0
    %373 = vmatprep.subr.mxu0 0.0
    %374 = vmatpush1.xpose.msra.mxu0 0.0
    %375 = vmatprep.subr.mxu0 0.0
    %376 = vmatpush1.xpose.msra.mxu0 0.0
    %377 = vmatprep.subr.mxu0 0.0
    %378 = vmatpush1.xpose.msra.mxu0 0.0
    %379 = vmatprep.subr.mxu0 0.0
    %380 = vmatpush1.xpose.msra.mxu0 0.0
    %381 = vmatprep.subr.mxu0 0.0
    %382 = vmatpush1.xpose.msra.mxu0 0.0
    %383 = vmatprep.subr.mxu0 0.0
    %384 = vmatpush1.xpose.msra.mxu0 0.0
    %385 = vmatprep.subr.mxu0 0.0
    %386 = vmatpush1.xpose.msra.mxu0 0.0
    %387 = vmatprep.subr.mxu0 0.0
    %388 = vmatpush1.xpose.msra.mxu0 0.0
    %389 = vmatprep.subr.mxu0 0.0
    %390 = vmatpush1.xpose.msra.mxu0 0.0
    %391 = vmatprep.subr.mxu0 0.0
    %392 = vmatpush1.xpose.msra.mxu0 0.0
    %393 = vmatprep.subr.mxu0 0.0
    %394 = vmatpush1.xpose.msra.mxu0 %v361
    %395 = vmatprep.subr.mxu0 0.0
    %396 = vmatpush2.xpose.msra.mxu0 0.0
    %397 = vmatprep.subr.mxu0 0.0
    %398 = vmatpush2.xpose.msra.mxu0 0.0
    %399 = vmatprep.subr.mxu0 0.0
    %400 = vmatpush2.xpose.msra.mxu0 0.0
    %401 = vmatprep.subr.mxu0 0.0
    %402 = vmatpush2.xpose.msra.mxu0 0.0
    %403 = vmatprep.subr.mxu0 0.0
    %404 = vmatpush2.xpose.msra.mxu0 0.0
    %405 = vmatprep.subr.mxu0 0.0
    %406 = vmatpush2.xpose.msra.mxu0 0.0
    %407 = vmatprep.subr.mxu0 0.0
    %408 = vmatpush2.xpose.msra.mxu0 0.0
    %409 = vmatprep.subr.mxu0 0.0
    %410 = vmatpush2.xpose.msra.mxu0 0.0
    %411 = vmatprep.subr.mxu0 0.0
    %412 = vmatpush2.xpose.msra.mxu0 0.0
    %413 = vmatprep.subr.mxu0 0.0
    %414 = vmatpush2.xpose.msra.mxu0 0.0
    %415 = vmatprep.subr.mxu0 0.0
    %416 = vmatpush2.xpose.msra.mxu0 0.0
    %417 = vmatprep.subr.mxu0 0.0
    %418 = vmatpush2.xpose.msra.mxu0 0.0
    %419 = vmatprep.subr.mxu0 0.0
    %420 = vmatpush2.xpose.msra.mxu0 0.0
    %421 = vmatprep.subr.mxu0 0.0
    %422 = vmatpush2.xpose.msra.mxu0 0.0
    %423 = vmatprep.subr.mxu0 0.0
    %424 = vmatpush2.xpose.msra.mxu0 0.0
    %425 = vmatprep.subr.mxu0 0.0
    %426 = vmatpush2.xpose.msra.mxu0 0.0
    %427 = vmatprep.mubr.f32.mxu0 0.0
    %428 = vmatmul.mubr.f32.gmra.mxu0 %v359
    %v429 = vpop.f32.mrf.mxu0
    %v430 = vadd.f32 0.0, %v429
    %v431 = vpop.f32.mrf.mxu0
    %432 = vdwg.mxu0
    %434 = vrot.lane.b32.xlu0 %v271, 96
    %v435 = vpop.permute.xlu0 %434
    %v436 = vsel %vm72, %v271, 0
    %v438 = vsel %vm72, %v435, 0
    %440 = vmatprep.subr.mxu0 0.0
    %441 = vmatpush1.xpose.msra.mxu0 0.0
    %442 = vmatprep.subr.mxu0 0.0
    %443 = vmatpush1.xpose.msra.mxu0 0.0
    %444 = vmatprep.subr.mxu0 0.0
    %445 = vmatpush1.xpose.msra.mxu0 0.0
    %446 = vmatprep.subr.mxu0 0.0
    %447 = vmatpush1.xpose.msra.mxu0 0.0
    %448 = vmatprep.subr.mxu0 0.0
    %449 = vmatpush1.xpose.msra.mxu0 0.0
    %450 = vmatprep.subr.mxu0 0.0
    %451 = vmatpush1.xpose.msra.mxu0 0.0
    %452 = vmatprep.subr.mxu0 0.0
    %453 = vmatpush1.xpose.msra.mxu0 0.0
    %454 = vmatprep.subr.mxu0 0.0
    %455 = vmatpush1.xpose.msra.mxu0 0.0
    %456 = vmatprep.subr.mxu0 0.0
    %457 = vmatpush1.xpose.msra.mxu0 0.0
    %458 = vmatprep.subr.mxu0 0.0
    %459 = vmatpush1.xpose.msra.mxu0 0.0
    %460 = vmatprep.subr.mxu0 0.0
    %461 = vmatpush1.xpose.msra.mxu0 0.0
    %462 = vmatprep.subr.mxu0 0.0
    %463 = vmatpush1.xpose.msra.mxu0 0.0
    %464 = vmatprep.subr.mxu0 0.0
    %465 = vmatpush1.xpose.msra.mxu0 0.0
    %466 = vmatprep.subr.mxu0 0.0
    %467 = vmatpush1.xpose.msra.mxu0 0.0
    %468 = vmatprep.subr.mxu0 0.0
    %469 = vmatpush1.xpose.msra.mxu0 0.0
    %470 = vmatprep.subr.mxu0 0.0
    %471 = vmatpush1.xpose.msra.mxu0 %v438
    %472 = vmatprep.subr.mxu0 0.0
    %473 = vmatpush2.xpose.msra.mxu0 0.0
    %474 = vmatprep.subr.mxu0 0.0
    %475 = vmatpush2.xpose.msra.mxu0 0.0
    %476 = vmatprep.subr.mxu0 0.0
    %477 = vmatpush2.xpose.msra.mxu0 0.0
    %478 = vmatprep.subr.mxu0 0.0
    %479 = vmatpush2.xpose.msra.mxu0 0.0
    %480 = vmatprep.subr.mxu0 0.0
    %481 = vmatpush2.xpose.msra.mxu0 0.0
    %482 = vmatprep.subr.mxu0 0.0
    %483 = vmatpush2.xpose.msra.mxu0 0.0
    %484 = vmatprep.subr.mxu0 0.0
    %485 = vmatpush2.xpose.msra.mxu0 0.0
    %486 = vmatprep.subr.mxu0 0.0
    %487 = vmatpush2.xpose.msra.mxu0 0.0
    %488 = vmatprep.subr.mxu0 0.0
    %489 = vmatpush2.xpose.msra.mxu0 0.0
    %490 = vmatprep.subr.mxu0 0.0
    %491 = vmatpush2.xpose.msra.mxu0 0.0
    %492 = vmatprep.subr.mxu0 0.0
    %493 = vmatpush2.xpose.msra.mxu0 0.0
    %494 = vmatprep.subr.mxu0 0.0
    %495 = vmatpush2.xpose.msra.mxu0 0.0
    %496 = vmatprep.subr.mxu0 0.0
    %497 = vmatpush2.xpose.msra.mxu0 0.0
    %498 = vmatprep.subr.mxu0 0.0
    %499 = vmatpush2.xpose.msra.mxu0 0.0
    %500 = vmatprep.subr.mxu0 0.0
    %501 = vmatpush2.xpose.msra.mxu0 0.0
    %502 = vmatprep.subr.mxu0 0.0
    %503 = vmatpush2.xpose.msra.mxu0 0.0
    %504 = vmatprep.mubr.f32.mxu0 0.0
    %505 = vmatmul.mubr.f32.gmra.mxu0 %v436
    %v506 = vpop.f32.mrf.mxu0
    %v507 = vadd.f32 0.0, %v506
    %v508 = vpop.f32.mrf.mxu0
    %509 = vdwg.mxu0
    %511 = vrot.lane.b32.xlu0 %v276, 96
    %v512 = vpop.permute.xlu0 %511
    %v513 = vsel %vm72, %v276, 0
    %v515 = vsel %vm72, %v512, 0
    %517 = vmatprep.subr.mxu0 0.0
    %518 = vmatpush1.xpose.msra.mxu0 0.0
    %519 = vmatprep.subr.mxu0 0.0
    %520 = vmatpush1.xpose.msra.mxu0 0.0
    %521 = vmatprep.subr.mxu0 0.0
    %522 = vmatpush1.xpose.msra.mxu0 0.0
    %523 = vmatprep.subr.mxu0 0.0
    %524 = vmatpush1.xpose.msra.mxu0 0.0
    %525 = vmatprep.subr.mxu0 0.0
    %526 = vmatpush1.xpose.msra.mxu0 0.0
    %527 = vmatprep.subr.mxu0 0.0
    %528 = vmatpush1.xpose.msra.mxu0 0.0
    %529 = vmatprep.subr.mxu0 0.0
    %530 = vmatpush1.xpose.msra.mxu0 0.0
    %531 = vmatprep.subr.mxu0 0.0
    %532 = vmatpush1.xpose.msra.mxu0 0.0
    %533 = vmatprep.subr.mxu0 0.0
    %534 = vmatpush1.xpose.msra.mxu0 0.0
    %535 = vmatprep.subr.mxu0 0.0
    %536 = vmatpush1.xpose.msra.mxu0 0.0
    %537 = vmatprep.subr.mxu0 0.0
    %538 = vmatpush1.xpose.msra.mxu0 0.0
    %539 = vmatprep.subr.mxu0 0.0
    %540 = vmatpush1.xpose.msra.mxu0 0.0
    %541 = vmatprep.subr.mxu0 0.0
    %542 = vmatpush1.xpose.msra.mxu0 0.0
    %543 = vmatprep.subr.mxu0 0.0
    %544 = vmatpush1.xpose.msra.mxu0 0.0
    %545 = vmatprep.subr.mxu0 0.0
    %546 = vmatpush1.xpose.msra.mxu0 0.0
    %547 = vmatprep.subr.mxu0 0.0
    %548 = vmatpush1.xpose.msra.mxu0 %v515
    %549 = vmatprep.subr.mxu0 0.0
    %550 = vmatpush2.xpose.msra.mxu0 0.0
    %551 = vmatprep.subr.mxu0 0.0
    %552 = vmatpush2.xpose.msra.mxu0 0.0
    %553 = vmatprep.subr.mxu0 0.0
    %554 = vmatpush2.xpose.msra.mxu0 0.0
    %555 = vmatprep.subr.mxu0 0.0
    %556 = vmatpush2.xpose.msra.mxu0 0.0
    %557 = vmatprep.subr.mxu0 0.0
    %558 = vmatpush2.xpose.msra.mxu0 0.0
    %559 = vmatprep.subr.mxu0 0.0
    %560 = vmatpush2.xpose.msra.mxu0 0.0
    %561 = vmatprep.subr.mxu0 0.0
    %562 = vmatpush2.xpose.msra.mxu0 0.0
    %563 = vmatprep.subr.mxu0 0.0
    %564 = vmatpush2.xpose.msra.mxu0 0.0
    %565 = vmatprep.subr.mxu0 0.0
    %566 = vmatpush2.xpose.msra.mxu0 0.0
    %567 = vmatprep.subr.mxu0 0.0
    %568 = vmatpush2.xpose.msra.mxu0 0.0
    %569 = vmatprep.subr.mxu0 0.0
    %570 = vmatpush2.xpose.msra.mxu0 0.0
    %571 = vmatprep.subr.mxu0 0.0
    %572 = vmatpush2.xpose.msra.mxu0 0.0
    %573 = vmatprep.subr.mxu0 0.0
    %574 = vmatpush2.xpose.msra.mxu0 0.0
    %575 = vmatprep.subr.mxu0 0.0
    %576 = vmatpush2.xpose.msra.mxu0 0.0
    %577 = vmatprep.subr.mxu0 0.0
    %578 = vmatpush2.xpose.msra.mxu0 0.0
    %579 = vmatprep.subr.mxu0 0.0
    %580 = vmatpush2.xpose.msra.mxu0 0.0
    %581 = vmatprep.mubr.f32.mxu0 0.0
    %582 = vmatmul.mubr.f32.gmra.mxu0 %v513
    %v583 = vpop.f32.mrf.mxu0
    %v584 = vadd.f32 0.0, %v583
    %v585 = vpop.f32.mrf.mxu0
    %586 = vdwg.mxu0
    %vm587 = vcmask 64512
    %v588 = vsel %vm587, %v353, -inf
    %589 = vmax.xlane.f32.xlu0 %v588
    %v590 = vpop.xlane.xlu0 %589
    %v591 = vsel %vm587, %v430, -inf
    %592 = vmax.xlane.f32.xlu0 %v591
    %v593 = vpop.xlane.xlu0 %592
    %v594 = vsel %vm587, %v507, -inf
    %595 = vmax.xlane.f32.xlu0 %v594
    %v596 = vpop.xlane.xlu0 %595
    %v597 = vsel %vm587, %v584, -inf
    %598 = vmax.xlane.f32.xlu0 %v597
    %v599 = vpop.xlane.xlu0 %598
    %v600 = vsub.f32 %v353, %v590
    %v601 = vsub.f32 %v430, %v593
    %v602 = vsub.f32 %v507, %v596
    %v603 = vsub.f32 %v584, %v599
    %v604 = vmul.f32 %v600, 1.442695
    %v605 = vpow.pop %v604
    %v606 = vmul.f32 %v601, 1.442695
    %v607 = vpow.pop %v606
    %v608 = vmul.f32 %v602, 1.442695
    %v609 = vpow.pop %v608
    %v610 = vmul.f32 %v603, 1.442695
    %v611 = vpow.pop %v610
    %v612 = vsel %vm587, %v605, 0.0
    %613 = vadd.xlane.f32.xlu0 %v612
    %v614 = vpop.xlane.xlu0 %613
    %v615 = vsel %vm587, %v607, 0.0
    %616 = vadd.xlane.f32.xlu0 %v615
    %v617 = vpop.xlane.xlu0 %616
    %v618 = vsel %vm587, %v609, 0.0
    %619 = vadd.xlane.f32.xlu0 %v618
    %v620 = vpop.xlane.xlu0 %619
    %v621 = vsel %vm587, %v611, 0.0
    %622 = vadd.xlane.f32.xlu0 %v621
    %v623 = vpop.xlane.xlu0 %622
    %v624 = vrcp.pop %v614
    %v625 = vrcp.pop %v617
    %v626 = vrcp.pop %v620
    %v627 = vrcp.pop %v623
    %v628 = vmul.f32 %v605, %v624
    %v629 = vmul.f32 %v607, %v625
    %v630 = vmul.f32 %v609, %v626
    %v631 = vmul.f32 %v611, %v627
    %632 = vrot.lane.b32.xlu0 %v261, 64
    %v633 = vpop.permute.xlu0 %632
    %v636 = vsel %vm587, %v628, 0
    %638 = vmatprep.subr.mxu0 0.0
    %639 = vmatpush1.msra.mxu0 0.0
    %640 = vmatprep.subr.mxu0 0.0
    %641 = vmatpush1.msra.mxu0 0.0
    %642 = vmatprep.subr.mxu0 0.0
    %643 = vmatpush1.msra.mxu0 0.0
    %644 = vmatprep.subr.mxu0 0.0
    %645 = vmatpush1.msra.mxu0 0.0
    %646 = vmatprep.subr.mxu0 0.0
    %647 = vmatpush1.msra.mxu0 0.0
    %648 = vmatprep.subr.mxu0 0.0
    %649 = vmatpush1.msra.mxu0 0.0
    %650 = vmatprep.subr.mxu0 0.0
    %651 = vmatpush1.msra.mxu0 0.0
    %652 = vmatprep.subr.mxu0 0.0
    %653 = vmatpush1.msra.mxu0 0.0
    %654 = vmatprep.subr.mxu0 0.0
    %655 = vmatpush1.msra.mxu0 0.0
    %656 = vmatprep.subr.mxu0 0.0
    %657 = vmatpush1.msra.mxu0 0.0
    %658 = vmatprep.subr.mxu0 0.0
    %659 = vmatpush1.msra.mxu0 0.0
    %660 = vmatprep.subr.mxu0 0.0
    %661 = vmatpush1.msra.mxu0 0.0
    %662 = vmatprep.subr.mxu0 0.0
    %663 = vmatpush1.msra.mxu0 0.0
    %664 = vmatprep.subr.mxu0 0.0
    %665 = vmatpush1.msra.mxu0 0.0
    %666 = vmatprep.subr.mxu0 0.0
    %667 = vmatpush1.msra.mxu0 0.0
    %668 = vmatprep.subr.mxu0 0.0
    %669 = vmatpush1.msra.mxu0 %v633
    %670 = vmatprep.subr.mxu0 0.0
    %671 = vmatpush2.msra.mxu0 0.0
    %672 = vmatprep.subr.mxu0 0.0
    %673 = vmatpush2.msra.mxu0 0.0
    %674 = vmatprep.subr.mxu0 0.0
    %675 = vmatpush2.msra.mxu0 0.0
    %676 = vmatprep.subr.mxu0 0.0
    %677 = vmatpush2.msra.mxu0 0.0
    %678 = vmatprep.subr.mxu0 0.0
    %679 = vmatpush2.msra.mxu0 0.0
    %680 = vmatprep.subr.mxu0 0.0
    %681 = vmatpush2.msra.mxu0 0.0
    %682 = vmatprep.subr.mxu0 0.0
    %683 = vmatpush2.msra.mxu0 0.0
    %684 = vmatprep.subr.mxu0 0.0
    %685 = vmatpush2.msra.mxu0 0.0
    %686 = vmatprep.subr.mxu0 0.0
    %687 = vmatpush2.msra.mxu0 0.0
    %688 = vmatprep.subr.mxu0 0.0
    %689 = vmatpush2.msra.mxu0 0.0
    %690 = vmatprep.subr.mxu0 0.0
    %691 = vmatpush2.msra.mxu0 0.0
    %692 = vmatprep.subr.mxu0 0.0
    %693 = vmatpush2.msra.mxu0 0.0
    %694 = vmatprep.subr.mxu0 0.0
    %695 = vmatpush2.msra.mxu0 0.0
    %696 = vmatprep.subr.mxu0 0.0
    %697 = vmatpush2.msra.mxu0 0.0
    %698 = vmatprep.subr.mxu0 0.0
    %699 = vmatpush2.msra.mxu0 0.0
    %700 = vmatprep.subr.mxu0 0.0
    %701 = vmatpush2.msra.mxu0 0.0
    %702 = vmatprep.mubr.f32.mxu0 0.0
    %703 = vmatmul.mubr.f32.gmra.mxu0 %v636
    %v704 = vpop.f32.mrf.mxu0
    %v705 = vadd.f32 0.0, %v704
    %v706 = vpop.f32.mrf.mxu0
    %707 = vdwg.mxu0
    %708 = vrot.lane.b32.xlu0 %v266, 64
    %v709 = vpop.permute.xlu0 %708
    %v712 = vsel %vm587, %v629, 0
    %714 = vmatprep.subr.mxu0 0.0
    %715 = vmatpush1.msra.mxu0 0.0
    %716 = vmatprep.subr.mxu0 0.0
    %717 = vmatpush1.msra.mxu0 0.0
    %718 = vmatprep.subr.mxu0 0.0
    %719 = vmatpush1.msra.mxu0 0.0
    %720 = vmatprep.subr.mxu0 0.0
    %721 = vmatpush1.msra.mxu0 0.0
    %722 = vmatprep.subr.mxu0 0.0
    %723 = vmatpush1.msra.mxu0 0.0
    %724 = vmatprep.subr.mxu0 0.0
    %725 = vmatpush1.msra.mxu0 0.0
    %726 = vmatprep.subr.mxu0 0.0
    %727 = vmatpush1.msra.mxu0 0.0
    %728 = vmatprep.subr.mxu0 0.0
    %729 = vmatpush1.msra.mxu0 0.0
    %730 = vmatprep.subr.mxu0 0.0
    %731 = vmatpush1.msra.mxu0 0.0
    %732 = vmatprep.subr.mxu0 0.0
    %733 = vmatpush1.msra.mxu0 0.0
    %734 = vmatprep.subr.mxu0 0.0
    %735 = vmatpush1.msra.mxu0 0.0
    %736 = vmatprep.subr.mxu0 0.0
    %737 = vmatpush1.msra.mxu0 0.0
    %738 = vmatprep.subr.mxu0 0.0
    %739 = vmatpush1.msra.mxu0 0.0
    %740 = vmatprep.subr.mxu0 0.0
    %741 = vmatpush1.msra.mxu0 0.0
    %742 = vmatprep.subr.mxu0 0.0
    %743 = vmatpush1.msra.mxu0 0.0
    %744 = vmatprep.subr.mxu0 0.0
    %745 = vmatpush1.msra.mxu0 %v709
    %746 = vmatprep.subr.mxu0 0.0
    %747 = vmatpush2.msra.mxu0 0.0
    %748 = vmatprep.subr.mxu0 0.0
    %749 = vmatpush2.msra.mxu0 0.0
    %750 = vmatprep.subr.mxu0 0.0
    %751 = vmatpush2.msra.mxu0 0.0
    %752 = vmatprep.subr.mxu0 0.0
    %753 = vmatpush2.msra.mxu0 0.0
    %754 = vmatprep.subr.mxu0 0.0
    %755 = vmatpush2.msra.mxu0 0.0
    %756 = vmatprep.subr.mxu0 0.0
    %757 = vmatpush2.msra.mxu0 0.0
    %758 = vmatprep.subr.mxu0 0.0
    %759 = vmatpush2.msra.mxu0 0.0
    %760 = vmatprep.subr.mxu0 0.0
    %761 = vmatpush2.msra.mxu0 0.0
    %762 = vmatprep.subr.mxu0 0.0
    %763 = vmatpush2.msra.mxu0 0.0
    %764 = vmatprep.subr.mxu0 0.0
    %765 = vmatpush2.msra.mxu0 0.0
    %766 = vmatprep.subr.mxu0 0.0
    %767 = vmatpush2.msra.mxu0 0.0
    %768 = vmatprep.subr.mxu0 0.0
    %769 = vmatpush2.msra.mxu0 0.0
    %770 = vmatprep.subr.mxu0 0.0
    %771 = vmatpush2.msra.mxu0 0.0
    %772 = vmatprep.subr.mxu0 0.0
    %773 = vmatpush2.msra.mxu0 0.0
    %774 = vmatprep.subr.mxu0 0.0
    %775 = vmatpush2.msra.mxu0 0.0
    %776 = vmatprep.subr.mxu0 0.0
    %777 = vmatpush2.msra.mxu0 0.0
    %778 = vmatprep.mubr.f32.mxu0 0.0
    %779 = vmatmul.mubr.f32.gmra.mxu0 %v712
    %v780 = vpop.f32.mrf.mxu0
    %v781 = vadd.f32 0.0, %v780
    %v782 = vpop.f32.mrf.mxu0
    %783 = vdwg.mxu0
    %784 = vrot.lane.b32.xlu0 %v271, 64
    %v785 = vpop.permute.xlu0 %784
    %v788 = vsel %vm587, %v630, 0
    %790 = vmatprep.subr.mxu0 0.0
    %791 = vmatpush1.msra.mxu0 0.0
    %792 = vmatprep.subr.mxu0 0.0
    %793 = vmatpush1.msra.mxu0 0.0
    %794 = vmatprep.subr.mxu0 0.0
    %795 = vmatpush1.msra.mxu0 0.0
    %796 = vmatprep.subr.mxu0 0.0
    %797 = vmatpush1.msra.mxu0 0.0
    %798 = vmatprep.subr.mxu0 0.0
    %799 = vmatpush1.msra.mxu0 0.0
    %800 = vmatprep.subr.mxu0 0.0
    %801 = vmatpush1.msra.mxu0 0.0
    %802 = vmatprep.subr.mxu0 0.0
    %803 = vmatpush1.msra.mxu0 0.0
    %804 = vmatprep.subr.mxu0 0.0
    %805 = vmatpush1.msra.mxu0 0.0
    %806 = vmatprep.subr.mxu0 0.0
    %807 = vmatpush1.msra.mxu0 0.0
    %808 = vmatprep.subr.mxu0 0.0
    %809 = vmatpush1.msra.mxu0 0.0
    %810 = vmatprep.subr.mxu0 0.0
    %811 = vmatpush1.msra.mxu0 0.0
    %812 = vmatprep.subr.mxu0 0.0
    %813 = vmatpush1.msra.mxu0 0.0
    %814 = vmatprep.subr.mxu0 0.0
    %815 = vmatpush1.msra.mxu0 0.0
    %816 = vmatprep.subr.mxu0 0.0
    %817 = vmatpush1.msra.mxu0 0.0
    %818 = vmatprep.subr.mxu0 0.0
    %819 = vmatpush1.msra.mxu0 0.0
    %820 = vmatprep.subr.mxu0 0.0
    %821 = vmatpush1.msra.mxu0 %v785
    %822 = vmatprep.subr.mxu0 0.0
    %823 = vmatpush2.msra.mxu0 0.0
    %824 = vmatprep.subr.mxu0 0.0
    %825 = vmatpush2.msra.mxu0 0.0
    %826 = vmatprep.subr.mxu0 0.0
    %827 = vmatpush2.msra.mxu0 0.0
    %828 = vmatprep.subr.mxu0 0.0
    %829 = vmatpush2.msra.mxu0 0.0
    %830 = vmatprep.subr.mxu0 0.0
    %831 = vmatpush2.msra.mxu0 0.0
    %832 = vmatprep.subr.mxu0 0.0
    %833 = vmatpush2.msra.mxu0 0.0
    %834 = vmatprep.subr.mxu0 0.0
    %835 = vmatpush2.msra.mxu0 0.0
    %836 = vmatprep.subr.mxu0 0.0
    %837 = vmatpush2.msra.mxu0 0.0
    %838 = vmatprep.subr.mxu0 0.0
    %839 = vmatpush2.msra.mxu0 0.0
    %840 = vmatprep.subr.mxu0 0.0
    %841 = vmatpush2.msra.mxu0 0.0
    %842 = vmatprep.subr.mxu0 0.0
    %843 = vmatpush2.msra.mxu0 0.0
    %844 = vmatprep.subr.mxu0 0.0
    %845 = vmatpush2.msra.mxu0 0.0
    %846 = vmatprep.subr.mxu0 0.0
    %847 = vmatpush2.msra.mxu0 0.0
    %848 = vmatprep.subr.mxu0 0.0
    %849 = vmatpush2.msra.mxu0 0.0
    %850 = vmatprep.subr.mxu0 0.0
    %851 = vmatpush2.msra.mxu0 0.0
    %852 = vmatprep.subr.mxu0 0.0
    %853 = vmatpush2.msra.mxu0 0.0
    %854 = vmatprep.mubr.f32.mxu0 0.0
    %855 = vmatmul.mubr.f32.gmra.mxu0 %v788
    %v856 = vpop.f32.mrf.mxu0
    %v857 = vadd.f32 0.0, %v856
    %v858 = vpop.f32.mrf.mxu0
    %859 = vdwg.mxu0
    %860 = vrot.lane.b32.xlu0 %v276, 64
    %v861 = vpop.permute.xlu0 %860
    %v864 = vsel %vm587, %v631, 0
    %866 = vmatprep.subr.mxu0 0.0
    %867 = vmatpush1.msra.mxu0 0.0
    %868 = vmatprep.subr.mxu0 0.0
    %869 = vmatpush1.msra.mxu0 0.0
    %870 = vmatprep.subr.mxu0 0.0
    %871 = vmatpush1.msra.mxu0 0.0
    %872 = vmatprep.subr.mxu0 0.0
    %873 = vmatpush1.msra.mxu0 0.0
    %874 = vmatprep.subr.mxu0 0.0
    %875 = vmatpush1.msra.mxu0 0.0
    %876 = vmatprep.subr.mxu0 0.0
    %877 = vmatpush1.msra.mxu0 0.0
    %878 = vmatprep.subr.mxu0 0.0
    %879 = vmatpush1.msra.mxu0 0.0
    %880 = vmatprep.subr.mxu0 0.0
    %881 = vmatpush1.msra.mxu0 0.0
    %882 = vmatprep.subr.mxu0 0.0
    %883 = vmatpush1.msra.mxu0 0.0
    %884 = vmatprep.subr.mxu0 0.0
    %885 = vmatpush1.msra.mxu0 0.0
    %886 = vmatprep.subr.mxu0 0.0
    %887 = vmatpush1.msra.mxu0 0.0
    %888 = vmatprep.subr.mxu0 0.0
    %889 = vmatpush1.msra.mxu0 0.0
    %890 = vmatprep.subr.mxu0 0.0
    %891 = vmatpush1.msra.mxu0 0.0
    %892 = vmatprep.subr.mxu0 0.0
    %893 = vmatpush1.msra.mxu0 0.0
    %894 = vmatprep.subr.mxu0 0.0
    %895 = vmatpush1.msra.mxu0 0.0
    %896 = vmatprep.subr.mxu0 0.0
    %897 = vmatpush1.msra.mxu0 %v861
    %898 = vmatprep.subr.mxu0 0.0
    %899 = vmatpush2.msra.mxu0 0.0
    %900 = vmatprep.subr.mxu0 0.0
    %901 = vmatpush2.msra.mxu0 0.0
    %902 = vmatprep.subr.mxu0 0.0
    %903 = vmatpush2.msra.mxu0 0.0
    %904 = vmatprep.subr.mxu0 0.0
    %905 = vmatpush2.msra.mxu0 0.0
    %906 = vmatprep.subr.mxu0 0.0
    %907 = vmatpush2.msra.mxu0 0.0
    %908 = vmatprep.subr.mxu0 0.0
    %909 = vmatpush2.msra.mxu0 0.0
    %910 = vmatprep.subr.mxu0 0.0
    %911 = vmatpush2.msra.mxu0 0.0
    %912 = vmatprep.subr.mxu0 0.0
    %913 = vmatpush2.msra.mxu0 0.0
    %914 = vmatprep.subr.mxu0 0.0
    %915 = vmatpush2.msra.mxu0 0.0
    %916 = vmatprep.subr.mxu0 0.0
    %917 = vmatpush2.msra.mxu0 0.0
    %918 = vmatprep.subr.mxu0 0.0
    %919 = vmatpush2.msra.mxu0 0.0
    %920 = vmatprep.subr.mxu0 0.0
    %921 = vmatpush2.msra.mxu0 0.0
    %922 = vmatprep.subr.mxu0 0.0
    %923 = vmatpush2.msra.mxu0 0.0
    %924 = vmatprep.subr.mxu0 0.0
    %925 = vmatpush2.msra.mxu0 0.0
    %926 = vmatprep.subr.mxu0 0.0
    %927 = vmatpush2.msra.mxu0 0.0
    %928 = vmatprep.subr.mxu0 0.0
    %929 = vmatpush2.msra.mxu0 0.0
    %930 = vmatprep.mubr.f32.mxu0 0.0
    %931 = vmatmul.mubr.f32.gmra.mxu0 %v864
    %v932 = vpop.f32.mrf.mxu0
    %v933 = vadd.f32 0.0, %v932
    %v934 = vpop.f32.mrf.mxu0
    %935 = vdwg.mxu0
    %v936 = vld [vmem:[%s6] sm:$0xff]
    %v937 = vld [vmem:[%s6 + $0x8] sm:$0xff]
    %938 = vrot.lane.b32.xlu0 %v261, 112
    %v939 = vpop.permute.xlu0 %938
    %940 = vrot.lane.b32.xlu0 %v261, 80
    %v941 = vpop.permute.xlu0 %940
    %v942 = vsel %vm72, %v939, 0
    %v944 = vsel %vm72, %v941, 0
    %946 = vmatprep.subr.mxu0 0.0
    %947 = vmatpush1.xpose.msra.mxu0 0.0
    %948 = vmatprep.subr.mxu0 0.0
    %949 = vmatpush1.xpose.msra.mxu0 0.0
    %950 = vmatprep.subr.mxu0 0.0
    %951 = vmatpush1.xpose.msra.mxu0 0.0
    %952 = vmatprep.subr.mxu0 0.0
    %953 = vmatpush1.xpose.msra.mxu0 0.0
    %954 = vmatprep.subr.mxu0 0.0
    %955 = vmatpush1.xpose.msra.mxu0 0.0
    %956 = vmatprep.subr.mxu0 0.0
    %957 = vmatpush1.xpose.msra.mxu0 0.0
    %958 = vmatprep.subr.mxu0 0.0
    %959 = vmatpush1.xpose.msra.mxu0 0.0
    %960 = vmatprep.subr.mxu0 0.0
    %961 = vmatpush1.xpose.msra.mxu0 0.0
    %962 = vmatprep.subr.mxu0 0.0
    %963 = vmatpush1.xpose.msra.mxu0 0.0
    %964 = vmatprep.subr.mxu0 0.0
    %965 = vmatpush1.xpose.msra.mxu0 0.0
    %966 = vmatprep.subr.mxu0 0.0
    %967 = vmatpush1.xpose.msra.mxu0 0.0
    %968 = vmatprep.subr.mxu0 0.0
    %969 = vmatpush1.xpose.msra.mxu0 0.0
    %970 = vmatprep.subr.mxu0 0.0
    %971 = vmatpush1.xpose.msra.mxu0 0.0
    %972 = vmatprep.subr.mxu0 0.0
    %973 = vmatpush1.xpose.msra.mxu0 0.0
    %974 = vmatprep.subr.mxu0 0.0
    %975 = vmatpush1.xpose.msra.mxu0 0.0
    %976 = vmatprep.subr.mxu0 0.0
    %977 = vmatpush1.xpose.msra.mxu0 %v944
    %978 = vmatprep.subr.mxu0 0.0
    %979 = vmatpush2.xpose.msra.mxu0 0.0
    %980 = vmatprep.subr.mxu0 0.0
    %981 = vmatpush2.xpose.msra.mxu0 0.0
    %982 = vmatprep.subr.mxu0 0.0
    %983 = vmatpush2.xpose.msra.mxu0 0.0
    %984 = vmatprep.subr.mxu0 0.0
    %985 = vmatpush2.xpose.msra.mxu0 0.0
    %986 = vmatprep.subr.mxu0 0.0
    %987 = vmatpush2.xpose.msra.mxu0 0.0
    %988 = vmatprep.subr.mxu0 0.0
    %989 = vmatpush2.xpose.msra.mxu0 0.0
    %990 = vmatprep.subr.mxu0 0.0
    %991 = vmatpush2.xpose.msra.mxu0 0.0
    %992 = vmatprep.subr.mxu0 0.0
    %993 = vmatpush2.xpose.msra.mxu0 0.0
    %994 = vmatprep.subr.mxu0 0.0
    %995 = vmatpush2.xpose.msra.mxu0 0.0
    %996 = vmatprep.subr.mxu0 0.0
    %997 = vmatpush2.xpose.msra.mxu0 0.0
    %998 = vmatprep.subr.mxu0 0.0
    %999 = vmatpush2.xpose.msra.mxu0 0.0
    %1000 = vmatprep.subr.mxu0 0.0
    %1001 = vmatpush2.xpose.msra.mxu0 0.0
    %1002 = vmatprep.subr.mxu0 0.0
    %1003 = vmatpush2.xpose.msra.mxu0 0.0
    %1004 = vmatprep.subr.mxu0 0.0
    %1005 = vmatpush2.xpose.msra.mxu0 0.0
    %1006 = vmatprep.subr.mxu0 0.0
    %1007 = vmatpush2.xpose.msra.mxu0 0.0
    %1008 = vmatprep.subr.mxu0 0.0
    %1009 = vmatpush2.xpose.msra.mxu0 0.0
    %1010 = vmatprep.mubr.f32.mxu0 0.0
    %1011 = vmatmul.mubr.f32.gmra.mxu0 %v942
    %v1012 = vpop.f32.mrf.mxu0
    %v1013 = vadd.f32 0.0, %v1012
    %v1014 = vpop.f32.mrf.mxu0
    %1015 = vdwg.mxu0
    %1016 = vrot.lane.b32.xlu0 %v266, 112
    %v1017 = vpop.permute.xlu0 %1016
    %1018 = vrot.lane.b32.xlu0 %v266, 80
    %v1019 = vpop.permute.xlu0 %1018
    %v1020 = vsel %vm72, %v1017, 0
    %v1022 = vsel %vm72, %v1019, 0
    %1024 = vmatprep.subr.mxu0 0.0
    %1025 = vmatpush1.xpose.msra.mxu0 0.0
    %1026 = vmatprep.subr.mxu0 0.0
    %1027 = vmatpush1.xpose.msra.mxu0 0.0
    %1028 = vmatprep.subr.mxu0 0.0
    %1029 = vmatpush1.xpose.msra.mxu0 0.0
    %1030 = vmatprep.subr.mxu0 0.0
    %1031 = vmatpush1.xpose.msra.mxu0 0.0
    %1032 = vmatprep.subr.mxu0 0.0
    %1033 = vmatpush1.xpose.msra.mxu0 0.0
    %1034 = vmatprep.subr.mxu0 0.0
    %1035 = vmatpush1.xpose.msra.mxu0 0.0
    %1036 = vmatprep.subr.mxu0 0.0
    %1037 = vmatpush1.xpose.msra.mxu0 0.0
    %1038 = vmatprep.subr.mxu0 0.0
    %1039 = vmatpush1.xpose.msra.mxu0 0.0
    %1040 = vmatprep.subr.mxu0 0.0
    %1041 = vmatpush1.xpose.msra.mxu0 0.0
    %1042 = vmatprep.subr.mxu0 0.0
    %1043 = vmatpush1.xpose.msra.mxu0 0.0
    %1044 = vmatprep.subr.mxu0 0.0
    %1045 = vmatpush1.xpose.msra.mxu0 0.0
    %1046 = vmatprep.subr.mxu0 0.0
    %1047 = vmatpush1.xpose.msra.mxu0 0.0
    %1048 = vmatprep.subr.mxu0 0.0
    %1049 = vmatpush1.xpose.msra.mxu0 0.0
    %1050 = vmatprep.subr.mxu0 0.0
    %1051 = vmatpush1.xpose.msra.mxu0 0.0
    %1052 = vmatprep.subr.mxu0 0.0
    %1053 = vmatpush1.xpose.msra.mxu0 0.0
    %1054 = vmatprep.subr.mxu0 0.0
    %1055 = vmatpush1.xpose.msra.mxu0 %v1022
    %1056 = vmatprep.subr.mxu0 0.0
    %1057 = vmatpush2.xpose.msra.mxu0 0.0
    %1058 = vmatprep.subr.mxu0 0.0
    %1059 = vmatpush2.xpose.msra.mxu0 0.0
    %1060 = vmatprep.subr.mxu0 0.0
    %1061 = vmatpush2.xpose.msra.mxu0 0.0
    %1062 = vmatprep.subr.mxu0 0.0
    %1063 = vmatpush2.xpose.msra.mxu0 0.0
    %1064 = vmatprep.subr.mxu0 0.0
    %1065 = vmatpush2.xpose.msra.mxu0 0.0
    %1066 = vmatprep.subr.mxu0 0.0
    %1067 = vmatpush2.xpose.msra.mxu0 0.0
    %1068 = vmatprep.subr.mxu0 0.0
    %1069 = vmatpush2.xpose.msra.mxu0 0.0
    %1070 = vmatprep.subr.mxu0 0.0
    %1071 = vmatpush2.xpose.msra.mxu0 0.0
    %1072 = vmatprep.subr.mxu0 0.0
    %1073 = vmatpush2.xpose.msra.mxu0 0.0
    %1074 = vmatprep.subr.mxu0 0.0
    %1075 = vmatpush2.xpose.msra.mxu0 0.0
    %1076 = vmatprep.subr.mxu0 0.0
    %1077 = vmatpush2.xpose.msra.mxu0 0.0
    %1078 = vmatprep.subr.mxu0 0.0
    %1079 = vmatpush2.xpose.msra.mxu0 0.0
    %1080 = vmatprep.subr.mxu0 0.0
    %1081 = vmatpush2.xpose.msra.mxu0 0.0
    %1082 = vmatprep.subr.mxu0 0.0
    %1083 = vmatpush2.xpose.msra.mxu0 0.0
    %1084 = vmatprep.subr.mxu0 0.0
    %1085 = vmatpush2.xpose.msra.mxu0 0.0
    %1086 = vmatprep.subr.mxu0 0.0
    %1087 = vmatpush2.xpose.msra.mxu0 0.0
    %1088 = vmatprep.mubr.f32.mxu0 0.0
    %1089 = vmatmul.mubr.f32.gmra.mxu0 %v1020
    %v1090 = vpop.f32.mrf.mxu0
    %v1091 = vadd.f32 0.0, %v1090
    %v1092 = vpop.f32.mrf.mxu0
    %1093 = vdwg.mxu0
    %1094 = vrot.lane.b32.xlu0 %v271, 112
    %v1095 = vpop.permute.xlu0 %1094
    %1096 = vrot.lane.b32.xlu0 %v271, 80
    %v1097 = vpop.permute.xlu0 %1096
    %v1098 = vsel %vm72, %v1095, 0
    %v1100 = vsel %vm72, %v1097, 0
    %1102 = vmatprep.subr.mxu0 0.0
    %1103 = vmatpush1.xpose.msra.mxu0 0.0
    %1104 = vmatprep.subr.mxu0 0.0
    %1105 = vmatpush1.xpose.msra.mxu0 0.0
    %1106 = vmatprep.subr.mxu0 0.0
    %1107 = vmatpush1.xpose.msra.mxu0 0.0
    %1108 = vmatprep.subr.mxu0 0.0
    %1109 = vmatpush1.xpose.msra.mxu0 0.0
    %1110 = vmatprep.subr.mxu0 0.0
    %1111 = vmatpush1.xpose.msra.mxu0 0.0
    %1112 = vmatprep.subr.mxu0 0.0
    %1113 = vmatpush1.xpose.msra.mxu0 0.0
    %1114 = vmatprep.subr.mxu0 0.0
    %1115 = vmatpush1.xpose.msra.mxu0 0.0
    %1116 = vmatprep.subr.mxu0 0.0
    %1117 = vmatpush1.xpose.msra.mxu0 0.0
    %1118 = vmatprep.subr.mxu0 0.0
    %1119 = vmatpush1.xpose.msra.mxu0 0.0
    %1120 = vmatprep.subr.mxu0 0.0
    %1121 = vmatpush1.xpose.msra.mxu0 0.0
    %1122 = vmatprep.subr.mxu0 0.0
    %1123 = vmatpush1.xpose.msra.mxu0 0.0
    %1124 = vmatprep.subr.mxu0 0.0
    %1125 = vmatpush1.xpose.msra.mxu0 0.0
    %1126 = vmatprep.subr.mxu0 0.0
    %1127 = vmatpush1.xpose.msra.mxu0 0.0
    %1128 = vmatprep.subr.mxu0 0.0
    %1129 = vmatpush1.xpose.msra.mxu0 0.0
    %1130 = vmatprep.subr.mxu0 0.0
    %1131 = vmatpush1.xpose.msra.mxu0 0.0
    %1132 = vmatprep.subr.mxu0 0.0
    %1133 = vmatpush1.xpose.msra.mxu0 %v1100
    %1134 = vmatprep.subr.mxu0 0.0
    %1135 = vmatpush2.xpose.msra.mxu0 0.0
    %1136 = vmatprep.subr.mxu0 0.0
    %1137 = vmatpush2.xpose.msra.mxu0 0.0
    %1138 = vmatprep.subr.mxu0 0.0
    %1139 = vmatpush2.xpose.msra.mxu0 0.0
    %1140 = vmatprep.subr.mxu0 0.0
    %1141 = vmatpush2.xpose.msra.mxu0 0.0
    %1142 = vmatprep.subr.mxu0 0.0
    %1143 = vmatpush2.xpose.msra.mxu0 0.0
    %1144 = vmatprep.subr.mxu0 0.0
    %1145 = vmatpush2.xpose.msra.mxu0 0.0
    %1146 = vmatprep.subr.mxu0 0.0
    %1147 = vmatpush2.xpose.msra.mxu0 0.0
    %1148 = vmatprep.subr.mxu0 0.0
    %1149 = vmatpush2.xpose.msra.mxu0 0.0
    %1150 = vmatprep.subr.mxu0 0.0
    %1151 = vmatpush2.xpose.msra.mxu0 0.0
    %1152 = vmatprep.subr.mxu0 0.0
    %1153 = vmatpush2.xpose.msra.mxu0 0.0
    %1154 = vmatprep.subr.mxu0 0.0
    %1155 = vmatpush2.xpose.msra.mxu0 0.0
    %1156 = vmatprep.subr.mxu0 0.0
    %1157 = vmatpush2.xpose.msra.mxu0 0.0
    %1158 = vmatprep.subr.mxu0 0.0
    %1159 = vmatpush2.xpose.msra.mxu0 0.0
    %1160 = vmatprep.subr.mxu0 0.0
    %1161 = vmatpush2.xpose.msra.mxu0 0.0
    %1162 = vmatprep.subr.mxu0 0.0
    %1163 = vmatpush2.xpose.msra.mxu0 0.0
    %1164 = vmatprep.subr.mxu0 0.0
    %1165 = vmatpush2.xpose.msra.mxu0 0.0
    %1166 = vmatprep.mubr.f32.mxu0 0.0
    %1167 = vmatmul.mubr.f32.gmra.mxu0 %v1098
    %v1168 = vpop.f32.mrf.mxu0
    %v1169 = vadd.f32 0.0, %v1168
    %v1170 = vpop.f32.mrf.mxu0
    %1171 = vdwg.mxu0
    %1172 = vrot.lane.b32.xlu0 %v276, 112
    %v1173 = vpop.permute.xlu0 %1172
    %1174 = vrot.lane.b32.xlu0 %v276, 80
    %v1175 = vpop.permute.xlu0 %1174
    %v1176 = vsel %vm72, %v1173, 0
    %v1178 = vsel %vm72, %v1175, 0
    %1180 = vmatprep.subr.mxu0 0.0
    %1181 = vmatpush1.xpose.msra.mxu0 0.0
    %1182 = vmatprep.subr.mxu0 0.0
    %1183 = vmatpush1.xpose.msra.mxu0 0.0
    %1184 = vmatprep.subr.mxu0 0.0
    %1185 = vmatpush1.xpose.msra.mxu0 0.0
    %1186 = vmatprep.subr.mxu0 0.0
    %1187 = vmatpush1.xpose.msra.mxu0 0.0
    %1188 = vmatprep.subr.mxu0 0.0
    %1189 = vmatpush1.xpose.msra.mxu0 0.0
    %1190 = vmatprep.subr.mxu0 0.0
    %1191 = vmatpush1.xpose.msra.mxu0 0.0
    %1192 = vmatprep.subr.mxu0 0.0
    %1193 = vmatpush1.xpose.msra.mxu0 0.0
    %1194 = vmatprep.subr.mxu0 0.0
    %1195 = vmatpush1.xpose.msra.mxu0 0.0
    %1196 = vmatprep.subr.mxu0 0.0
    %1197 = vmatpush1.xpose.msra.mxu0 0.0
    %1198 = vmatprep.subr.mxu0 0.0
    %1199 = vmatpush1.xpose.msra.mxu0 0.0
    %1200 = vmatprep.subr.mxu0 0.0
    %1201 = vmatpush1.xpose.msra.mxu0 0.0
    %1202 = vmatprep.subr.mxu0 0.0
    %1203 = vmatpush1.xpose.msra.mxu0 0.0
    %1204 = vmatprep.subr.mxu0 0.0
    %1205 = vmatpush1.xpose.msra.mxu0 0.0
    %1206 = vmatprep.subr.mxu0 0.0
    %1207 = vmatpush1.xpose.msra.mxu0 0.0
    %1208 = vmatprep.subr.mxu0 0.0
    %1209 = vmatpush1.xpose.msra.mxu0 0.0
    %1210 = vmatprep.subr.mxu0 0.0
    %1211 = vmatpush1.xpose.msra.mxu0 %v1178
    %1212 = vmatprep.subr.mxu0 0.0
    %1213 = vmatpush2.xpose.msra.mxu0 0.0
    %1214 = vmatprep.subr.mxu0 0.0
    %1215 = vmatpush2.xpose.msra.mxu0 0.0
    %1216 = vmatprep.subr.mxu0 0.0
    %1217 = vmatpush2.xpose.msra.mxu0 0.0
    %1218 = vmatprep.subr.mxu0 0.0
    %1219 = vmatpush2.xpose.msra.mxu0 0.0
    %1220 = vmatprep.subr.mxu0 0.0
    %1221 = vmatpush2.xpose.msra.mxu0 0.0
    %1222 = vmatprep.subr.mxu0 0.0
    %1223 = vmatpush2.xpose.msra.mxu0 0.0
    %1224 = vmatprep.subr.mxu0 0.0
    %1225 = vmatpush2.xpose.msra.mxu0 0.0
    %1226 = vmatprep.subr.mxu0 0.0
    %1227 = vmatpush2.xpose.msra.mxu0 0.0
    %1228 = vmatprep.subr.mxu0 0.0
    %1229 = vmatpush2.xpose.msra.mxu0 0.0
    %1230 = vmatprep.subr.mxu0 0.0
    %1231 = vmatpush2.xpose.msra.mxu0 0.0
    %1232 = vmatprep.subr.mxu0 0.0
    %1233 = vmatpush2.xpose.msra.mxu0 0.0
    %1234 = vmatprep.subr.mxu0 0.0
    %1235 = vmatpush2.xpose.msra.mxu0 0.0
    %1236 = vmatprep.subr.mxu0 0.0
    %1237 = vmatpush2.xpose.msra.mxu0 0.0
    %1238 = vmatprep.subr.mxu0 0.0
    %1239 = vmatpush2.xpose.msra.mxu0 0.0
    %1240 = vmatprep.subr.mxu0 0.0
    %1241 = vmatpush2.xpose.msra.mxu0 0.0
    %1242 = vmatprep.subr.mxu0 0.0
    %1243 = vmatpush2.xpose.msra.mxu0 0.0
    %1244 = vmatprep.mubr.f32.mxu0 0.0
    %1245 = vmatmul.mubr.f32.gmra.mxu0 %v1176
    %v1246 = vpop.f32.mrf.mxu0
    %v1247 = vadd.f32 0.0, %v1246
    %v1248 = vpop.f32.mrf.mxu0
    %1249 = vdwg.mxu0
    %v1250 = vsel %vm587, %v1013, -inf
    %1251 = vmax.xlane.f32.xlu0 %v1250
    %v1252 = vpop.xlane.xlu0 %1251
    %v1253 = vsel %vm587, %v1091, -inf
    %1254 = vmax.xlane.f32.xlu0 %v1253
    %v1255 = vpop.xlane.xlu0 %1254
    %v1256 = vsel %vm587, %v1169, -inf
    %1257 = vmax.xlane.f32.xlu0 %v1256
    %v1258 = vpop.xlane.xlu0 %1257
    %v1259 = vsel %vm587, %v1247, -inf
    %1260 = vmax.xlane.f32.xlu0 %v1259
    %v1261 = vpop.xlane.xlu0 %1260
    %v1262 = vsub.f32 %v1013, %v1252
    %v1263 = vsub.f32 %v1091, %v1255
    %v1264 = vsub.f32 %v1169, %v1258
    %v1265 = vsub.f32 %v1247, %v1261
    %v1266 = vmul.f32 %v1262, 1.442695
    %v1267 = vpow.pop %v1266
    %v1268 = vmul.f32 %v1263, 1.442695
    %v1269 = vpow.pop %v1268
    %v1270 = vmul.f32 %v1264, 1.442695
    %v1271 = vpow.pop %v1270
    %v1272 = vmul.f32 %v1265, 1.442695
    %v1273 = vpow.pop %v1272
    %v1274 = vsel %vm587, %v1267, 0.0
    %1275 = vadd.xlane.f32.xlu0 %v1274
    %v1276 = vpop.xlane.xlu0 %1275
    %v1277 = vsel %vm587, %v1269, 0.0
    %1278 = vadd.xlane.f32.xlu0 %v1277
    %v1279 = vpop.xlane.xlu0 %1278
    %v1280 = vsel %vm587, %v1271, 0.0
    %1281 = vadd.xlane.f32.xlu0 %v1280
    %v1282 = vpop.xlane.xlu0 %1281
    %v1283 = vsel %vm587, %v1273, 0.0
    %1284 = vadd.xlane.f32.xlu0 %v1283
    %v1285 = vpop.xlane.xlu0 %1284
    %v1286 = vrcp.pop %v1276
    %v1287 = vrcp.pop %v1279
    %v1288 = vrcp.pop %v1282
    %v1289 = vrcp.pop %v1285
    %v1290 = vmul.f32 %v1267, %v1286
    %v1291 = vmul.f32 %v1269, %v1287
    %v1292 = vmul.f32 %v1271, %v1288
    %v1293 = vmul.f32 %v1273, %v1289
    %1294 = vrot.lane.b32.xlu0 %v261, 48
    %v1295 = vpop.permute.xlu0 %1294
    %v1298 = vsel %vm587, %v1290, 0
    %1300 = vmatprep.subr.mxu0 0.0
    %1301 = vmatpush1.msra.mxu0 0.0
    %1302 = vmatprep.subr.mxu0 0.0
    %1303 = vmatpush1.msra.mxu0 0.0
    %1304 = vmatprep.subr.mxu0 0.0
    %1305 = vmatpush1.msra.mxu0 0.0
    %1306 = vmatprep.subr.mxu0 0.0
    %1307 = vmatpush1.msra.mxu0 0.0
    %1308 = vmatprep.subr.mxu0 0.0
    %1309 = vmatpush1.msra.mxu0 0.0
    %1310 = vmatprep.subr.mxu0 0.0
    %1311 = vmatpush1.msra.mxu0 0.0
    %1312 = vmatprep.subr.mxu0 0.0
    %1313 = vmatpush1.msra.mxu0 0.0
    %1314 = vmatprep.subr.mxu0 0.0
    %1315 = vmatpush1.msra.mxu0 0.0
    %1316 = vmatprep.subr.mxu0 0.0
    %1317 = vmatpush1.msra.mxu0 0.0
    %1318 = vmatprep.subr.mxu0 0.0
    %1319 = vmatpush1.msra.mxu0 0.0
    %1320 = vmatprep.subr.mxu0 0.0
    %1321 = vmatpush1.msra.mxu0 0.0
    %1322 = vmatprep.subr.mxu0 0.0
    %1323 = vmatpush1.msra.mxu0 0.0
    %1324 = vmatprep.subr.mxu0 0.0
    %1325 = vmatpush1.msra.mxu0 0.0
    %1326 = vmatprep.subr.mxu0 0.0
    %1327 = vmatpush1.msra.mxu0 0.0
    %1328 = vmatprep.subr.mxu0 0.0
    %1329 = vmatpush1.msra.mxu0 0.0
    %1330 = vmatprep.subr.mxu0 0.0
    %1331 = vmatpush1.msra.mxu0 %v1295
    %1332 = vmatprep.subr.mxu0 0.0
    %1333 = vmatpush2.msra.mxu0 0.0
    %1334 = vmatprep.subr.mxu0 0.0
    %1335 = vmatpush2.msra.mxu0 0.0
    %1336 = vmatprep.subr.mxu0 0.0
    %1337 = vmatpush2.msra.mxu0 0.0
    %1338 = vmatprep.subr.mxu0 0.0
    %1339 = vmatpush2.msra.mxu0 0.0
    %1340 = vmatprep.subr.mxu0 0.0
    %1341 = vmatpush2.msra.mxu0 0.0
    %1342 = vmatprep.subr.mxu0 0.0
    %1343 = vmatpush2.msra.mxu0 0.0
    %1344 = vmatprep.subr.mxu0 0.0
    %1345 = vmatpush2.msra.mxu0 0.0
    %1346 = vmatprep.subr.mxu0 0.0
    %1347 = vmatpush2.msra.mxu0 0.0
    %1348 = vmatprep.subr.mxu0 0.0
    %1349 = vmatpush2.msra.mxu0 0.0
    %1350 = vmatprep.subr.mxu0 0.0
    %1351 = vmatpush2.msra.mxu0 0.0
    %1352 = vmatprep.subr.mxu0 0.0
    %1353 = vmatpush2.msra.mxu0 0.0
    %1354 = vmatprep.subr.mxu0 0.0
    %1355 = vmatpush2.msra.mxu0 0.0
    %1356 = vmatprep.subr.mxu0 0.0
    %1357 = vmatpush2.msra.mxu0 0.0
    %1358 = vmatprep.subr.mxu0 0.0
    %1359 = vmatpush2.msra.mxu0 0.0
    %1360 = vmatprep.subr.mxu0 0.0
    %1361 = vmatpush2.msra.mxu0 0.0
    %1362 = vmatprep.subr.mxu0 0.0
    %1363 = vmatpush2.msra.mxu0 0.0
    %1364 = vmatprep.mubr.f32.mxu0 0.0
    %1365 = vmatmul.mubr.f32.gmra.mxu0 %v1298
    %v1366 = vpop.f32.mrf.mxu0
    %v1367 = vadd.f32 0.0, %v1366
    %v1368 = vpop.f32.mrf.mxu0
    %1369 = vdwg.mxu0
    %1370 = vrot.lane.b32.xlu0 %v266, 48
    %v1371 = vpop.permute.xlu0 %1370
    %v1374 = vsel %vm587, %v1291, 0
    %1376 = vmatprep.subr.mxu0 0.0
    %1377 = vmatpush1.msra.mxu0 0.0
    %1378 = vmatprep.subr.mxu0 0.0
    %1379 = vmatpush1.msra.mxu0 0.0
    %1380 = vmatprep.subr.mxu0 0.0
    %1381 = vmatpush1.msra.mxu0 0.0
    %1382 = vmatprep.subr.mxu0 0.0
    %1383 = vmatpush1.msra.mxu0 0.0
    %1384 = vmatprep.subr.mxu0 0.0
    %1385 = vmatpush1.msra.mxu0 0.0
    %1386 = vmatprep.subr.mxu0 0.0
    %1387 = vmatpush1.msra.mxu0 0.0
    %1388 = vmatprep.subr.mxu0 0.0
    %1389 = vmatpush1.msra.mxu0 0.0
    %1390 = vmatprep.subr.mxu0 0.0
    %1391 = vmatpush1.msra.mxu0 0.0
    %1392 = vmatprep.subr.mxu0 0.0
    %1393 = vmatpush1.msra.mxu0 0.0
    %1394 = vmatprep.subr.mxu0 0.0
    %1395 = vmatpush1.msra.mxu0 0.0
    %1396 = vmatprep.subr.mxu0 0.0
    %1397 = vmatpush1.msra.mxu0 0.0
    %1398 = vmatprep.subr.mxu0 0.0
    %1399 = vmatpush1.msra.mxu0 0.0
    %1400 = vmatprep.subr.mxu0 0.0
    %1401 = vmatpush1.msra.mxu0 0.0
    %1402 = vmatprep.subr.mxu0 0.0
    %1403 = vmatpush1.msra.mxu0 0.0
    %1404 = vmatprep.subr.mxu0 0.0
    %1405 = vmatpush1.msra.mxu0 0.0
    %1406 = vmatprep.subr.mxu0 0.0
    %1407 = vmatpush1.msra.mxu0 %v1371
    %1408 = vmatprep.subr.mxu0 0.0
    %1409 = vmatpush2.msra.mxu0 0.0
    %1410 = vmatprep.subr.mxu0 0.0
    %1411 = vmatpush2.msra.mxu0 0.0
    %1412 = vmatprep.subr.mxu0 0.0
    %1413 = vmatpush2.msra.mxu0 0.0
    %1414 = vmatprep.subr.mxu0 0.0
    %1415 = vmatpush2.msra.mxu0 0.0
    %1416 = vmatprep.subr.mxu0 0.0
    %1417 = vmatpush2.msra.mxu0 0.0
    %1418 = vmatprep.subr.mxu0 0.0
    %1419 = vmatpush2.msra.mxu0 0.0
    %1420 = vmatprep.subr.mxu0 0.0
    %1421 = vmatpush2.msra.mxu0 0.0
    %1422 = vmatprep.subr.mxu0 0.0
    %1423 = vmatpush2.msra.mxu0 0.0
    %1424 = vmatprep.subr.mxu0 0.0
    %1425 = vmatpush2.msra.mxu0 0.0
    %1426 = vmatprep.subr.mxu0 0.0
    %1427 = vmatpush2.msra.mxu0 0.0
    %1428 = vmatprep.subr.mxu0 0.0
    %1429 = vmatpush2.msra.mxu0 0.0
    %1430 = vmatprep.subr.mxu0 0.0
    %1431 = vmatpush2.msra.mxu0 0.0
    %1432 = vmatprep.subr.mxu0 0.0
    %1433 = vmatpush2.msra.mxu0 0.0
    %1434 = vmatprep.subr.mxu0 0.0
    %1435 = vmatpush2.msra.mxu0 0.0
    %1436 = vmatprep.subr.mxu0 0.0
    %1437 = vmatpush2.msra.mxu0 0.0
    %1438 = vmatprep.subr.mxu0 0.0
    %1439 = vmatpush2.msra.mxu0 0.0
    %1440 = vmatprep.mubr.f32.mxu0 0.0
    %1441 = vmatmul.mubr.f32.gmra.mxu0 %v1374
    %v1442 = vpop.f32.mrf.mxu0
    %v1443 = vadd.f32 0.0, %v1442
    %v1444 = vpop.f32.mrf.mxu0
    %1445 = vdwg.mxu0
    %1446 = vrot.lane.b32.xlu0 %v271, 48
    %v1447 = vpop.permute.xlu0 %1446
    %v1450 = vsel %vm587, %v1292, 0
    %1452 = vmatprep.subr.mxu0 0.0
    %1453 = vmatpush1.msra.mxu0 0.0
    %1454 = vmatprep.subr.mxu0 0.0
    %1455 = vmatpush1.msra.mxu0 0.0
    %1456 = vmatprep.subr.mxu0 0.0
    %1457 = vmatpush1.msra.mxu0 0.0
    %1458 = vmatprep.subr.mxu0 0.0
    %1459 = vmatpush1.msra.mxu0 0.0
    %1460 = vmatprep.subr.mxu0 0.0
    %1461 = vmatpush1.msra.mxu0 0.0
    %1462 = vmatprep.subr.mxu0 0.0
    %1463 = vmatpush1.msra.mxu0 0.0
    %1464 = vmatprep.subr.mxu0 0.0
    %1465 = vmatpush1.msra.mxu0 0.0
    %1466 = vmatprep.subr.mxu0 0.0
    %1467 = vmatpush1.msra.mxu0 0.0
    %1468 = vmatprep.subr.mxu0 0.0
    %1469 = vmatpush1.msra.mxu0 0.0
    %1470 = vmatprep.subr.mxu0 0.0
    %1471 = vmatpush1.msra.mxu0 0.0
    %1472 = vmatprep.subr.mxu0 0.0
    %1473 = vmatpush1.msra.mxu0 0.0
    %1474 = vmatprep.subr.mxu0 0.0
    %1475 = vmatpush1.msra.mxu0 0.0
    %1476 = vmatprep.subr.mxu0 0.0
    %1477 = vmatpush1.msra.mxu0 0.0
    %1478 = vmatprep.subr.mxu0 0.0
    %1479 = vmatpush1.msra.mxu0 0.0
    %1480 = vmatprep.subr.mxu0 0.0
    %1481 = vmatpush1.msra.mxu0 0.0
    %1482 = vmatprep.subr.mxu0 0.0
    %1483 = vmatpush1.msra.mxu0 %v1447
    %1484 = vmatprep.subr.mxu0 0.0
    %1485 = vmatpush2.msra.mxu0 0.0
    %1486 = vmatprep.subr.mxu0 0.0
    %1487 = vmatpush2.msra.mxu0 0.0
    %1488 = vmatprep.subr.mxu0 0.0
    %1489 = vmatpush2.msra.mxu0 0.0
    %1490 = vmatprep.subr.mxu0 0.0
    %1491 = vmatpush2.msra.mxu0 0.0
    %1492 = vmatprep.subr.mxu0 0.0
    %1493 = vmatpush2.msra.mxu0 0.0
    %1494 = vmatprep.subr.mxu0 0.0
    %1495 = vmatpush2.msra.mxu0 0.0
    %1496 = vmatprep.subr.mxu0 0.0
    %1497 = vmatpush2.msra.mxu0 0.0
    %1498 = vmatprep.subr.mxu0 0.0
    %1499 = vmatpush2.msra.mxu0 0.0
    %1500 = vmatprep.subr.mxu0 0.0
    %1501 = vmatpush2.msra.mxu0 0.0
    %1502 = vmatprep.subr.mxu0 0.0
    %1503 = vmatpush2.msra.mxu0 0.0
    %1504 = vmatprep.subr.mxu0 0.0
    %1505 = vmatpush2.msra.mxu0 0.0
    %1506 = vmatprep.subr.mxu0 0.0
    %1507 = vmatpush2.msra.mxu0 0.0
    %1508 = vmatprep.subr.mxu0 0.0
    %1509 = vmatpush2.msra.mxu0 0.0
    %1510 = vmatprep.subr.mxu0 0.0
    %1511 = vmatpush2.msra.mxu0 0.0
    %1512 = vmatprep.subr.mxu0 0.0
    %1513 = vmatpush2.msra.mxu0 0.0
    %1514 = vmatprep.subr.mxu0 0.0
    %1515 = vmatpush2.msra.mxu0 0.0
    %1516 = vmatprep.mubr.f32.mxu0 0.0
    %1517 = vmatmul.mubr.f32.gmra.mxu0 %v1450
    %v1518 = vpop.f32.mrf.mxu0
    %v1519 = vadd.f32 0.0, %v1518
    %v1520 = vpop.f32.mrf.mxu0
    %1521 = vdwg.mxu0
    %1522 = vrot.lane.b32.xlu0 %v276, 48
    %v1523 = vpop.permute.xlu0 %1522
    %v1526 = vsel %vm587, %v1293, 0
    %1528 = vmatprep.subr.mxu0 0.0
    %1529 = vmatpush1.msra.mxu0 0.0
    %1530 = vmatprep.subr.mxu0 0.0
    %1531 = vmatpush1.msra.mxu0 0.0
    %1532 = vmatprep.subr.mxu0 0.0
    %1533 = vmatpush1.msra.mxu0 0.0
    %1534 = vmatprep.subr.mxu0 0.0
    %1535 = vmatpush1.msra.mxu0 0.0
    %1536 = vmatprep.subr.mxu0 0.0
    %1537 = vmatpush1.msra.mxu0 0.0
    %1538 = vmatprep.subr.mxu0 0.0
    %1539 = vmatpush1.msra.mxu0 0.0
    %1540 = vmatprep.subr.mxu0 0.0
    %1541 = vmatpush1.msra.mxu0 0.0
    %1542 = vmatprep.subr.mxu0 0.0
    %1543 = vmatpush1.msra.mxu0 0.0
    %1544 = vmatprep.subr.mxu0 0.0
    %1545 = vmatpush1.msra.mxu0 0.0
    %1546 = vmatprep.subr.mxu0 0.0
    %1547 = vmatpush1.msra.mxu0 0.0
    %1548 = vmatprep.subr.mxu0 0.0
    %1549 = vmatpush1.msra.mxu0 0.0
    %1550 = vmatprep.subr.mxu0 0.0
    %1551 = vmatpush1.msra.mxu0 0.0
    %1552 = vmatprep.subr.mxu0 0.0
    %1553 = vmatpush1.msra.mxu0 0.0
    %1554 = vmatprep.subr.mxu0 0.0
    %1555 = vmatpush1.msra.mxu0 0.0
    %1556 = vmatprep.subr.mxu0 0.0
    %1557 = vmatpush1.msra.mxu0 0.0
    %1558 = vmatprep.subr.mxu0 0.0
    %1559 = vmatpush1.msra.mxu0 %v1523
    %1560 = vmatprep.subr.mxu0 0.0
    %1561 = vmatpush2.msra.mxu0 0.0
    %1562 = vmatprep.subr.mxu0 0.0
    %1563 = vmatpush2.msra.mxu0 0.0
    %1564 = vmatprep.subr.mxu0 0.0
    %1565 = vmatpush2.msra.mxu0 0.0
    %1566 = vmatprep.subr.mxu0 0.0
    %1567 = vmatpush2.msra.mxu0 0.0
    %1568 = vmatprep.subr.mxu0 0.0
    %1569 = vmatpush2.msra.mxu0 0.0
    %1570 = vmatprep.subr.mxu0 0.0
    %1571 = vmatpush2.msra.mxu0 0.0
    %1572 = vmatprep.subr.mxu0 0.0
    %1573 = vmatpush2.msra.mxu0 0.0
    %1574 = vmatprep.subr.mxu0 0.0
    %1575 = vmatpush2.msra.mxu0 0.0
    %1576 = vmatprep.subr.mxu0 0.0
    %1577 = vmatpush2.msra.mxu0 0.0
    %1578 = vmatprep.subr.mxu0 0.0
    %1579 = vmatpush2.msra.mxu0 0.0
    %1580 = vmatprep.subr.mxu0 0.0
    %1581 = vmatpush2.msra.mxu0 0.0
    %1582 = vmatprep.subr.mxu0 0.0
    %1583 = vmatpush2.msra.mxu0 0.0
    %1584 = vmatprep.subr.mxu0 0.0
    %1585 = vmatpush2.msra.mxu0 0.0
    %1586 = vmatprep.subr.mxu0 0.0
    %1587 = vmatpush2.msra.mxu0 0.0
    %1588 = vmatprep.subr.mxu0 0.0
    %1589 = vmatpush2.msra.mxu0 0.0
    %1590 = vmatprep.subr.mxu0 0.0
    %1591 = vmatpush2.msra.mxu0 0.0
    %1592 = vmatprep.mubr.f32.mxu0 0.0
    %1593 = vmatmul.mubr.f32.gmra.mxu0 %v1526
    %v1594 = vpop.f32.mrf.mxu0
    %v1595 = vadd.f32 0.0, %v1594
    %v1596 = vpop.f32.mrf.mxu0
    %1597 = vdwg.mxu0
    %s1598 = scalar_lea.vmem %s6, 16
    %v1599 = vld [vmem:[%s1598] sm:$0xff]
    %v1600 = vld [vmem:[%s1598 + $0x8] sm:$0xff]
    %v1602 = vsel %vm72, %v1367, 0
    %v1605 = vsel %vm72, %v1443, 0
    %v1608 = vsel %vm72, %v1519, 0
    %v1611 = vsel %vm72, %v1595, 0
    %1613 = vmatprep.subr.mxu0 0.0
    %1614 = vmatpush1.msra.mxu0 0.0
    %1615 = vmatprep.subr.mxu0 0.0
    %1616 = vmatpush1.msra.mxu0 0.0
    %1617 = vmatprep.subr.mxu0 0.0
    %1618 = vmatpush1.msra.mxu0 0.0
    %1619 = vmatprep.subr.mxu0 0.0
    %1620 = vmatpush1.msra.mxu0 0.0
    %1621 = vmatprep.subr.mxu0 0.0
    %1622 = vmatpush1.msra.mxu0 0.0
    %1623 = vmatprep.subr.mxu0 0.0
    %1624 = vmatpush1.msra.mxu0 0.0
    %1625 = vmatprep.subr.mxu0 0.0
    %1626 = vmatpush1.msra.mxu0 0.0
    %1627 = vmatprep.subr.mxu0 0.0
    %1628 = vmatpush1.msra.mxu0 0.0
    %1629 = vmatprep.subr.mxu0 0.0
    %1630 = vmatpush1.msra.mxu0 0.0
    %1631 = vmatprep.subr.mxu0 0.0
    %1632 = vmatpush1.msra.mxu0 0.0
    %1633 = vmatprep.subr.mxu0 0.0
    %1634 = vmatpush1.msra.mxu0 0.0
    %1635 = vmatprep.subr.mxu0 0.0
    %1636 = vmatpush1.msra.mxu0 0.0
    %1637 = vmatprep.subr.mxu0 0.0
    %1638 = vmatpush1.msra.mxu0 0.0
    %1639 = vmatprep.subr.mxu0 0.0
    %1640 = vmatpush1.msra.mxu0 0.0
    %1641 = vmatprep.subr.mxu0 0.0
    %1642 = vmatpush1.msra.mxu0 %v1600
    %1643 = vmatprep.subr.mxu0 0.0
    %1644 = vmatpush1.msra.mxu0 %v1599
    %1645 = vmatprep.subr.mxu0 0.0
    %1646 = vmatpush2.msra.mxu0 0.0
    %1647 = vmatprep.subr.mxu0 0.0
    %1648 = vmatpush2.msra.mxu0 0.0
    %1649 = vmatprep.subr.mxu0 0.0
    %1650 = vmatpush2.msra.mxu0 0.0
    %1651 = vmatprep.subr.mxu0 0.0
    %1652 = vmatpush2.msra.mxu0 0.0
    %1653 = vmatprep.subr.mxu0 0.0
    %1654 = vmatpush2.msra.mxu0 0.0
    %1655 = vmatprep.subr.mxu0 0.0
    %1656 = vmatpush2.msra.mxu0 0.0
    %1657 = vmatprep.subr.mxu0 0.0
    %1658 = vmatpush2.msra.mxu0 0.0
    %1659 = vmatprep.subr.mxu0 0.0
    %1660 = vmatpush2.msra.mxu0 0.0
    %1661 = vmatprep.subr.mxu0 0.0
    %1662 = vmatpush2.msra.mxu0 0.0
    %1663 = vmatprep.subr.mxu0 0.0
    %1664 = vmatpush2.msra.mxu0 0.0
    %1665 = vmatprep.subr.mxu0 0.0
    %1666 = vmatpush2.msra.mxu0 0.0
    %1667 = vmatprep.subr.mxu0 0.0
    %1668 = vmatpush2.msra.mxu0 0.0
    %1669 = vmatprep.subr.mxu0 0.0
    %1670 = vmatpush2.msra.mxu0 0.0
    %1671 = vmatprep.subr.mxu0 0.0
    %1672 = vmatpush2.msra.mxu0 0.0
    %1673 = vmatprep.subr.mxu0 0.0
    %1674 = vmatpush2.msra.mxu0 0.0
    %1675 = vmatprep.subr.mxu0 0.0
    %1676 = vmatpush2.msra.mxu0 0.0
    %1677 = vmatprep.mubr.f32.mxu0 0.0
    %1678 = vmatmul.mubr.f32.gmra.mxu0 %v1602
    %v1679 = vpop.f32.mrf.mxu0
    %v1680 = vadd.f32 0.0, %v1679
    %v1681 = vpop.f32.mrf.mxu0
    %1682 = vmatprep.mubr.f32.mxu0 0.0
    %1683 = vmatmul.mubr.f32.gmra.mxu0 %v1605
    %v1684 = vpop.f32.mrf.mxu0
    %v1685 = vadd.f32 0.0, %v1684
    %v1686 = vpop.f32.mrf.mxu0
    %1687 = vmatprep.mubr.f32.mxu0 0.0
    %1688 = vmatmul.mubr.f32.gmra.mxu0 %v1608
    %v1689 = vpop.f32.mrf.mxu0
    %v1690 = vadd.f32 0.0, %v1689
    %v1691 = vpop.f32.mrf.mxu0
    %1692 = vmatprep.mubr.f32.mxu0 0.0
    %1693 = vmatmul.mubr.f32.gmra.mxu0 %v1611
    %v1694 = vpop.f32.mrf.mxu0
    %v1695 = vadd.f32 0.0, %v1694
    %v1696 = vpop.f32.mrf.mxu0
    %1697 = vdwg.mxu0
    %v1699 = vsel %vm72, %v705, 0
    %v1702 = vsel %vm72, %v781, 0
    %v1705 = vsel %vm72, %v857, 0
    %v1708 = vsel %vm72, %v933, 0
    %1710 = vmatprep.subr.mxu0 0.0
    %1711 = vmatpush1.msra.mxu0 0.0
    %1712 = vmatprep.subr.mxu0 0.0
    %1713 = vmatpush1.msra.mxu0 0.0
    %1714 = vmatprep.subr.mxu0 0.0
    %1715 = vmatpush1.msra.mxu0 0.0
    %1716 = vmatprep.subr.mxu0 0.0
    %1717 = vmatpush1.msra.mxu0 0.0
    %1718 = vmatprep.subr.mxu0 0.0
    %1719 = vmatpush1.msra.mxu0 0.0
    %1720 = vmatprep.subr.mxu0 0.0
    %1721 = vmatpush1.msra.mxu0 0.0
    %1722 = vmatprep.subr.mxu0 0.0
    %1723 = vmatpush1.msra.mxu0 0.0
    %1724 = vmatprep.subr.mxu0 0.0
    %1725 = vmatpush1.msra.mxu0 0.0
    %1726 = vmatprep.subr.mxu0 0.0
    %1727 = vmatpush1.msra.mxu0 0.0
    %1728 = vmatprep.subr.mxu0 0.0
    %1729 = vmatpush1.msra.mxu0 0.0
    %1730 = vmatprep.subr.mxu0 0.0
    %1731 = vmatpush1.msra.mxu0 0.0
    %1732 = vmatprep.subr.mxu0 0.0
    %1733 = vmatpush1.msra.mxu0 0.0
    %1734 = vmatprep.subr.mxu0 0.0
    %1735 = vmatpush1.msra.mxu0 0.0
    %1736 = vmatprep.subr.mxu0 0.0
    %1737 = vmatpush1.msra.mxu0 0.0
    %1738 = vmatprep.subr.mxu0 0.0
    %1739 = vmatpush1.msra.mxu0 %v937
    %1740 = vmatprep.subr.mxu0 0.0
    %1741 = vmatpush1.msra.mxu0 %v936
    %1742 = vmatprep.subr.mxu0 0.0
    %1743 = vmatpush2.msra.mxu0 0.0
    %1744 = vmatprep.subr.mxu0 0.0
    %1745 = vmatpush2.msra.mxu0 0.0
    %1746 = vmatprep.subr.mxu0 0.0
    %1747 = vmatpush2.msra.mxu0 0.0
    %1748 = vmatprep.subr.mxu0 0.0
    %1749 = vmatpush2.msra.mxu0 0.0
    %1750 = vmatprep.subr.mxu0 0.0
    %1751 = vmatpush2.msra.mxu0 0.0
    %1752 = vmatprep.subr.mxu0 0.0
    %1753 = vmatpush2.msra.mxu0 0.0
    %1754 = vmatprep.subr.mxu0 0.0
    %1755 = vmatpush2.msra.mxu0 0.0
    %1756 = vmatprep.subr.mxu0 0.0
    %1757 = vmatpush2.msra.mxu0 0.0
    %1758 = vmatprep.subr.mxu0 0.0
    %1759 = vmatpush2.msra.mxu0 0.0
    %1760 = vmatprep.subr.mxu0 0.0
    %1761 = vmatpush2.msra.mxu0 0.0
    %1762 = vmatprep.subr.mxu0 0.0
    %1763 = vmatpush2.msra.mxu0 0.0
    %1764 = vmatprep.subr.mxu0 0.0
    %1765 = vmatpush2.msra.mxu0 0.0
    %1766 = vmatprep.subr.mxu0 0.0
    %1767 = vmatpush2.msra.mxu0 0.0
    %1768 = vmatprep.subr.mxu0 0.0
    %1769 = vmatpush2.msra.mxu0 0.0
    %1770 = vmatprep.subr.mxu0 0.0
    %1771 = vmatpush2.msra.mxu0 0.0
    %1772 = vmatprep.subr.mxu0 0.0
    %1773 = vmatpush2.msra.mxu0 0.0
    %1774 = vmatprep.mubr.f32.mxu0 0.0
    %1775 = vmatmul.mubr.f32.gmra.mxu0 %v1699
    %v1776 = vpop.f32.mrf.mxu0
    %v1777 = vadd.f32 %v1680, %v1776
    %v1778 = vpop.f32.mrf.mxu0
    %1779 = vmatprep.mubr.f32.mxu0 0.0
    %1780 = vmatmul.mubr.f32.gmra.mxu0 %v1702
    %v1781 = vpop.f32.mrf.mxu0
    %v1782 = vadd.f32 %v1685, %v1781
    %v1783 = vpop.f32.mrf.mxu0
    %1784 = vmatprep.mubr.f32.mxu0 0.0
    %1785 = vmatmul.mubr.f32.gmra.mxu0 %v1705
    %v1786 = vpop.f32.mrf.mxu0
    %v1787 = vadd.f32 %v1690, %v1786
    %v1788 = vpop.f32.mrf.mxu0
    %1789 = vmatprep.mubr.f32.mxu0 0.0
    %1790 = vmatmul.mubr.f32.gmra.mxu0 %v1708
    %v1791 = vpop.f32.mrf.mxu0
    %v1792 = vadd.f32 %v1695, %v1791
    %v1793 = vpop.f32.mrf.mxu0
    %1794 = vdwg.mxu0
    %v1795 = vld [vmem:[%s7] sm:$0x1]
    %v1797 = vlaneseq
    %v1798 = vshrl.u32 %v1797, 7
    %v1799 = vsub.s32 0, %v1798
    %v1800 = vrot.slane %v1795, %v1799
    %v1802 = vadd.f32 %v1777, %v1800
    %v1803 = vadd.f32 %v1782, %v1800
    %v1804 = vadd.f32 %v1787, %v1800
    %v1805 = vadd.f32 %v1792, %v1800
    %s1806 = scalar_lea.vmem %s4, 32
    %v1807 = vld [vmem:[%s1806] sm:$0xff]
    %v1808 = vld [vmem:[%s1806 + $0x8] sm:$0xff]
    %v1809 = vld [vmem:[%s1806 + $0x10] sm:$0xff]
    %v1810 = vld [vmem:[%s1806 + $0x18] sm:$0xff]
    %s1811 = scalar_lea.vmem %s5, 1
    %v1812 = vld [vmem:[%s1811] sm:$0x1]
    %v1814 = vlaneseq
    %v1815 = vshrl.u32 %v1814, 7
    %v1816 = vsub.s32 0, %v1815
    %v1817 = vrot.slane %v1812, %v1816
    %v1820 = vsel %vm181, %v1802, 0
    %v1823 = vsel %vm181, %v1803, 0
    %v1826 = vsel %vm181, %v1804, 0
    %v1829 = vsel %vm181, %v1805, 0
    %1831 = vmatprep.subr.mxu0 0.0
    %1832 = vmatpush1.msra.mxu0 0.0
    %1833 = vmatprep.subr.mxu0 0.0
    %1834 = vmatpush1.msra.mxu0 0.0
    %1835 = vmatprep.subr.mxu0 0.0
    %1836 = vmatpush1.msra.mxu0 0.0
    %1837 = vmatprep.subr.mxu0 0.0
    %1838 = vmatpush1.msra.mxu0 0.0
    %1839 = vmatprep.subr.mxu0 0.0
    %1840 = vmatpush1.msra.mxu0 0.0
    %1841 = vmatprep.subr.mxu0 0.0
    %1842 = vmatpush1.msra.mxu0 0.0
    %1843 = vmatprep.subr.mxu0 0.0
    %1844 = vmatpush1.msra.mxu0 0.0
    %1845 = vmatprep.subr.mxu0 0.0
    %1846 = vmatpush1.msra.mxu0 0.0
    %1847 = vmatprep.subr.mxu0 0.0
    %1848 = vmatpush1.msra.mxu0 0.0
    %1849 = vmatprep.subr.mxu0 0.0
    %1850 = vmatpush1.msra.mxu0 0.0
    %1851 = vmatprep.subr.mxu0 0.0
    %1852 = vmatpush1.msra.mxu0 0.0
    %1853 = vmatprep.subr.mxu0 0.0
    %1854 = vmatpush1.msra.mxu0 0.0
    %1855 = vmatprep.subr.mxu0 0.0
    %1856 = vmatpush1.msra.mxu0 %v1810
    %1857 = vmatprep.subr.mxu0 0.0
    %1858 = vmatpush1.msra.mxu0 %v1809
    %1859 = vmatprep.subr.mxu0 0.0
    %1860 = vmatpush1.msra.mxu0 %v1808
    %1861 = vmatprep.subr.mxu0 0.0
    %1862 = vmatpush1.msra.mxu0 %v1807
    %1863 = vmatprep.subr.mxu0 0.0
    %1864 = vmatpush2.msra.mxu0 0.0
    %1865 = vmatprep.subr.mxu0 0.0
    %1866 = vmatpush2.msra.mxu0 0.0
    %1867 = vmatprep.subr.mxu0 0.0
    %1868 = vmatpush2.msra.mxu0 0.0
    %1869 = vmatprep.subr.mxu0 0.0
    %1870 = vmatpush2.msra.mxu0 0.0
    %1871 = vmatprep.subr.mxu0 0.0
    %1872 = vmatpush2.msra.mxu0 0.0
    %1873 = vmatprep.subr.mxu0 0.0
    %1874 = vmatpush2.msra.mxu0 0.0
    %1875 = vmatprep.subr.mxu0 0.0
    %1876 = vmatpush2.msra.mxu0 0.0
    %1877 = vmatprep.subr.mxu0 0.0
    %1878 = vmatpush2.msra.mxu0 0.0
    %1879 = vmatprep.subr.mxu0 0.0
    %1880 = vmatpush2.msra.mxu0 0.0
    %1881 = vmatprep.subr.mxu0 0.0
    %1882 = vmatpush2.msra.mxu0 0.0
    %1883 = vmatprep.subr.mxu0 0.0
    %1884 = vmatpush2.msra.mxu0 0.0
    %1885 = vmatprep.subr.mxu0 0.0
    %1886 = vmatpush2.msra.mxu0 0.0
    %1887 = vmatprep.subr.mxu0 0.0
    %1888 = vmatpush2.msra.mxu0 0.0
    %1889 = vmatprep.subr.mxu0 0.0
    %1890 = vmatpush2.msra.mxu0 0.0
    %1891 = vmatprep.subr.mxu0 0.0
    %1892 = vmatpush2.msra.mxu0 0.0
    %1893 = vmatprep.subr.mxu0 0.0
    %1894 = vmatpush2.msra.mxu0 0.0
    %1895 = vmatprep.mubr.f32.mxu0 0.0
    %1896 = vmatmul.mubr.f32.gmra.mxu0 %v1820
    %v1897 = vpop.f32.mrf.mxu0
    %v1898 = vadd.f32 %v1817, %v1897
    %v1899 = vpop.f32.mrf.mxu0
    %1900 = vmatprep.mubr.f32.mxu0 0.0
    %1901 = vmatmul.mubr.f32.gmra.mxu0 %v1823
    %v1902 = vpop.f32.mrf.mxu0
    %v1903 = vadd.f32 %v1817, %v1902
    %v1904 = vpop.f32.mrf.mxu0
    %1905 = vmatprep.mubr.f32.mxu0 0.0
    %1906 = vmatmul.mubr.f32.gmra.mxu0 %v1826
    %v1907 = vpop.f32.mrf.mxu0
    %v1908 = vadd.f32 %v1817, %v1907
    %v1909 = vpop.f32.mrf.mxu0
    %1910 = vmatprep.mubr.f32.mxu0 0.0
    %1911 = vmatmul.mubr.f32.gmra.mxu0 %v1829
    %v1912 = vpop.f32.mrf.mxu0
    %v1913 = vadd.f32 %v1817, %v1912
    %v1914 = vpop.f32.mrf.mxu0
    %1915 = vdwg.mxu0
    %1917 = vrot.lane.b32.xlu0 %v1898, 96
    %v1918 = vpop.permute.xlu0 %1917
    %v1919 = vsel %vm72, %v1898, 0
    %v1921 = vsel %vm72, %v1918, 0
    %1923 = vmatprep.subr.mxu0 0.0
    %1924 = vmatpush1.xpose.msra.mxu0 0.0
    %1925 = vmatprep.subr.mxu0 0.0
    %1926 = vmatpush1.xpose.msra.mxu0 0.0
    %1927 = vmatprep.subr.mxu0 0.0
    %1928 = vmatpush1.xpose.msra.mxu0 0.0
    %1929 = vmatprep.subr.mxu0 0.0
    %1930 = vmatpush1.xpose.msra.mxu0 0.0
    %1931 = vmatprep.subr.mxu0 0.0
    %1932 = vmatpush1.xpose.msra.mxu0 0.0
    %1933 = vmatprep.subr.mxu0 0.0
    %1934 = vmatpush1.xpose.msra.mxu0 0.0
    %1935 = vmatprep.subr.mxu0 0.0
    %1936 = vmatpush1.xpose.msra.mxu0 0.0
    %1937 = vmatprep.subr.mxu0 0.0
    %1938 = vmatpush1.xpose.msra.mxu0 0.0
    %1939 = vmatprep.subr.mxu0 0.0
    %1940 = vmatpush1.xpose.msra.mxu0 0.0
    %1941 = vmatprep.subr.mxu0 0.0
    %1942 = vmatpush1.xpose.msra.mxu0 0.0
    %1943 = vmatprep.subr.mxu0 0.0
    %1944 = vmatpush1.xpose.msra.mxu0 0.0
    %1945 = vmatprep.subr.mxu0 0.0
    %1946 = vmatpush1.xpose.msra.mxu0 0.0
    %1947 = vmatprep.subr.mxu0 0.0
    %1948 = vmatpush1.xpose.msra.mxu0 0.0
    %1949 = vmatprep.subr.mxu0 0.0
    %1950 = vmatpush1.xpose.msra.mxu0 0.0
    %1951 = vmatprep.subr.mxu0 0.0
    %1952 = vmatpush1.xpose.msra.mxu0 0.0
    %1953 = vmatprep.subr.mxu0 0.0
    %1954 = vmatpush1.xpose.msra.mxu0 %v1921
    %1955 = vmatprep.subr.mxu0 0.0
    %1956 = vmatpush2.xpose.msra.mxu0 0.0
    %1957 = vmatprep.subr.mxu0 0.0
    %1958 = vmatpush2.xpose.msra.mxu0 0.0
    %1959 = vmatprep.subr.mxu0 0.0
    %1960 = vmatpush2.xpose.msra.mxu0 0.0
    %1961 = vmatprep.subr.mxu0 0.0
    %1962 = vmatpush2.xpose.msra.mxu0 0.0
    %1963 = vmatprep.subr.mxu0 0.0
    %1964 = vmatpush2.xpose.msra.mxu0 0.0
    %1965 = vmatprep.subr.mxu0 0.0
    %1966 = vmatpush2.xpose.msra.mxu0 0.0
    %1967 = vmatprep.subr.mxu0 0.0
    %1968 = vmatpush2.xpose.msra.mxu0 0.0
    %1969 = vmatprep.subr.mxu0 0.0
    %1970 = vmatpush2.xpose.msra.mxu0 0.0
    %1971 = vmatprep.subr.mxu0 0.0
    %1972 = vmatpush2.xpose.msra.mxu0 0.0
    %1973 = vmatprep.subr.mxu0 0.0
    %1974 = vmatpush2.xpose.msra.mxu0 0.0
    %1975 = vmatprep.subr.mxu0 0.0
    %1976 = vmatpush2.xpose.msra.mxu0 0.0
    %1977 = vmatprep.subr.mxu0 0.0
    %1978 = vmatpush2.xpose.msra.mxu0 0.0
    %1979 = vmatprep.subr.mxu0 0.0
    %1980 = vmatpush2.xpose.msra.mxu0 0.0
    %1981 = vmatprep.subr.mxu0 0.0
    %1982 = vmatpush2.xpose.msra.mxu0 0.0
    %1983 = vmatprep.subr.mxu0 0.0
    %1984 = vmatpush2.xpose.msra.mxu0 0.0
    %1985 = vmatprep.subr.mxu0 0.0
    %1986 = vmatpush2.xpose.msra.mxu0 0.0
    %1987 = vmatprep.mubr.f32.mxu0 0.0
    %1988 = vmatmul.mubr.f32.gmra.mxu0 %v1919
    %v1989 = vpop.f32.mrf.mxu0
    %v1990 = vadd.f32 0.0, %v1989
    %v1991 = vpop.f32.mrf.mxu0
    %1992 = vdwg.mxu0
    %1994 = vrot.lane.b32.xlu0 %v1903, 96
    %v1995 = vpop.permute.xlu0 %1994
    %v1996 = vsel %vm72, %v1903, 0
    %v1998 = vsel %vm72, %v1995, 0
    %2000 = vmatprep.subr.mxu0 0.0
    %2001 = vmatpush1.xpose.msra.mxu0 0.0
    %2002 = vmatprep.subr.mxu0 0.0
    %2003 = vmatpush1.xpose.msra.mxu0 0.0
    %2004 = vmatprep.subr.mxu0 0.0
    %2005 = vmatpush1.xpose.msra.mxu0 0.0
    %2006 = vmatprep.subr.mxu0 0.0
    %2007 = vmatpush1.xpose.msra.mxu0 0.0
    %2008 = vmatprep.subr.mxu0 0.0
    %2009 = vmatpush1.xpose.msra.mxu0 0.0
    %2010 = vmatprep.subr.mxu0 0.0
    %2011 = vmatpush1.xpose.msra.mxu0 0.0
    %2012 = vmatprep.subr.mxu0 0.0
    %2013 = vmatpush1.xpose.msra.mxu0 0.0
    %2014 = vmatprep.subr.mxu0 0.0
    %2015 = vmatpush1.xpose.msra.mxu0 0.0
    %2016 = vmatprep.subr.mxu0 0.0
    %2017 = vmatpush1.xpose.msra.mxu0 0.0
    %2018 = vmatprep.subr.mxu0 0.0
    %2019 = vmatpush1.xpose.msra.mxu0 0.0
    %2020 = vmatprep.subr.mxu0 0.0
    %2021 = vmatpush1.xpose.msra.mxu0 0.0
    %2022 = vmatprep.subr.mxu0 0.0
    %2023 = vmatpush1.xpose.msra.mxu0 0.0
    %2024 = vmatprep.subr.mxu0 0.0
    %2025 = vmatpush1.xpose.msra.mxu0 0.0
    %2026 = vmatprep.subr.mxu0 0.0
    %2027 = vmatpush1.xpose.msra.mxu0 0.0
    %2028 = vmatprep.subr.mxu0 0.0
    %2029 = vmatpush1.xpose.msra.mxu0 0.0
    %2030 = vmatprep.subr.mxu0 0.0
    %2031 = vmatpush1.xpose.msra.mxu0 %v1998
    %2032 = vmatprep.subr.mxu0 0.0
    %2033 = vmatpush2.xpose.msra.mxu0 0.0
    %2034 = vmatprep.subr.mxu0 0.0
    %2035 = vmatpush2.xpose.msra.mxu0 0.0
    %2036 = vmatprep.subr.mxu0 0.0
    %2037 = vmatpush2.xpose.msra.mxu0 0.0
    %2038 = vmatprep.subr.mxu0 0.0
    %2039 = vmatpush2.xpose.msra.mxu0 0.0
    %2040 = vmatprep.subr.mxu0 0.0
    %2041 = vmatpush2.xpose.msra.mxu0 0.0
    %2042 = vmatprep.subr.mxu0 0.0
    %2043 = vmatpush2.xpose.msra.mxu0 0.0
    %2044 = vmatprep.subr.mxu0 0.0
    %2045 = vmatpush2.xpose.msra.mxu0 0.0
    %2046 = vmatprep.subr.mxu0 0.0
    %2047 = vmatpush2.xpose.msra.mxu0 0.0
    %2048 = vmatprep.subr.mxu0 0.0
    %2049 = vmatpush2.xpose.msra.mxu0 0.0
    %2050 = vmatprep.subr.mxu0 0.0
    %2051 = vmatpush2.xpose.msra.mxu0 0.0
    %2052 = vmatprep.subr.mxu0 0.0
    %2053 = vmatpush2.xpose.msra.mxu0 0.0
    %2054 = vmatprep.subr.mxu0 0.0
    %2055 = vmatpush2.xpose.msra.mxu0 0.0
    %2056 = vmatprep.subr.mxu0 0.0
    %2057 = vmatpush2.xpose.msra.mxu0 0.0
    %2058 = vmatprep.subr.mxu0 0.0
    %2059 = vmatpush2.xpose.msra.mxu0 0.0
    %2060 = vmatprep.subr.mxu0 0.0
    %2061 = vmatpush2.xpose.msra.mxu0 0.0
    %2062 = vmatprep.subr.mxu0 0.0
    %2063 = vmatpush2.xpose.msra.mxu0 0.0
    %2064 = vmatprep.mubr.f32.mxu0 0.0
    %2065 = vmatmul.mubr.f32.gmra.mxu0 %v1996
    %v2066 = vpop.f32.mrf.mxu0
    %v2067 = vadd.f32 0.0, %v2066
    %v2068 = vpop.f32.mrf.mxu0
    %2069 = vdwg.mxu0
    %2071 = vrot.lane.b32.xlu0 %v1908, 96
    %v2072 = vpop.permute.xlu0 %2071
    %v2073 = vsel %vm72, %v1908, 0
    %v2075 = vsel %vm72, %v2072, 0
    %2077 = vmatprep.subr.mxu0 0.0
    %2078 = vmatpush1.xpose.msra.mxu0 0.0
    %2079 = vmatprep.subr.mxu0 0.0
    %2080 = vmatpush1.xpose.msra.mxu0 0.0
    %2081 = vmatprep.subr.mxu0 0.0
    %2082 = vmatpush1.xpose.msra.mxu0 0.0
    %2083 = vmatprep.subr.mxu0 0.0
    %2084 = vmatpush1.xpose.msra.mxu0 0.0
    %2085 = vmatprep.subr.mxu0 0.0
    %2086 = vmatpush1.xpose.msra.mxu0 0.0
    %2087 = vmatprep.subr.mxu0 0.0
    %2088 = vmatpush1.xpose.msra.mxu0 0.0
    %2089 = vmatprep.subr.mxu0 0.0
    %2090 = vmatpush1.xpose.msra.mxu0 0.0
    %2091 = vmatprep.subr.mxu0 0.0
    %2092 = vmatpush1.xpose.msra.mxu0 0.0
    %2093 = vmatprep.subr.mxu0 0.0
    %2094 = vmatpush1.xpose.msra.mxu0 0.0
    %2095 = vmatprep.subr.mxu0 0.0
    %2096 = vmatpush1.xpose.msra.mxu0 0.0
    %2097 = vmatprep.subr.mxu0 0.0
    %2098 = vmatpush1.xpose.msra.mxu0 0.0
    %2099 = vmatprep.subr.mxu0 0.0
    %2100 = vmatpush1.xpose.msra.mxu0 0.0
    %2101 = vmatprep.subr.mxu0 0.0
    %2102 = vmatpush1.xpose.msra.mxu0 0.0
    %2103 = vmatprep.subr.mxu0 0.0
    %2104 = vmatpush1.xpose.msra.mxu0 0.0
    %2105 = vmatprep.subr.mxu0 0.0
    %2106 = vmatpush1.xpose.msra.mxu0 0.0
    %2107 = vmatprep.subr.mxu0 0.0
    %2108 = vmatpush1.xpose.msra.mxu0 %v2075
    %2109 = vmatprep.subr.mxu0 0.0
    %2110 = vmatpush2.xpose.msra.mxu0 0.0
    %2111 = vmatprep.subr.mxu0 0.0
    %2112 = vmatpush2.xpose.msra.mxu0 0.0
    %2113 = vmatprep.subr.mxu0 0.0
    %2114 = vmatpush2.xpose.msra.mxu0 0.0
    %2115 = vmatprep.subr.mxu0 0.0
    %2116 = vmatpush2.xpose.msra.mxu0 0.0
    %2117 = vmatprep.subr.mxu0 0.0
    %2118 = vmatpush2.xpose.msra.mxu0 0.0
    %2119 = vmatprep.subr.mxu0 0.0
    %2120 = vmatpush2.xpose.msra.mxu0 0.0
    %2121 = vmatprep.subr.mxu0 0.0
    %2122 = vmatpush2.xpose.msra.mxu0 0.0
    %2123 = vmatprep.subr.mxu0 0.0
    %2124 = vmatpush2.xpose.msra.mxu0 0.0
    %2125 = vmatprep.subr.mxu0 0.0
    %2126 = vmatpush2.xpose.msra.mxu0 0.0
    %2127 = vmatprep.subr.mxu0 0.0
    %2128 = vmatpush2.xpose.msra.mxu0 0.0
    %2129 = vmatprep.subr.mxu0 0.0
    %2130 = vmatpush2.xpose.msra.mxu0 0.0
    %2131 = vmatprep.subr.mxu0 0.0
    %2132 = vmatpush2.xpose.msra.mxu0 0.0
    %2133 = vmatprep.subr.mxu0 0.0
    %2134 = vmatpush2.xpose.msra.mxu0 0.0
    %2135 = vmatprep.subr.mxu0 0.0
    %2136 = vmatpush2.xpose.msra.mxu0 0.0
    %2137 = vmatprep.subr.mxu0 0.0
    %2138 = vmatpush2.xpose.msra.mxu0 0.0
    %2139 = vmatprep.subr.mxu0 0.0
    %2140 = vmatpush2.xpose.msra.mxu0 0.0
    %2141 = vmatprep.mubr.f32.mxu0 0.0
    %2142 = vmatmul.mubr.f32.gmra.mxu0 %v2073
    %v2143 = vpop.f32.mrf.mxu0
    %v2144 = vadd.f32 0.0, %v2143
    %v2145 = vpop.f32.mrf.mxu0
    %2146 = vdwg.mxu0
    %2148 = vrot.lane.b32.xlu0 %v1913, 96
    %v2149 = vpop.permute.xlu0 %2148
    %v2150 = vsel %vm72, %v1913, 0
    %v2152 = vsel %vm72, %v2149, 0
    %2154 = vmatprep.subr.mxu0 0.0
    %2155 = vmatpush1.xpose.msra.mxu0 0.0
    %2156 = vmatprep.subr.mxu0 0.0
    %2157 = vmatpush1.xpose.msra.mxu0 0.0
    %2158 = vmatprep.subr.mxu0 0.0
    %2159 = vmatpush1.xpose.msra.mxu0 0.0
    %2160 = vmatprep.subr.mxu0 0.0
    %2161 = vmatpush1.xpose.msra.mxu0 0.0
    %2162 = vmatprep.subr.mxu0 0.0
    %2163 = vmatpush1.xpose.msra.mxu0 0.0
    %2164 = vmatprep.subr.mxu0 0.0
    %2165 = vmatpush1.xpose.msra.mxu0 0.0
    %2166 = vmatprep.subr.mxu0 0.0
    %2167 = vmatpush1.xpose.msra.mxu0 0.0
    %2168 = vmatprep.subr.mxu0 0.0
    %2169 = vmatpush1.xpose.msra.mxu0 0.0
    %2170 = vmatprep.subr.mxu0 0.0
    %2171 = vmatpush1.xpose.msra.mxu0 0.0
    %2172 = vmatprep.subr.mxu0 0.0
    %2173 = vmatpush1.xpose.msra.mxu0 0.0
    %2174 = vmatprep.subr.mxu0 0.0
    %2175 = vmatpush1.xpose.msra.mxu0 0.0
    %2176 = vmatprep.subr.mxu0 0.0
    %2177 = vmatpush1.xpose.msra.mxu0 0.0
    %2178 = vmatprep.subr.mxu0 0.0
    %2179 = vmatpush1.xpose.msra.mxu0 0.0
    %2180 = vmatprep.subr.mxu0 0.0
    %2181 = vmatpush1.xpose.msra.mxu0 0.0
    %2182 = vmatprep.subr.mxu0 0.0
    %2183 = vmatpush1.xpose.msra.mxu0 0.0
    %2184 = vmatprep.subr.mxu0 0.0
    %2185 = vmatpush1.xpose.msra.mxu0 %v2152
    %2186 = vmatprep.subr.mxu0 0.0
    %2187 = vmatpush2.xpose.msra.mxu0 0.0
    %2188 = vmatprep.subr.mxu0 0.0
    %2189 = vmatpush2.xpose.msra.mxu0 0.0
    %2190 = vmatprep.subr.mxu0 0.0
    %2191 = vmatpush2.xpose.msra.mxu0 0.0
    %2192 = vmatprep.subr.mxu0 0.0
    %2193 = vmatpush2.xpose.msra.mxu0 0.0
    %2194 = vmatprep.subr.mxu0 0.0
    %2195 = vmatpush2.xpose.msra.mxu0 0.0
    %2196 = vmatprep.subr.mxu0 0.0
    %2197 = vmatpush2.xpose.msra.mxu0 0.0
    %2198 = vmatprep.subr.mxu0 0.0
    %2199 = vmatpush2.xpose.msra.mxu0 0.0
    %2200 = vmatprep.subr.mxu0 0.0
    %2201 = vmatpush2.xpose.msra.mxu0 0.0
    %2202 = vmatprep.subr.mxu0 0.0
    %2203 = vmatpush2.xpose.msra.mxu0 0.0
    %2204 = vmatprep.subr.mxu0 0.0
    %2205 = vmatpush2.xpose.msra.mxu0 0.0
    %2206 = vmatprep.subr.mxu0 0.0
    %2207 = vmatpush2.xpose.msra.mxu0 0.0
    %2208 = vmatprep.subr.mxu0 0.0
    %2209 = vmatpush2.xpose.msra.mxu0 0.0
    %2210 = vmatprep.subr.mxu0 0.0
    %2211 = vmatpush2.xpose.msra.mxu0 0.0
    %2212 = vmatprep.subr.mxu0 0.0
    %2213 = vmatpush2.xpose.msra.mxu0 0.0
    %2214 = vmatprep.subr.mxu0 0.0
    %2215 = vmatpush2.xpose.msra.mxu0 0.0
    %2216 = vmatprep.subr.mxu0 0.0
    %2217 = vmatpush2.xpose.msra.mxu0 0.0
    %2218 = vmatprep.mubr.f32.mxu0 0.0
    %2219 = vmatmul.mubr.f32.gmra.mxu0 %v2150
    %v2220 = vpop.f32.mrf.mxu0
    %v2221 = vadd.f32 0.0, %v2220
    %v2222 = vpop.f32.mrf.mxu0
    %2223 = vdwg.mxu0
    %v2224 = vsel %vm587, %v1990, -inf
    %2225 = vmax.xlane.f32.xlu0 %v2224
    %v2226 = vpop.xlane.xlu0 %2225
    %v2227 = vsel %vm587, %v2067, -inf
    %2228 = vmax.xlane.f32.xlu0 %v2227
    %v2229 = vpop.xlane.xlu0 %2228
    %v2230 = vsel %vm587, %v2144, -inf
    %2231 = vmax.xlane.f32.xlu0 %v2230
    %v2232 = vpop.xlane.xlu0 %2231
    %v2233 = vsel %vm587, %v2221, -inf
    %2234 = vmax.xlane.f32.xlu0 %v2233
    %v2235 = vpop.xlane.xlu0 %2234
    %v2236 = vsub.f32 %v1990, %v2226
    %v2237 = vsub.f32 %v2067, %v2229
    %v2238 = vsub.f32 %v2144, %v2232
    %v2239 = vsub.f32 %v2221, %v2235
    %v2240 = vmul.f32 %v2236, 1.442695
    %v2241 = vpow.pop %v2240
    %v2242 = vmul.f32 %v2237, 1.442695
    %v2243 = vpow.pop %v2242
    %v2244 = vmul.f32 %v2238, 1.442695
    %v2245 = vpow.pop %v2244
    %v2246 = vmul.f32 %v2239, 1.442695
    %v2247 = vpow.pop %v2246
    %v2248 = vsel %vm587, %v2241, 0.0
    %2249 = vadd.xlane.f32.xlu0 %v2248
    %v2250 = vpop.xlane.xlu0 %2249
    %v2251 = vsel %vm587, %v2243, 0.0
    %2252 = vadd.xlane.f32.xlu0 %v2251
    %v2253 = vpop.xlane.xlu0 %2252
    %v2254 = vsel %vm587, %v2245, 0.0
    %2255 = vadd.xlane.f32.xlu0 %v2254
    %v2256 = vpop.xlane.xlu0 %2255
    %v2257 = vsel %vm587, %v2247, 0.0
    %2258 = vadd.xlane.f32.xlu0 %v2257
    %v2259 = vpop.xlane.xlu0 %2258
    %v2260 = vrcp.pop %v2250
    %v2261 = vrcp.pop %v2253
    %v2262 = vrcp.pop %v2256
    %v2263 = vrcp.pop %v2259
    %v2264 = vmul.f32 %v2241, %v2260
    %v2265 = vmul.f32 %v2243, %v2261
    %v2266 = vmul.f32 %v2245, %v2262
    %v2267 = vmul.f32 %v2247, %v2263
    %2268 = vrot.lane.b32.xlu0 %v1898, 64
    %v2269 = vpop.permute.xlu0 %2268
    %v2272 = vsel %vm587, %v2264, 0
    %2274 = vmatprep.subr.mxu0 0.0
    %2275 = vmatpush1.msra.mxu0 0.0
    %2276 = vmatprep.subr.mxu0 0.0
    %2277 = vmatpush1.msra.mxu0 0.0
    %2278 = vmatprep.subr.mxu0 0.0
    %2279 = vmatpush1.msra.mxu0 0.0
    %2280 = vmatprep.subr.mxu0 0.0
    %2281 = vmatpush1.msra.mxu0 0.0
    %2282 = vmatprep.subr.mxu0 0.0
    %2283 = vmatpush1.msra.mxu0 0.0
    %2284 = vmatprep.subr.mxu0 0.0
    %2285 = vmatpush1.msra.mxu0 0.0
    %2286 = vmatprep.subr.mxu0 0.0
    %2287 = vmatpush1.msra.mxu0 0.0
    %2288 = vmatprep.subr.mxu0 0.0
    %2289 = vmatpush1.msra.mxu0 0.0
    %2290 = vmatprep.subr.mxu0 0.0
    %2291 = vmatpush1.msra.mxu0 0.0
    %2292 = vmatprep.subr.mxu0 0.0
    %2293 = vmatpush1.msra.mxu0 0.0
    %2294 = vmatprep.subr.mxu0 0.0
    %2295 = vmatpush1.msra.mxu0 0.0
    %2296 = vmatprep.subr.mxu0 0.0
    %2297 = vmatpush1.msra.mxu0 0.0
    %2298 = vmatprep.subr.mxu0 0.0
    %2299 = vmatpush1.msra.mxu0 0.0
    %2300 = vmatprep.subr.mxu0 0.0
    %2301 = vmatpush1.msra.mxu0 0.0
    %2302 = vmatprep.subr.mxu0 0.0
    %2303 = vmatpush1.msra.mxu0 0.0
    %2304 = vmatprep.subr.mxu0 0.0
    %2305 = vmatpush1.msra.mxu0 %v2269
    %2306 = vmatprep.subr.mxu0 0.0
    %2307 = vmatpush2.msra.mxu0 0.0
    %2308 = vmatprep.subr.mxu0 0.0
    %2309 = vmatpush2.msra.mxu0 0.0
    %2310 = vmatprep.subr.mxu0 0.0
    %2311 = vmatpush2.msra.mxu0 0.0
    %2312 = vmatprep.subr.mxu0 0.0
    %2313 = vmatpush2.msra.mxu0 0.0
    %2314 = vmatprep.subr.mxu0 0.0
    %2315 = vmatpush2.msra.mxu0 0.0
    %2316 = vmatprep.subr.mxu0 0.0
    %2317 = vmatpush2.msra.mxu0 0.0
    %2318 = vmatprep.subr.mxu0 0.0
    %2319 = vmatpush2.msra.mxu0 0.0
    %2320 = vmatprep.subr.mxu0 0.0
    %2321 = vmatpush2.msra.mxu0 0.0
    %2322 = vmatprep.subr.mxu0 0.0
    %2323 = vmatpush2.msra.mxu0 0.0
    %2324 = vmatprep.subr.mxu0 0.0
    %2325 = vmatpush2.msra.mxu0 0.0
    %2326 = vmatprep.subr.mxu0 0.0
    %2327 = vmatpush2.msra.mxu0 0.0
    %2328 = vmatprep.subr.mxu0 0.0
    %2329 = vmatpush2.msra.mxu0 0.0
    %2330 = vmatprep.subr.mxu0 0.0
    %2331 = vmatpush2.msra.mxu0 0.0
    %2332 = vmatprep.subr.mxu0 0.0
    %2333 = vmatpush2.msra.mxu0 0.0
    %2334 = vmatprep.subr.mxu0 0.0
    %2335 = vmatpush2.msra.mxu0 0.0
    %2336 = vmatprep.subr.mxu0 0.0
    %2337 = vmatpush2.msra.mxu0 0.0
    %2338 = vmatprep.mubr.f32.mxu0 0.0
    %2339 = vmatmul.mubr.f32.gmra.mxu0 %v2272
    %v2340 = vpop.f32.mrf.mxu0
    %v2341 = vadd.f32 0.0, %v2340
    %v2342 = vpop.f32.mrf.mxu0
    %2343 = vdwg.mxu0
    %2344 = vrot.lane.b32.xlu0 %v1903, 64
    %v2345 = vpop.permute.xlu0 %2344
    %v2348 = vsel %vm587, %v2265, 0
    %2350 = vmatprep.subr.mxu0 0.0
    %2351 = vmatpush1.msra.mxu0 0.0
    %2352 = vmatprep.subr.mxu0 0.0
    %2353 = vmatpush1.msra.mxu0 0.0
    %2354 = vmatprep.subr.mxu0 0.0
    %2355 = vmatpush1.msra.mxu0 0.0
    %2356 = vmatprep.subr.mxu0 0.0
    %2357 = vmatpush1.msra.mxu0 0.0
    %2358 = vmatprep.subr.mxu0 0.0
    %2359 = vmatpush1.msra.mxu0 0.0
    %2360 = vmatprep.subr.mxu0 0.0
    %2361 = vmatpush1.msra.mxu0 0.0
    %2362 = vmatprep.subr.mxu0 0.0
    %2363 = vmatpush1.msra.mxu0 0.0
    %2364 = vmatprep.subr.mxu0 0.0
    %2365 = vmatpush1.msra.mxu0 0.0
    %2366 = vmatprep.subr.mxu0 0.0
    %2367 = vmatpush1.msra.mxu0 0.0
    %2368 = vmatprep.subr.mxu0 0.0
    %2369 = vmatpush1.msra.mxu0 0.0
    %2370 = vmatprep.subr.mxu0 0.0
    %2371 = vmatpush1.msra.mxu0 0.0
    %2372 = vmatprep.subr.mxu0 0.0
    %2373 = vmatpush1.msra.mxu0 0.0
    %2374 = vmatprep.subr.mxu0 0.0
    %2375 = vmatpush1.msra.mxu0 0.0
    %2376 = vmatprep.subr.mxu0 0.0
    %2377 = vmatpush1.msra.mxu0 0.0
    %2378 = vmatprep.subr.mxu0 0.0
    %2379 = vmatpush1.msra.mxu0 0.0
    %2380 = vmatprep.subr.mxu0 0.0
    %2381 = vmatpush1.msra.mxu0 %v2345
    %2382 = vmatprep.subr.mxu0 0.0
    %2383 = vmatpush2.msra.mxu0 0.0
    %2384 = vmatprep.subr.mxu0 0.0
    %2385 = vmatpush2.msra.mxu0 0.0
    %2386 = vmatprep.subr.mxu0 0.0
    %2387 = vmatpush2.msra.mxu0 0.0
    %2388 = vmatprep.subr.mxu0 0.0
    %2389 = vmatpush2.msra.mxu0 0.0
    %2390 = vmatprep.subr.mxu0 0.0
    %2391 = vmatpush2.msra.mxu0 0.0
    %2392 = vmatprep.subr.mxu0 0.0
    %2393 = vmatpush2.msra.mxu0 0.0
    %2394 = vmatprep.subr.mxu0 0.0
    %2395 = vmatpush2.msra.mxu0 0.0
    %2396 = vmatprep.subr.mxu0 0.0
    %2397 = vmatpush2.msra.mxu0 0.0
    %2398 = vmatprep.subr.mxu0 0.0
    %2399 = vmatpush2.msra.mxu0 0.0
    %2400 = vmatprep.subr.mxu0 0.0
    %2401 = vmatpush2.msra.mxu0 0.0
    %2402 = vmatprep.subr.mxu0 0.0
    %2403 = vmatpush2.msra.mxu0 0.0
    %2404 = vmatprep.subr.mxu0 0.0
    %2405 = vmatpush2.msra.mxu0 0.0
    %2406 = vmatprep.subr.mxu0 0.0
    %2407 = vmatpush2.msra.mxu0 0.0
    %2408 = vmatprep.subr.mxu0 0.0
    %2409 = vmatpush2.msra.mxu0 0.0
    %2410 = vmatprep.subr.mxu0 0.0
    %2411 = vmatpush2.msra.mxu0 0.0
    %2412 = vmatprep.subr.mxu0 0.0
    %2413 = vmatpush2.msra.mxu0 0.0
    %2414 = vmatprep.mubr.f32.mxu0 0.0
    %2415 = vmatmul.mubr.f32.gmra.mxu0 %v2348
    %v2416 = vpop.f32.mrf.mxu0
    %v2417 = vadd.f32 0.0, %v2416
    %v2418 = vpop.f32.mrf.mxu0
    %2419 = vdwg.mxu0
    %2420 = vrot.lane.b32.xlu0 %v1908, 64
    %v2421 = vpop.permute.xlu0 %2420
    %v2424 = vsel %vm587, %v2266, 0
    %2426 = vmatprep.subr.mxu0 0.0
    %2427 = vmatpush1.msra.mxu0 0.0
    %2428 = vmatprep.subr.mxu0 0.0
    %2429 = vmatpush1.msra.mxu0 0.0
    %2430 = vmatprep.subr.mxu0 0.0
    %2431 = vmatpush1.msra.mxu0 0.0
    %2432 = vmatprep.subr.mxu0 0.0
    %2433 = vmatpush1.msra.mxu0 0.0
    %2434 = vmatprep.subr.mxu0 0.0
    %2435 = vmatpush1.msra.mxu0 0.0
    %2436 = vmatprep.subr.mxu0 0.0
    %2437 = vmatpush1.msra.mxu0 0.0
    %2438 = vmatprep.subr.mxu0 0.0
    %2439 = vmatpush1.msra.mxu0 0.0
    %2440 = vmatprep.subr.mxu0 0.0
    %2441 = vmatpush1.msra.mxu0 0.0
    %2442 = vmatprep.subr.mxu0 0.0
    %2443 = vmatpush1.msra.mxu0 0.0
    %2444 = vmatprep.subr.mxu0 0.0
    %2445 = vmatpush1.msra.mxu0 0.0
    %2446 = vmatprep.subr.mxu0 0.0
    %2447 = vmatpush1.msra.mxu0 0.0
    %2448 = vmatprep.subr.mxu0 0.0
    %2449 = vmatpush1.msra.mxu0 0.0
    %2450 = vmatprep.subr.mxu0 0.0
    %2451 = vmatpush1.msra.mxu0 0.0
    %2452 = vmatprep.subr.mxu0 0.0
    %2453 = vmatpush1.msra.mxu0 0.0
    %2454 = vmatprep.subr.mxu0 0.0
    %2455 = vmatpush1.msra.mxu0 0.0
    %2456 = vmatprep.subr.mxu0 0.0
    %2457 = vmatpush1.msra.mxu0 %v2421
    %2458 = vmatprep.subr.mxu0 0.0
    %2459 = vmatpush2.msra.mxu0 0.0
    %2460 = vmatprep.subr.mxu0 0.0
    %2461 = vmatpush2.msra.mxu0 0.0
    %2462 = vmatprep.subr.mxu0 0.0
    %2463 = vmatpush2.msra.mxu0 0.0
    %2464 = vmatprep.subr.mxu0 0.0
    %2465 = vmatpush2.msra.mxu0 0.0
    %2466 = vmatprep.subr.mxu0 0.0
    %2467 = vmatpush2.msra.mxu0 0.0
    %2468 = vmatprep.subr.mxu0 0.0
    %2469 = vmatpush2.msra.mxu0 0.0
    %2470 = vmatprep.subr.mxu0 0.0
    %2471 = vmatpush2.msra.mxu0 0.0
    %2472 = vmatprep.subr.mxu0 0.0
    %2473 = vmatpush2.msra.mxu0 0.0
    %2474 = vmatprep.subr.mxu0 0.0
    %2475 = vmatpush2.msra.mxu0 0.0
    %2476 = vmatprep.subr.mxu0 0.0
    %2477 = vmatpush2.msra.mxu0 0.0
    %2478 = vmatprep.subr.mxu0 0.0
    %2479 = vmatpush2.msra.mxu0 0.0
    %2480 = vmatprep.subr.mxu0 0.0
    %2481 = vmatpush2.msra.mxu0 0.0
    %2482 = vmatprep.subr.mxu0 0.0
    %2483 = vmatpush2.msra.mxu0 0.0
    %2484 = vmatprep.subr.mxu0 0.0
    %2485 = vmatpush2.msra.mxu0 0.0
    %2486 = vmatprep.subr.mxu0 0.0
    %2487 = vmatpush2.msra.mxu0 0.0
    %2488 = vmatprep.subr.mxu0 0.0
    %2489 = vmatpush2.msra.mxu0 0.0
    %2490 = vmatprep.mubr.f32.mxu0 0.0
    %2491 = vmatmul.mubr.f32.gmra.mxu0 %v2424
    %v2492 = vpop.f32.mrf.mxu0
    %v2493 = vadd.f32 0.0, %v2492
    %v2494 = vpop.f32.mrf.mxu0
    %2495 = vdwg.mxu0
    %2496 = vrot.lane.b32.xlu0 %v1913, 64
    %v2497 = vpop.permute.xlu0 %2496
    %v2500 = vsel %vm587, %v2267, 0
    %2502 = vmatprep.subr.mxu0 0.0
    %2503 = vmatpush1.msra.mxu0 0.0
    %2504 = vmatprep.subr.mxu0 0.0
    %2505 = vmatpush1.msra.mxu0 0.0
    %2506 = vmatprep.subr.mxu0 0.0
    %2507 = vmatpush1.msra.mxu0 0.0
    %2508 = vmatprep.subr.mxu0 0.0
    %2509 = vmatpush1.msra.mxu0 0.0
    %2510 = vmatprep.subr.mxu0 0.0
    %2511 = vmatpush1.msra.mxu0 0.0
    %2512 = vmatprep.subr.mxu0 0.0
    %2513 = vmatpush1.msra.mxu0 0.0
    %2514 = vmatprep.subr.mxu0 0.0
    %2515 = vmatpush1.msra.mxu0 0.0
    %2516 = vmatprep.subr.mxu0 0.0
    %2517 = vmatpush1.msra.mxu0 0.0
    %2518 = vmatprep.subr.mxu0 0.0
    %2519 = vmatpush1.msra.mxu0 0.0
    %2520 = vmatprep.subr.mxu0 0.0
    %2521 = vmatpush1.msra.mxu0 0.0
    %2522 = vmatprep.subr.mxu0 0.0
    %2523 = vmatpush1.msra.mxu0 0.0
    %2524 = vmatprep.subr.mxu0 0.0
    %2525 = vmatpush1.msra.mxu0 0.0
    %2526 = vmatprep.subr.mxu0 0.0
    %2527 = vmatpush1.msra.mxu0 0.0
    %2528 = vmatprep.subr.mxu0 0.0
    %2529 = vmatpush1.msra.mxu0 0.0
    %2530 = vmatprep.subr.mxu0 0.0
    %2531 = vmatpush1.msra.mxu0 0.0
    %2532 = vmatprep.subr.mxu0 0.0
    %2533 = vmatpush1.msra.mxu0 %v2497
    %2534 = vmatprep.subr.mxu0 0.0
    %2535 = vmatpush2.msra.mxu0 0.0
    %2536 = vmatprep.subr.mxu0 0.0
    %2537 = vmatpush2.msra.mxu0 0.0
    %2538 = vmatprep.subr.mxu0 0.0
    %2539 = vmatpush2.msra.mxu0 0.0
    %2540 = vmatprep.subr.mxu0 0.0
    %2541 = vmatpush2.msra.mxu0 0.0
    %2542 = vmatprep.subr.mxu0 0.0
    %2543 = vmatpush2.msra.mxu0 0.0
    %2544 = vmatprep.subr.mxu0 0.0
    %2545 = vmatpush2.msra.mxu0 0.0
    %2546 = vmatprep.subr.mxu0 0.0
    %2547 = vmatpush2.msra.mxu0 0.0
    %2548 = vmatprep.subr.mxu0 0.0
    %2549 = vmatpush2.msra.mxu0 0.0
    %2550 = vmatprep.subr.mxu0 0.0
    %2551 = vmatpush2.msra.mxu0 0.0
    %2552 = vmatprep.subr.mxu0 0.0
    %2553 = vmatpush2.msra.mxu0 0.0
    %2554 = vmatprep.subr.mxu0 0.0
    %2555 = vmatpush2.msra.mxu0 0.0
    %2556 = vmatprep.subr.mxu0 0.0
    %2557 = vmatpush2.msra.mxu0 0.0
    %2558 = vmatprep.subr.mxu0 0.0
    %2559 = vmatpush2.msra.mxu0 0.0
    %2560 = vmatprep.subr.mxu0 0.0
    %2561 = vmatpush2.msra.mxu0 0.0
    %2562 = vmatprep.subr.mxu0 0.0
    %2563 = vmatpush2.msra.mxu0 0.0
    %2564 = vmatprep.subr.mxu0 0.0
    %2565 = vmatpush2.msra.mxu0 0.0
    %2566 = vmatprep.mubr.f32.mxu0 0.0
    %2567 = vmatmul.mubr.f32.gmra.mxu0 %v2500
    %v2568 = vpop.f32.mrf.mxu0
    %v2569 = vadd.f32 0.0, %v2568
    %v2570 = vpop.f32.mrf.mxu0
    %2571 = vdwg.mxu0
    %s2572 = scalar_lea.vmem %s6, 32
    %v2573 = vld [vmem:[%s2572] sm:$0xff]
    %v2574 = vld [vmem:[%s2572 + $0x8] sm:$0xff]
    %2575 = vrot.lane.b32.xlu0 %v1898, 112
    %v2576 = vpop.permute.xlu0 %2575
    %2577 = vrot.lane.b32.xlu0 %v1898, 80
    %v2578 = vpop.permute.xlu0 %2577
    %v2579 = vsel %vm72, %v2576, 0
    %v2581 = vsel %vm72, %v2578, 0
    %2583 = vmatprep.subr.mxu0 0.0
    %2584 = vmatpush1.xpose.msra.mxu0 0.0
    %2585 = vmatprep.subr.mxu0 0.0
    %2586 = vmatpush1.xpose.msra.mxu0 0.0
    %2587 = vmatprep.subr.mxu0 0.0
    %2588 = vmatpush1.xpose.msra.mxu0 0.0
    %2589 = vmatprep.subr.mxu0 0.0
    %2590 = vmatpush1.xpose.msra.mxu0 0.0
    %2591 = vmatprep.subr.mxu0 0.0
    %2592 = vmatpush1.xpose.msra.mxu0 0.0
    %2593 = vmatprep.subr.mxu0 0.0
    %2594 = vmatpush1.xpose.msra.mxu0 0.0
    %2595 = vmatprep.subr.mxu0 0.0
    %2596 = vmatpush1.xpose.msra.mxu0 0.0
    %2597 = vmatprep.subr.mxu0 0.0
    %2598 = vmatpush1.xpose.msra.mxu0 0.0
    %2599 = vmatprep.subr.mxu0 0.0
    %2600 = vmatpush1.xpose.msra.mxu0 0.0
    %2601 = vmatprep.subr.mxu0 0.0
    %2602 = vmatpush1.xpose.msra.mxu0 0.0
    %2603 = vmatprep.subr.mxu0 0.0
    %2604 = vmatpush1.xpose.msra.mxu0 0.0
    %2605 = vmatprep.subr.mxu0 0.0
    %2606 = vmatpush1.xpose.msra.mxu0 0.0
    %2607 = vmatprep.subr.mxu0 0.0
    %2608 = vmatpush1.xpose.msra.mxu0 0.0
    %2609 = vmatprep.subr.mxu0 0.0
    %2610 = vmatpush1.xpose.msra.mxu0 0.0
    %2611 = vmatprep.subr.mxu0 0.0
    %2612 = vmatpush1.xpose.msra.mxu0 0.0
    %2613 = vmatprep.subr.mxu0 0.0
    %2614 = vmatpush1.xpose.msra.mxu0 %v2581
    %2615 = vmatprep.subr.mxu0 0.0
    %2616 = vmatpush2.xpose.msra.mxu0 0.0
    %2617 = vmatprep.subr.mxu0 0.0
    %2618 = vmatpush2.xpose.msra.mxu0 0.0
    %2619 = vmatprep.subr.mxu0 0.0
    %2620 = vmatpush2.xpose.msra.mxu0 0.0
    %2621 = vmatprep.subr.mxu0 0.0
    %2622 = vmatpush2.xpose.msra.mxu0 0.0
    %2623 = vmatprep.subr.mxu0 0.0
    %2624 = vmatpush2.xpose.msra.mxu0 0.0
    %2625 = vmatprep.subr.mxu0 0.0
    %2626 = vmatpush2.xpose.msra.mxu0 0.0
    %2627 = vmatprep.subr.mxu0 0.0
    %2628 = vmatpush2.xpose.msra.mxu0 0.0
    %2629 = vmatprep.subr.mxu0 0.0
    %2630 = vmatpush2.xpose.msra.mxu0 0.0
    %2631 = vmatprep.subr.mxu0 0.0
    %2632 = vmatpush2.xpose.msra.mxu0 0.0
    %2633 = vmatprep.subr.mxu0 0.0
    %2634 = vmatpush2.xpose.msra.mxu0 0.0
    %2635 = vmatprep.subr.mxu0 0.0
    %2636 = vmatpush2.xpose.msra.mxu0 0.0
    %2637 = vmatprep.subr.mxu0 0.0
    %2638 = vmatpush2.xpose.msra.mxu0 0.0
    %2639 = vmatprep.subr.mxu0 0.0
    %2640 = vmatpush2.xpose.msra.mxu0 0.0
    %2641 = vmatprep.subr.mxu0 0.0
    %2642 = vmatpush2.xpose.msra.mxu0 0.0
    %2643 = vmatprep.subr.mxu0 0.0
    %2644 = vmatpush2.xpose.msra.mxu0 0.0
    %2645 = vmatprep.subr.mxu0 0.0
    %2646 = vmatpush2.xpose.msra.mxu0 0.0
    %2647 = vmatprep.mubr.f32.mxu0 0.0
    %2648 = vmatmul.mubr.f32.gmra.mxu0 %v2579
    %v2649 = vpop.f32.mrf.mxu0
    %v2650 = vadd.f32 0.0, %v2649
    %v2651 = vpop.f32.mrf.mxu0
    %2652 = vdwg.mxu0
    %2653 = vrot.lane.b32.xlu0 %v1903, 112
    %v2654 = vpop.permute.xlu0 %2653
    %2655 = vrot.lane.b32.xlu0 %v1903, 80
    %v2656 = vpop.permute.xlu0 %2655
    %v2657 = vsel %vm72, %v2654, 0
    %v2659 = vsel %vm72, %v2656, 0
    %2661 = vmatprep.subr.mxu0 0.0
    %2662 = vmatpush1.xpose.msra.mxu0 0.0
    %2663 = vmatprep.subr.mxu0 0.0
    %2664 = vmatpush1.xpose.msra.mxu0 0.0
    %2665 = vmatprep.subr.mxu0 0.0
    %2666 = vmatpush1.xpose.msra.mxu0 0.0
    %2667 = vmatprep.subr.mxu0 0.0
    %2668 = vmatpush1.xpose.msra.mxu0 0.0
    %2669 = vmatprep.subr.mxu0 0.0
    %2670 = vmatpush1.xpose.msra.mxu0 0.0
    %2671 = vmatprep.subr.mxu0 0.0
    %2672 = vmatpush1.xpose.msra.mxu0 0.0
    %2673 = vmatprep.subr.mxu0 0.0
    %2674 = vmatpush1.xpose.msra.mxu0 0.0
    %2675 = vmatprep.subr.mxu0 0.0
    %2676 = vmatpush1.xpose.msra.mxu0 0.0
    %2677 = vmatprep.subr.mxu0 0.0
    %2678 = vmatpush1.xpose.msra.mxu0 0.0
    %2679 = vmatprep.subr.mxu0 0.0
    %2680 = vmatpush1.xpose.msra.mxu0 0.0
    %2681 = vmatprep.subr.mxu0 0.0
    %2682 = vmatpush1.xpose.msra.mxu0 0.0
    %2683 = vmatprep.subr.mxu0 0.0
    %2684 = vmatpush1.xpose.msra.mxu0 0.0
    %2685 = vmatprep.subr.mxu0 0.0
    %2686 = vmatpush1.xpose.msra.mxu0 0.0
    %2687 = vmatprep.subr.mxu0 0.0
    %2688 = vmatpush1.xpose.msra.mxu0 0.0
    %2689 = vmatprep.subr.mxu0 0.0
    %2690 = vmatpush1.xpose.msra.mxu0 0.0
    %2691 = vmatprep.subr.mxu0 0.0
    %2692 = vmatpush1.xpose.msra.mxu0 %v2659
    %2693 = vmatprep.subr.mxu0 0.0
    %2694 = vmatpush2.xpose.msra.mxu0 0.0
    %2695 = vmatprep.subr.mxu0 0.0
    %2696 = vmatpush2.xpose.msra.mxu0 0.0
    %2697 = vmatprep.subr.mxu0 0.0
    %2698 = vmatpush2.xpose.msra.mxu0 0.0
    %2699 = vmatprep.subr.mxu0 0.0
    %2700 = vmatpush2.xpose.msra.mxu0 0.0
    %2701 = vmatprep.subr.mxu0 0.0
    %2702 = vmatpush2.xpose.msra.mxu0 0.0
    %2703 = vmatprep.subr.mxu0 0.0
    %2704 = vmatpush2.xpose.msra.mxu0 0.0
    %2705 = vmatprep.subr.mxu0 0.0
    %2706 = vmatpush2.xpose.msra.mxu0 0.0
    %2707 = vmatprep.subr.mxu0 0.0
    %2708 = vmatpush2.xpose.msra.mxu0 0.0
    %2709 = vmatprep.subr.mxu0 0.0
    %2710 = vmatpush2.xpose.msra.mxu0 0.0
    %2711 = vmatprep.subr.mxu0 0.0
    %2712 = vmatpush2.xpose.msra.mxu0 0.0
    %2713 = vmatprep.subr.mxu0 0.0
    %2714 = vmatpush2.xpose.msra.mxu0 0.0
    %2715 = vmatprep.subr.mxu0 0.0
    %2716 = vmatpush2.xpose.msra.mxu0 0.0
    %2717 = vmatprep.subr.mxu0 0.0
    %2718 = vmatpush2.xpose.msra.mxu0 0.0
    %2719 = vmatprep.subr.mxu0 0.0
    %2720 = vmatpush2.xpose.msra.mxu0 0.0
    %2721 = vmatprep.subr.mxu0 0.0
    %2722 = vmatpush2.xpose.msra.mxu0 0.0
    %2723 = vmatprep.subr.mxu0 0.0
    %2724 = vmatpush2.xpose.msra.mxu0 0.0
    %2725 = vmatprep.mubr.f32.mxu0 0.0
    %2726 = vmatmul.mubr.f32.gmra.mxu0 %v2657
    %v2727 = vpop.f32.mrf.mxu0
    %v2728 = vadd.f32 0.0, %v2727
    %v2729 = vpop.f32.mrf.mxu0
    %2730 = vdwg.mxu0
    %2731 = vrot.lane.b32.xlu0 %v1908, 112
    %v2732 = vpop.permute.xlu0 %2731
    %2733 = vrot.lane.b32.xlu0 %v1908, 80
    %v2734 = vpop.permute.xlu0 %2733
    %v2735 = vsel %vm72, %v2732, 0
    %v2737 = vsel %vm72, %v2734, 0
    %2739 = vmatprep.subr.mxu0 0.0
    %2740 = vmatpush1.xpose.msra.mxu0 0.0
    %2741 = vmatprep.subr.mxu0 0.0
    %2742 = vmatpush1.xpose.msra.mxu0 0.0
    %2743 = vmatprep.subr.mxu0 0.0
    %2744 = vmatpush1.xpose.msra.mxu0 0.0
    %2745 = vmatprep.subr.mxu0 0.0
    %2746 = vmatpush1.xpose.msra.mxu0 0.0
    %2747 = vmatprep.subr.mxu0 0.0
    %2748 = vmatpush1.xpose.msra.mxu0 0.0
    %2749 = vmatprep.subr.mxu0 0.0
    %2750 = vmatpush1.xpose.msra.mxu0 0.0
    %2751 = vmatprep.subr.mxu0 0.0
    %2752 = vmatpush1.xpose.msra.mxu0 0.0
    %2753 = vmatprep.subr.mxu0 0.0
    %2754 = vmatpush1.xpose.msra.mxu0 0.0
    %2755 = vmatprep.subr.mxu0 0.0
    %2756 = vmatpush1.xpose.msra.mxu0 0.0
    %2757 = vmatprep.subr.mxu0 0.0
    %2758 = vmatpush1.xpose.msra.mxu0 0.0
    %2759 = vmatprep.subr.mxu0 0.0
    %2760 = vmatpush1.xpose.msra.mxu0 0.0
    %2761 = vmatprep.subr.mxu0 0.0
    %2762 = vmatpush1.xpose.msra.mxu0 0.0
    %2763 = vmatprep.subr.mxu0 0.0
    %2764 = vmatpush1.xpose.msra.mxu0 0.0
    %2765 = vmatprep.subr.mxu0 0.0
    %2766 = vmatpush1.xpose.msra.mxu0 0.0
    %2767 = vmatprep.subr.mxu0 0.0
    %2768 = vmatpush1.xpose.msra.mxu0 0.0
    %2769 = vmatprep.subr.mxu0 0.0
    %2770 = vmatpush1.xpose.msra.mxu0 %v2737
    %2771 = vmatprep.subr.mxu0 0.0
    %2772 = vmatpush2.xpose.msra.mxu0 0.0
    %2773 = vmatprep.subr.mxu0 0.0
    %2774 = vmatpush2.xpose.msra.mxu0 0.0
    %2775 = vmatprep.subr.mxu0 0.0
    %2776 = vmatpush2.xpose.msra.mxu0 0.0
    %2777 = vmatprep.subr.mxu0 0.0
    %2778 = vmatpush2.xpose.msra.mxu0 0.0
    %2779 = vmatprep.subr.mxu0 0.0
    %2780 = vmatpush2.xpose.msra.mxu0 0.0
    %2781 = vmatprep.subr.mxu0 0.0
    %2782 = vmatpush2.xpose.msra.mxu0 0.0
    %2783 = vmatprep.subr.mxu0 0.0
    %2784 = vmatpush2.xpose.msra.mxu0 0.0
    %2785 = vmatprep.subr.mxu0 0.0
    %2786 = vmatpush2.xpose.msra.mxu0 0.0
    %2787 = vmatprep.subr.mxu0 0.0
    %2788 = vmatpush2.xpose.msra.mxu0 0.0
    %2789 = vmatprep.subr.mxu0 0.0
    %2790 = vmatpush2.xpose.msra.mxu0 0.0
    %2791 = vmatprep.subr.mxu0 0.0
    %2792 = vmatpush2.xpose.msra.mxu0 0.0
    %2793 = vmatprep.subr.mxu0 0.0
    %2794 = vmatpush2.xpose.msra.mxu0 0.0
    %2795 = vmatprep.subr.mxu0 0.0
    %2796 = vmatpush2.xpose.msra.mxu0 0.0
    %2797 = vmatprep.subr.mxu0 0.0
    %2798 = vmatpush2.xpose.msra.mxu0 0.0
    %2799 = vmatprep.subr.mxu0 0.0
    %2800 = vmatpush2.xpose.msra.mxu0 0.0
    %2801 = vmatprep.subr.mxu0 0.0
    %2802 = vmatpush2.xpose.msra.mxu0 0.0
    %2803 = vmatprep.mubr.f32.mxu0 0.0
    %2804 = vmatmul.mubr.f32.gmra.mxu0 %v2735
    %v2805 = vpop.f32.mrf.mxu0
    %v2806 = vadd.f32 0.0, %v2805
    %v2807 = vpop.f32.mrf.mxu0
    %2808 = vdwg.mxu0
    %2809 = vrot.lane.b32.xlu0 %v1913, 112
    %v2810 = vpop.permute.xlu0 %2809
    %2811 = vrot.lane.b32.xlu0 %v1913, 80
    %v2812 = vpop.permute.xlu0 %2811
    %v2813 = vsel %vm72, %v2810, 0
    %v2815 = vsel %vm72, %v2812, 0
    %2817 = vmatprep.subr.mxu0 0.0
    %2818 = vmatpush1.xpose.msra.mxu0 0.0
    %2819 = vmatprep.subr.mxu0 0.0
    %2820 = vmatpush1.xpose.msra.mxu0 0.0
    %2821 = vmatprep.subr.mxu0 0.0
    %2822 = vmatpush1.xpose.msra.mxu0 0.0
    %2823 = vmatprep.subr.mxu0 0.0
    %2824 = vmatpush1.xpose.msra.mxu0 0.0
    %2825 = vmatprep.subr.mxu0 0.0
    %2826 = vmatpush1.xpose.msra.mxu0 0.0
    %2827 = vmatprep.subr.mxu0 0.0
    %2828 = vmatpush1.xpose.msra.mxu0 0.0
    %2829 = vmatprep.subr.mxu0 0.0
    %2830 = vmatpush1.xpose.msra.mxu0 0.0
    %2831 = vmatprep.subr.mxu0 0.0
    %2832 = vmatpush1.xpose.msra.mxu0 0.0
    %2833 = vmatprep.subr.mxu0 0.0
    %2834 = vmatpush1.xpose.msra.mxu0 0.0
    %2835 = vmatprep.subr.mxu0 0.0
    %2836 = vmatpush1.xpose.msra.mxu0 0.0
    %2837 = vmatprep.subr.mxu0 0.0
    %2838 = vmatpush1.xpose.msra.mxu0 0.0
    %2839 = vmatprep.subr.mxu0 0.0
    %2840 = vmatpush1.xpose.msra.mxu0 0.0
    %2841 = vmatprep.subr.mxu0 0.0
    %2842 = vmatpush1.xpose.msra.mxu0 0.0
    %2843 = vmatprep.subr.mxu0 0.0
    %2844 = vmatpush1.xpose.msra.mxu0 0.0
    %2845 = vmatprep.subr.mxu0 0.0
    %2846 = vmatpush1.xpose.msra.mxu0 0.0
    %2847 = vmatprep.subr.mxu0 0.0
    %2848 = vmatpush1.xpose.msra.mxu0 %v2815
    %2849 = vmatprep.subr.mxu0 0.0
    %2850 = vmatpush2.xpose.msra.mxu0 0.0
    %2851 = vmatprep.subr.mxu0 0.0
    %2852 = vmatpush2.xpose.msra.mxu0 0.0
    %2853 = vmatprep.subr.mxu0 0.0
    %2854 = vmatpush2.xpose.msra.mxu0 0.0
    %2855 = vmatprep.subr.mxu0 0.0
    %2856 = vmatpush2.xpose.msra.mxu0 0.0
    %2857 = vmatprep.subr.mxu0 0.0
    %2858 = vmatpush2.xpose.msra.mxu0 0.0
    %2859 = vmatprep.subr.mxu0 0.0
    %2860 = vmatpush2.xpose.msra.mxu0 0.0
    %2861 = vmatprep.subr.mxu0 0.0
    %2862 = vmatpush2.xpose.msra.mxu0 0.0
    %2863 = vmatprep.subr.mxu0 0.0
    %2864 = vmatpush2.xpose.msra.mxu0 0.0
    %2865 = vmatprep.subr.mxu0 0.0
    %2866 = vmatpush2.xpose.msra.mxu0 0.0
    %2867 = vmatprep.subr.mxu0 0.0
    %2868 = vmatpush2.xpose.msra.mxu0 0.0
    %2869 = vmatprep.subr.mxu0 0.0
    %2870 = vmatpush2.xpose.msra.mxu0 0.0
    %2871 = vmatprep.subr.mxu0 0.0
    %2872 = vmatpush2.xpose.msra.mxu0 0.0
    %2873 = vmatprep.subr.mxu0 0.0
    %2874 = vmatpush2.xpose.msra.mxu0 0.0
    %2875 = vmatprep.subr.mxu0 0.0
    %2876 = vmatpush2.xpose.msra.mxu0 0.0
    %2877 = vmatprep.subr.mxu0 0.0
    %2878 = vmatpush2.xpose.msra.mxu0 0.0
    %2879 = vmatprep.subr.mxu0 0.0
    %2880 = vmatpush2.xpose.msra.mxu0 0.0
    %2881 = vmatprep.mubr.f32.mxu0 0.0
    %2882 = vmatmul.mubr.f32.gmra.mxu0 %v2813
    %v2883 = vpop.f32.mrf.mxu0
    %v2884 = vadd.f32 0.0, %v2883
    %v2885 = vpop.f32.mrf.mxu0
    %2886 = vdwg.mxu0
    %v2887 = vsel %vm587, %v2650, -inf
    %2888 = vmax.xlane.f32.xlu0 %v2887
    %v2889 = vpop.xlane.xlu0 %2888
    %v2890 = vsel %vm587, %v2728, -inf
    %2891 = vmax.xlane.f32.xlu0 %v2890
    %v2892 = vpop.xlane.xlu0 %2891
    %v2893 = vsel %vm587, %v2806, -inf
    %2894 = vmax.xlane.f32.xlu0 %v2893
    %v2895 = vpop.xlane.xlu0 %2894
    %v2896 = vsel %vm587, %v2884, -inf
    %2897 = vmax.xlane.f32.xlu0 %v2896
    %v2898 = vpop.xlane.xlu0 %2897
    %v2899 = vsub.f32 %v2650, %v2889
    %v2900 = vsub.f32 %v2728, %v2892
    %v2901 = vsub.f32 %v2806, %v2895
    %v2902 = vsub.f32 %v2884, %v2898
    %v2903 = vmul.f32 %v2899, 1.442695
    %v2904 = vpow.pop %v2903
    %v2905 = vmul.f32 %v2900, 1.442695
    %v2906 = vpow.pop %v2905
    %v2907 = vmul.f32 %v2901, 1.442695
    %v2908 = vpow.pop %v2907
    %v2909 = vmul.f32 %v2902, 1.442695
    %v2910 = vpow.pop %v2909
    %v2911 = vsel %vm587, %v2904, 0.0
    %2912 = vadd.xlane.f32.xlu0 %v2911
    %v2913 = vpop.xlane.xlu0 %2912
    %v2914 = vsel %vm587, %v2906, 0.0
    %2915 = vadd.xlane.f32.xlu0 %v2914
    %v2916 = vpop.xlane.xlu0 %2915
    %v2917 = vsel %vm587, %v2908, 0.0
    %2918 = vadd.xlane.f32.xlu0 %v2917
    %v2919 = vpop.xlane.xlu0 %2918
    %v2920 = vsel %vm587, %v2910, 0.0
    %2921 = vadd.xlane.f32.xlu0 %v2920
    %v2922 = vpop.xlane.xlu0 %2921
    %v2923 = vrcp.pop %v2913
    %v2924 = vrcp.pop %v2916
    %v2925 = vrcp.pop %v2919
    %v2926 = vrcp.pop %v2922
    %v2927 = vmul.f32 %v2904, %v2923
    %v2928 = vmul.f32 %v2906, %v2924
    %v2929 = vmul.f32 %v2908, %v2925
    %v2930 = vmul.f32 %v2910, %v2926
    %2931 = vrot.lane.b32.xlu0 %v1898, 48
    %v2932 = vpop.permute.xlu0 %2931
    %v2935 = vsel %vm587, %v2927, 0
    %2937 = vmatprep.subr.mxu0 0.0
    %2938 = vmatpush1.msra.mxu0 0.0
    %2939 = vmatprep.subr.mxu0 0.0
    %2940 = vmatpush1.msra.mxu0 0.0
    %2941 = vmatprep.subr.mxu0 0.0
    %2942 = vmatpush1.msra.mxu0 0.0
    %2943 = vmatprep.subr.mxu0 0.0
    %2944 = vmatpush1.msra.mxu0 0.0
    %2945 = vmatprep.subr.mxu0 0.0
    %2946 = vmatpush1.msra.mxu0 0.0
    %2947 = vmatprep.subr.mxu0 0.0
    %2948 = vmatpush1.msra.mxu0 0.0
    %2949 = vmatprep.subr.mxu0 0.0
    %2950 = vmatpush1.msra.mxu0 0.0
    %2951 = vmatprep.subr.mxu0 0.0
    %2952 = vmatpush1.msra.mxu0 0.0
    %2953 = vmatprep.subr.mxu0 0.0
    %2954 = vmatpush1.msra.mxu0 0.0
    %2955 = vmatprep.subr.mxu0 0.0
    %2956 = vmatpush1.msra.mxu0 0.0
    %2957 = vmatprep.subr.mxu0 0.0
    %2958 = vmatpush1.msra.mxu0 0.0
    %2959 = vmatprep.subr.mxu0 0.0
    %2960 = vmatpush1.msra.mxu0 0.0
    %2961 = vmatprep.subr.mxu0 0.0
    %2962 = vmatpush1.msra.mxu0 0.0
    %2963 = vmatprep.subr.mxu0 0.0
    %2964 = vmatpush1.msra.mxu0 0.0
    %2965 = vmatprep.subr.mxu0 0.0
    %2966 = vmatpush1.msra.mxu0 0.0
    %2967 = vmatprep.subr.mxu0 0.0
    %2968 = vmatpush1.msra.mxu0 %v2932
    %2969 = vmatprep.subr.mxu0 0.0
    %2970 = vmatpush2.msra.mxu0 0.0
    %2971 = vmatprep.subr.mxu0 0.0
    %2972 = vmatpush2.msra.mxu0 0.0
    %2973 = vmatprep.subr.mxu0 0.0
    %2974 = vmatpush2.msra.mxu0 0.0
    %2975 = vmatprep.subr.mxu0 0.0
    %2976 = vmatpush2.msra.mxu0 0.0
    %2977 = vmatprep.subr.mxu0 0.0
    %2978 = vmatpush2.msra.mxu0 0.0
    %2979 = vmatprep.subr.mxu0 0.0
    %2980 = vmatpush2.msra.mxu0 0.0
    %2981 = vmatprep.subr.mxu0 0.0
    %2982 = vmatpush2.msra.mxu0 0.0
    %2983 = vmatprep.subr.mxu0 0.0
    %2984 = vmatpush2.msra.mxu0 0.0
    %2985 = vmatprep.subr.mxu0 0.0
    %2986 = vmatpush2.msra.mxu0 0.0
    %2987 = vmatprep.subr.mxu0 0.0
    %2988 = vmatpush2.msra.mxu0 0.0
    %2989 = vmatprep.subr.mxu0 0.0
    %2990 = vmatpush2.msra.mxu0 0.0
    %2991 = vmatprep.subr.mxu0 0.0
    %2992 = vmatpush2.msra.mxu0 0.0
    %2993 = vmatprep.subr.mxu0 0.0
    %2994 = vmatpush2.msra.mxu0 0.0
    %2995 = vmatprep.subr.mxu0 0.0
    %2996 = vmatpush2.msra.mxu0 0.0
    %2997 = vmatprep.subr.mxu0 0.0
    %2998 = vmatpush2.msra.mxu0 0.0
    %2999 = vmatprep.subr.mxu0 0.0
    %3000 = vmatpush2.msra.mxu0 0.0
    %3001 = vmatprep.mubr.f32.mxu0 0.0
    %3002 = vmatmul.mubr.f32.gmra.mxu0 %v2935
    %v3003 = vpop.f32.mrf.mxu0
    %v3004 = vadd.f32 0.0, %v3003
    %v3005 = vpop.f32.mrf.mxu0
    %3006 = vdwg.mxu0
    %3007 = vrot.lane.b32.xlu0 %v1903, 48
    %v3008 = vpop.permute.xlu0 %3007
    %v3011 = vsel %vm587, %v2928, 0
    %3013 = vmatprep.subr.mxu0 0.0
    %3014 = vmatpush1.msra.mxu0 0.0
    %3015 = vmatprep.subr.mxu0 0.0
    %3016 = vmatpush1.msra.mxu0 0.0
    %3017 = vmatprep.subr.mxu0 0.0
    %3018 = vmatpush1.msra.mxu0 0.0
    %3019 = vmatprep.subr.mxu0 0.0
    %3020 = vmatpush1.msra.mxu0 0.0
    %3021 = vmatprep.subr.mxu0 0.0
    %3022 = vmatpush1.msra.mxu0 0.0
    %3023 = vmatprep.subr.mxu0 0.0
    %3024 = vmatpush1.msra.mxu0 0.0
    %3025 = vmatprep.subr.mxu0 0.0
    %3026 = vmatpush1.msra.mxu0 0.0
    %3027 = vmatprep.subr.mxu0 0.0
    %3028 = vmatpush1.msra.mxu0 0.0
    %3029 = vmatprep.subr.mxu0 0.0
    %3030 = vmatpush1.msra.mxu0 0.0
    %3031 = vmatprep.subr.mxu0 0.0
    %3032 = vmatpush1.msra.mxu0 0.0
    %3033 = vmatprep.subr.mxu0 0.0
    %3034 = vmatpush1.msra.mxu0 0.0
    %3035 = vmatprep.subr.mxu0 0.0
    %3036 = vmatpush1.msra.mxu0 0.0
    %3037 = vmatprep.subr.mxu0 0.0
    %3038 = vmatpush1.msra.mxu0 0.0
    %3039 = vmatprep.subr.mxu0 0.0
    %3040 = vmatpush1.msra.mxu0 0.0
    %3041 = vmatprep.subr.mxu0 0.0
    %3042 = vmatpush1.msra.mxu0 0.0
    %3043 = vmatprep.subr.mxu0 0.0
    %3044 = vmatpush1.msra.mxu0 %v3008
    %3045 = vmatprep.subr.mxu0 0.0
    %3046 = vmatpush2.msra.mxu0 0.0
    %3047 = vmatprep.subr.mxu0 0.0
    %3048 = vmatpush2.msra.mxu0 0.0
    %3049 = vmatprep.subr.mxu0 0.0
    %3050 = vmatpush2.msra.mxu0 0.0
    %3051 = vmatprep.subr.mxu0 0.0
    %3052 = vmatpush2.msra.mxu0 0.0
    %3053 = vmatprep.subr.mxu0 0.0
    %3054 = vmatpush2.msra.mxu0 0.0
    %3055 = vmatprep.subr.mxu0 0.0
    %3056 = vmatpush2.msra.mxu0 0.0
    %3057 = vmatprep.subr.mxu0 0.0
    %3058 = vmatpush2.msra.mxu0 0.0
    %3059 = vmatprep.subr.mxu0 0.0
    %3060 = vmatpush2.msra.mxu0 0.0
    %3061 = vmatprep.subr.mxu0 0.0
    %3062 = vmatpush2.msra.mxu0 0.0
    %3063 = vmatprep.subr.mxu0 0.0
    %3064 = vmatpush2.msra.mxu0 0.0
    %3065 = vmatprep.subr.mxu0 0.0
    %3066 = vmatpush2.msra.mxu0 0.0
    %3067 = vmatprep.subr.mxu0 0.0
    %3068 = vmatpush2.msra.mxu0 0.0
    %3069 = vmatprep.subr.mxu0 0.0
    %3070 = vmatpush2.msra.mxu0 0.0
    %3071 = vmatprep.subr.mxu0 0.0
    %3072 = vmatpush2.msra.mxu0 0.0
    %3073 = vmatprep.subr.mxu0 0.0
    %3074 = vmatpush2.msra.mxu0 0.0
    %3075 = vmatprep.subr.mxu0 0.0
    %3076 = vmatpush2.msra.mxu0 0.0
    %3077 = vmatprep.mubr.f32.mxu0 0.0
    %3078 = vmatmul.mubr.f32.gmra.mxu0 %v3011
    %v3079 = vpop.f32.mrf.mxu0
    %v3080 = vadd.f32 0.0, %v3079
    %v3081 = vpop.f32.mrf.mxu0
    %3082 = vdwg.mxu0
    %3083 = vrot.lane.b32.xlu0 %v1908, 48
    %v3084 = vpop.permute.xlu0 %3083
    %v3087 = vsel %vm587, %v2929, 0
    %3089 = vmatprep.subr.mxu0 0.0
    %3090 = vmatpush1.msra.mxu0 0.0
    %3091 = vmatprep.subr.mxu0 0.0
    %3092 = vmatpush1.msra.mxu0 0.0
    %3093 = vmatprep.subr.mxu0 0.0
    %3094 = vmatpush1.msra.mxu0 0.0
    %3095 = vmatprep.subr.mxu0 0.0
    %3096 = vmatpush1.msra.mxu0 0.0
    %3097 = vmatprep.subr.mxu0 0.0
    %3098 = vmatpush1.msra.mxu0 0.0
    %3099 = vmatprep.subr.mxu0 0.0
    %3100 = vmatpush1.msra.mxu0 0.0
    %3101 = vmatprep.subr.mxu0 0.0
    %3102 = vmatpush1.msra.mxu0 0.0
    %3103 = vmatprep.subr.mxu0 0.0
    %3104 = vmatpush1.msra.mxu0 0.0
    %3105 = vmatprep.subr.mxu0 0.0
    %3106 = vmatpush1.msra.mxu0 0.0
    %3107 = vmatprep.subr.mxu0 0.0
    %3108 = vmatpush1.msra.mxu0 0.0
    %3109 = vmatprep.subr.mxu0 0.0
    %3110 = vmatpush1.msra.mxu0 0.0
    %3111 = vmatprep.subr.mxu0 0.0
    %3112 = vmatpush1.msra.mxu0 0.0
    %3113 = vmatprep.subr.mxu0 0.0
    %3114 = vmatpush1.msra.mxu0 0.0
    %3115 = vmatprep.subr.mxu0 0.0
    %3116 = vmatpush1.msra.mxu0 0.0
    %3117 = vmatprep.subr.mxu0 0.0
    %3118 = vmatpush1.msra.mxu0 0.0
    %3119 = vmatprep.subr.mxu0 0.0
    %3120 = vmatpush1.msra.mxu0 %v3084
    %3121 = vmatprep.subr.mxu0 0.0
    %3122 = vmatpush2.msra.mxu0 0.0
    %3123 = vmatprep.subr.mxu0 0.0
    %3124 = vmatpush2.msra.mxu0 0.0
    %3125 = vmatprep.subr.mxu0 0.0
    %3126 = vmatpush2.msra.mxu0 0.0
    %3127 = vmatprep.subr.mxu0 0.0
    %3128 = vmatpush2.msra.mxu0 0.0
    %3129 = vmatprep.subr.mxu0 0.0
    %3130 = vmatpush2.msra.mxu0 0.0
    %3131 = vmatprep.subr.mxu0 0.0
    %3132 = vmatpush2.msra.mxu0 0.0
    %3133 = vmatprep.subr.mxu0 0.0
    %3134 = vmatpush2.msra.mxu0 0.0
    %3135 = vmatprep.subr.mxu0 0.0
    %3136 = vmatpush2.msra.mxu0 0.0
    %3137 = vmatprep.subr.mxu0 0.0
    %3138 = vmatpush2.msra.mxu0 0.0
    %3139 = vmatprep.subr.mxu0 0.0
    %3140 = vmatpush2.msra.mxu0 0.0
    %3141 = vmatprep.subr.mxu0 0.0
    %3142 = vmatpush2.msra.mxu0 0.0
    %3143 = vmatprep.subr.mxu0 0.0
    %3144 = vmatpush2.msra.mxu0 0.0
    %3145 = vmatprep.subr.mxu0 0.0
    %3146 = vmatpush2.msra.mxu0 0.0
    %3147 = vmatprep.subr.mxu0 0.0
    %3148 = vmatpush2.msra.mxu0 0.0
    %3149 = vmatprep.subr.mxu0 0.0
    %3150 = vmatpush2.msra.mxu0 0.0
    %3151 = vmatprep.subr.mxu0 0.0
    %3152 = vmatpush2.msra.mxu0 0.0
    %3153 = vmatprep.mubr.f32.mxu0 0.0
    %3154 = vmatmul.mubr.f32.gmra.mxu0 %v3087
    %v3155 = vpop.f32.mrf.mxu0
    %v3156 = vadd.f32 0.0, %v3155
    %v3157 = vpop.f32.mrf.mxu0
    %3158 = vdwg.mxu0
    %3159 = vrot.lane.b32.xlu0 %v1913, 48
    %v3160 = vpop.permute.xlu0 %3159
    %v3163 = vsel %vm587, %v2930, 0
    %3165 = vmatprep.subr.mxu0 0.0
    %3166 = vmatpush1.msra.mxu0 0.0
    %3167 = vmatprep.subr.mxu0 0.0
    %3168 = vmatpush1.msra.mxu0 0.0
    %3169 = vmatprep.subr.mxu0 0.0
    %3170 = vmatpush1.msra.mxu0 0.0
    %3171 = vmatprep.subr.mxu0 0.0
    %3172 = vmatpush1.msra.mxu0 0.0
    %3173 = vmatprep.subr.mxu0 0.0
    %3174 = vmatpush1.msra.mxu0 0.0
    %3175 = vmatprep.subr.mxu0 0.0
    %3176 = vmatpush1.msra.mxu0 0.0
    %3177 = vmatprep.subr.mxu0 0.0
    %3178 = vmatpush1.msra.mxu0 0.0
    %3179 = vmatprep.subr.mxu0 0.0
    %3180 = vmatpush1.msra.mxu0 0.0
    %3181 = vmatprep.subr.mxu0 0.0
    %3182 = vmatpush1.msra.mxu0 0.0
    %3183 = vmatprep.subr.mxu0 0.0
    %3184 = vmatpush1.msra.mxu0 0.0
    %3185 = vmatprep.subr.mxu0 0.0
    %3186 = vmatpush1.msra.mxu0 0.0
    %3187 = vmatprep.subr.mxu0 0.0
    %3188 = vmatpush1.msra.mxu0 0.0
    %3189 = vmatprep.subr.mxu0 0.0
    %3190 = vmatpush1.msra.mxu0 0.0
    %3191 = vmatprep.subr.mxu0 0.0
    %3192 = vmatpush1.msra.mxu0 0.0
    %3193 = vmatprep.subr.mxu0 0.0
    %3194 = vmatpush1.msra.mxu0 0.0
    %3195 = vmatprep.subr.mxu0 0.0
    %3196 = vmatpush1.msra.mxu0 %v3160
    %3197 = vmatprep.subr.mxu0 0.0
    %3198 = vmatpush2.msra.mxu0 0.0
    %3199 = vmatprep.subr.mxu0 0.0
    %3200 = vmatpush2.msra.mxu0 0.0
    %3201 = vmatprep.subr.mxu0 0.0
    %3202 = vmatpush2.msra.mxu0 0.0
    %3203 = vmatprep.subr.mxu0 0.0
    %3204 = vmatpush2.msra.mxu0 0.0
    %3205 = vmatprep.subr.mxu0 0.0
    %3206 = vmatpush2.msra.mxu0 0.0
    %3207 = vmatprep.subr.mxu0 0.0
    %3208 = vmatpush2.msra.mxu0 0.0
    %3209 = vmatprep.subr.mxu0 0.0
    %3210 = vmatpush2.msra.mxu0 0.0
    %3211 = vmatprep.subr.mxu0 0.0
    %3212 = vmatpush2.msra.mxu0 0.0
    %3213 = vmatprep.subr.mxu0 0.0
    %3214 = vmatpush2.msra.mxu0 0.0
    %3215 = vmatprep.subr.mxu0 0.0
    %3216 = vmatpush2.msra.mxu0 0.0
    %3217 = vmatprep.subr.mxu0 0.0
    %3218 = vmatpush2.msra.mxu0 0.0
    %3219 = vmatprep.subr.mxu0 0.0
    %3220 = vmatpush2.msra.mxu0 0.0
    %3221 = vmatprep.subr.mxu0 0.0
    %3222 = vmatpush2.msra.mxu0 0.0
    %3223 = vmatprep.subr.mxu0 0.0
    %3224 = vmatpush2.msra.mxu0 0.0
    %3225 = vmatprep.subr.mxu0 0.0
    %3226 = vmatpush2.msra.mxu0 0.0
    %3227 = vmatprep.subr.mxu0 0.0
    %3228 = vmatpush2.msra.mxu0 0.0
    %3229 = vmatprep.mubr.f32.mxu0 0.0
    %3230 = vmatmul.mubr.f32.gmra.mxu0 %v3163
    %v3231 = vpop.f32.mrf.mxu0
    %v3232 = vadd.f32 0.0, %v3231
    %v3233 = vpop.f32.mrf.mxu0
    %3234 = vdwg.mxu0
    %s3235 = scalar_lea.vmem %s6, 48
    %v3236 = vld [vmem:[%s3235] sm:$0xff]
    %v3237 = vld [vmem:[%s3235 + $0x8] sm:$0xff]
    %v3239 = vsel %vm72, %v3004, 0
    %v3242 = vsel %vm72, %v3080, 0
    %v3245 = vsel %vm72, %v3156, 0
    %v3248 = vsel %vm72, %v3232, 0
    %3250 = vmatprep.subr.mxu0 0.0
    %3251 = vmatpush1.msra.mxu0 0.0
    %3252 = vmatprep.subr.mxu0 0.0
    %3253 = vmatpush1.msra.mxu0 0.0
    %3254 = vmatprep.subr.mxu0 0.0
    %3255 = vmatpush1.msra.mxu0 0.0
    %3256 = vmatprep.subr.mxu0 0.0
    %3257 = vmatpush1.msra.mxu0 0.0
    %3258 = vmatprep.subr.mxu0 0.0
    %3259 = vmatpush1.msra.mxu0 0.0
    %3260 = vmatprep.subr.mxu0 0.0
    %3261 = vmatpush1.msra.mxu0 0.0
    %3262 = vmatprep.subr.mxu0 0.0
    %3263 = vmatpush1.msra.mxu0 0.0
    %3264 = vmatprep.subr.mxu0 0.0
    %3265 = vmatpush1.msra.mxu0 0.0
    %3266 = vmatprep.subr.mxu0 0.0
    %3267 = vmatpush1.msra.mxu0 0.0
    %3268 = vmatprep.subr.mxu0 0.0
    %3269 = vmatpush1.msra.mxu0 0.0
    %3270 = vmatprep.subr.mxu0 0.0
    %3271 = vmatpush1.msra.mxu0 0.0
    %3272 = vmatprep.subr.mxu0 0.0
    %3273 = vmatpush1.msra.mxu0 0.0
    %3274 = vmatprep.subr.mxu0 0.0
    %3275 = vmatpush1.msra.mxu0 0.0
    %3276 = vmatprep.subr.mxu0 0.0
    %3277 = vmatpush1.msra.mxu0 0.0
    %3278 = vmatprep.subr.mxu0 0.0
    %3279 = vmatpush1.msra.mxu0 %v3237
    %3280 = vmatprep.subr.mxu0 0.0
    %3281 = vmatpush1.msra.mxu0 %v3236
    %3282 = vmatprep.subr.mxu0 0.0
    %3283 = vmatpush2.msra.mxu0 0.0
    %3284 = vmatprep.subr.mxu0 0.0
    %3285 = vmatpush2.msra.mxu0 0.0
    %3286 = vmatprep.subr.mxu0 0.0
    %3287 = vmatpush2.msra.mxu0 0.0
    %3288 = vmatprep.subr.mxu0 0.0
    %3289 = vmatpush2.msra.mxu0 0.0
    %3290 = vmatprep.subr.mxu0 0.0
    %3291 = vmatpush2.msra.mxu0 0.0
    %3292 = vmatprep.subr.mxu0 0.0
    %3293 = vmatpush2.msra.mxu0 0.0
    %3294 = vmatprep.subr.mxu0 0.0
    %3295 = vmatpush2.msra.mxu0 0.0
    %3296 = vmatprep.subr.mxu0 0.0
    %3297 = vmatpush2.msra.mxu0 0.0
    %3298 = vmatprep.subr.mxu0 0.0
    %3299 = vmatpush2.msra.mxu0 0.0
    %3300 = vmatprep.subr.mxu0 0.0
    %3301 = vmatpush2.msra.mxu0 0.0
    %3302 = vmatprep.subr.mxu0 0.0
    %3303 = vmatpush2.msra.mxu0 0.0
    %3304 = vmatprep.subr.mxu0 0.0
    %3305 = vmatpush2.msra.mxu0 0.0
    %3306 = vmatprep.subr.mxu0 0.0
    %3307 = vmatpush2.msra.mxu0 0.0
    %3308 = vmatprep.subr.mxu0 0.0
    %3309 = vmatpush2.msra.mxu0 0.0
    %3310 = vmatprep.subr.mxu0 0.0
    %3311 = vmatpush2.msra.mxu0 0.0
    %3312 = vmatprep.subr.mxu0 0.0
    %3313 = vmatpush2.msra.mxu0 0.0
    %3314 = vmatprep.mubr.f32.mxu0 0.0
    %3315 = vmatmul.mubr.f32.gmra.mxu0 %v3239
    %v3316 = vpop.f32.mrf.mxu0
    %v3317 = vadd.f32 0.0, %v3316
    %v3318 = vpop.f32.mrf.mxu0
    %3319 = vmatprep.mubr.f32.mxu0 0.0
    %3320 = vmatmul.mubr.f32.gmra.mxu0 %v3242
    %v3321 = vpop.f32.mrf.mxu0
    %v3322 = vadd.f32 0.0, %v3321
    %v3323 = vpop.f32.mrf.mxu0
    %3324 = vmatprep.mubr.f32.mxu0 0.0
    %3325 = vmatmul.mubr.f32.gmra.mxu0 %v3245
    %v3326 = vpop.f32.mrf.mxu0
    %v3327 = vadd.f32 0.0, %v3326
    %v3328 = vpop.f32.mrf.mxu0
    %3329 = vmatprep.mubr.f32.mxu0 0.0
    %3330 = vmatmul.mubr.f32.gmra.mxu0 %v3248
    %v3331 = vpop.f32.mrf.mxu0
    %v3332 = vadd.f32 0.0, %v3331
    %v3333 = vpop.f32.mrf.mxu0
    %3334 = vdwg.mxu0
    %v3336 = vsel %vm72, %v2341, 0
    %v3339 = vsel %vm72, %v2417, 0
    %v3342 = vsel %vm72, %v2493, 0
    %v3345 = vsel %vm72, %v2569, 0
    %3347 = vmatprep.subr.mxu0 0.0
    %3348 = vmatpush1.msra.mxu0 0.0
    %3349 = vmatprep.subr.mxu0 0.0
    %3350 = vmatpush1.msra.mxu0 0.0
    %3351 = vmatprep.subr.mxu0 0.0
    %3352 = vmatpush1.msra.mxu0 0.0
    %3353 = vmatprep.subr.mxu0 0.0
    %3354 = vmatpush1.msra.mxu0 0.0
    %3355 = vmatprep.subr.mxu0 0.0
    %3356 = vmatpush1.msra.mxu0 0.0
    %3357 = vmatprep.subr.mxu0 0.0
    %3358 = vmatpush1.msra.mxu0 0.0
    %3359 = vmatprep.subr.mxu0 0.0
    %3360 = vmatpush1.msra.mxu0 0.0
    %3361 = vmatprep.subr.mxu0 0.0
    %3362 = vmatpush1.msra.mxu0 0.0
    %3363 = vmatprep.subr.mxu0 0.0
    %3364 = vmatpush1.msra.mxu0 0.0
    %3365 = vmatprep.subr.mxu0 0.0
    %3366 = vmatpush1.msra.mxu0 0.0
    %3367 = vmatprep.subr.mxu0 0.0
    %3368 = vmatpush1.msra.mxu0 0.0
    %3369 = vmatprep.subr.mxu0 0.0
    %3370 = vmatpush1.msra.mxu0 0.0
    %3371 = vmatprep.subr.mxu0 0.0
    %3372 = vmatpush1.msra.mxu0 0.0
    %3373 = vmatprep.subr.mxu0 0.0
    %3374 = vmatpush1.msra.mxu0 0.0
    %3375 = vmatprep.subr.mxu0 0.0
    %3376 = vmatpush1.msra.mxu0 %v2574
    %3377 = vmatprep.subr.mxu0 0.0
    %3378 = vmatpush1.msra.mxu0 %v2573
    %3379 = vmatprep.subr.mxu0 0.0
    %3380 = vmatpush2.msra.mxu0 0.0
    %3381 = vmatprep.subr.mxu0 0.0
    %3382 = vmatpush2.msra.mxu0 0.0
    %3383 = vmatprep.subr.mxu0 0.0
    %3384 = vmatpush2.msra.mxu0 0.0
    %3385 = vmatprep.subr.mxu0 0.0
    %3386 = vmatpush2.msra.mxu0 0.0
    %3387 = vmatprep.subr.mxu0 0.0
    %3388 = vmatpush2.msra.mxu0 0.0
    %3389 = vmatprep.subr.mxu0 0.0
    %3390 = vmatpush2.msra.mxu0 0.0
    %3391 = vmatprep.subr.mxu0 0.0
    %3392 = vmatpush2.msra.mxu0 0.0
    %3393 = vmatprep.subr.mxu0 0.0
    %3394 = vmatpush2.msra.mxu0 0.0
    %3395 = vmatprep.subr.mxu0 0.0
    %3396 = vmatpush2.msra.mxu0 0.0
    %3397 = vmatprep.subr.mxu0 0.0
    %3398 = vmatpush2.msra.mxu0 0.0
    %3399 = vmatprep.subr.mxu0 0.0
    %3400 = vmatpush2.msra.mxu0 0.0
    %3401 = vmatprep.subr.mxu0 0.0
    %3402 = vmatpush2.msra.mxu0 0.0
    %3403 = vmatprep.subr.mxu0 0.0
    %3404 = vmatpush2.msra.mxu0 0.0
    %3405 = vmatprep.subr.mxu0 0.0
    %3406 = vmatpush2.msra.mxu0 0.0
    %3407 = vmatprep.subr.mxu0 0.0
    %3408 = vmatpush2.msra.mxu0 0.0
    %3409 = vmatprep.subr.mxu0 0.0
    %3410 = vmatpush2.msra.mxu0 0.0
    %3411 = vmatprep.mubr.f32.mxu0 0.0
    %3412 = vmatmul.mubr.f32.gmra.mxu0 %v3336
    %v3413 = vpop.f32.mrf.mxu0
    %v3414 = vadd.f32 %v3317, %v3413
    %v3415 = vpop.f32.mrf.mxu0
    %3416 = vmatprep.mubr.f32.mxu0 0.0
    %3417 = vmatmul.mubr.f32.gmra.mxu0 %v3339
    %v3418 = vpop.f32.mrf.mxu0
    %v3419 = vadd.f32 %v3322, %v3418
    %v3420 = vpop.f32.mrf.mxu0
    %3421 = vmatprep.mubr.f32.mxu0 0.0
    %3422 = vmatmul.mubr.f32.gmra.mxu0 %v3342
    %v3423 = vpop.f32.mrf.mxu0
    %v3424 = vadd.f32 %v3327, %v3423
    %v3425 = vpop.f32.mrf.mxu0
    %3426 = vmatprep.mubr.f32.mxu0 0.0
    %3427 = vmatmul.mubr.f32.gmra.mxu0 %v3345
    %v3428 = vpop.f32.mrf.mxu0
    %v3429 = vadd.f32 %v3332, %v3428
    %v3430 = vpop.f32.mrf.mxu0
    %3431 = vdwg.mxu0
    %s3432 = scalar_lea.vmem %s7, 1
    %v3433 = vld [vmem:[%s3432] sm:$0x1]
    %v3435 = vlaneseq
    %v3436 = vshrl.u32 %v3435, 7
    %v3437 = vsub.s32 0, %v3436
    %v3438 = vrot.slane %v3433, %v3437
    %v3440 = vadd.f32 %v3414, %v3438
    %v3441 = vadd.f32 %v3419, %v3438
    %v3442 = vadd.f32 %v3424, %v3438
    %v3443 = vadd.f32 %v3429, %v3438
    %s3444 = scalar_lea.vmem %s4, 64
    %v3445 = vld [vmem:[%s3444] sm:$0xff]
    %v3446 = vld [vmem:[%s3444 + $0x8] sm:$0xff]
    %v3447 = vld [vmem:[%s3444 + $0x10] sm:$0xff]
    %v3448 = vld [vmem:[%s3444 + $0x18] sm:$0xff]
    %s3449 = scalar_lea.vmem %s5, 2
    %v3450 = vld [vmem:[%s3449] sm:$0x1]
    %v3452 = vlaneseq
    %v3453 = vshrl.u32 %v3452, 7
    %v3454 = vsub.s32 0, %v3453
    %v3455 = vrot.slane %v3450, %v3454
    %v3458 = vsel %vm181, %v3440, 0
    %v3461 = vsel %vm181, %v3441, 0
    %v3464 = vsel %vm181, %v3442, 0
    %v3467 = vsel %vm181, %v3443, 0
    %3469 = vmatprep.subr.mxu0 0.0
    %3470 = vmatpush1.msra.mxu0 0.0
    %3471 = vmatprep.subr.mxu0 0.0
    %3472 = vmatpush1.msra.mxu0 0.0
    %3473 = vmatprep.subr.mxu0 0.0
    %3474 = vmatpush1.msra.mxu0 0.0
    %3475 = vmatprep.subr.mxu0 0.0
    %3476 = vmatpush1.msra.mxu0 0.0
    %3477 = vmatprep.subr.mxu0 0.0
    %3478 = vmatpush1.msra.mxu0 0.0
    %3479 = vmatprep.subr.mxu0 0.0
    %3480 = vmatpush1.msra.mxu0 0.0
    %3481 = vmatprep.subr.mxu0 0.0
    %3482 = vmatpush1.msra.mxu0 0.0
    %3483 = vmatprep.subr.mxu0 0.0
    %3484 = vmatpush1.msra.mxu0 0.0
    %3485 = vmatprep.subr.mxu0 0.0
    %3486 = vmatpush1.msra.mxu0 0.0
    %3487 = vmatprep.subr.mxu0 0.0
    %3488 = vmatpush1.msra.mxu0 0.0
    %3489 = vmatprep.subr.mxu0 0.0
    %3490 = vmatpush1.msra.mxu0 0.0
    %3491 = vmatprep.subr.mxu0 0.0
    %3492 = vmatpush1.msra.mxu0 0.0
    %3493 = vmatprep.subr.mxu0 0.0
    %3494 = vmatpush1.msra.mxu0 %v3448
    %3495 = vmatprep.subr.mxu0 0.0
    %3496 = vmatpush1.msra.mxu0 %v3447
    %3497 = vmatprep.subr.mxu0 0.0
    %3498 = vmatpush1.msra.mxu0 %v3446
    %3499 = vmatprep.subr.mxu0 0.0
    %3500 = vmatpush1.msra.mxu0 %v3445
    %3501 = vmatprep.subr.mxu0 0.0
    %3502 = vmatpush2.msra.mxu0 0.0
    %3503 = vmatprep.subr.mxu0 0.0
    %3504 = vmatpush2.msra.mxu0 0.0
    %3505 = vmatprep.subr.mxu0 0.0
    %3506 = vmatpush2.msra.mxu0 0.0
    %3507 = vmatprep.subr.mxu0 0.0
    %3508 = vmatpush2.msra.mxu0 0.0
    %3509 = vmatprep.subr.mxu0 0.0
    %3510 = vmatpush2.msra.mxu0 0.0
    %3511 = vmatprep.subr.mxu0 0.0
    %3512 = vmatpush2.msra.mxu0 0.0
    %3513 = vmatprep.subr.mxu0 0.0
    %3514 = vmatpush2.msra.mxu0 0.0
    %3515 = vmatprep.subr.mxu0 0.0
    %3516 = vmatpush2.msra.mxu0 0.0
    %3517 = vmatprep.subr.mxu0 0.0
    %3518 = vmatpush2.msra.mxu0 0.0
    %3519 = vmatprep.subr.mxu0 0.0
    %3520 = vmatpush2.msra.mxu0 0.0
    %3521 = vmatprep.subr.mxu0 0.0
    %3522 = vmatpush2.msra.mxu0 0.0
    %3523 = vmatprep.subr.mxu0 0.0
    %3524 = vmatpush2.msra.mxu0 0.0
    %3525 = vmatprep.subr.mxu0 0.0
    %3526 = vmatpush2.msra.mxu0 0.0
    %3527 = vmatprep.subr.mxu0 0.0
    %3528 = vmatpush2.msra.mxu0 0.0
    %3529 = vmatprep.subr.mxu0 0.0
    %3530 = vmatpush2.msra.mxu0 0.0
    %3531 = vmatprep.subr.mxu0 0.0
    %3532 = vmatpush2.msra.mxu0 0.0
    %3533 = vmatprep.mubr.f32.mxu0 0.0
    %3534 = vmatmul.mubr.f32.gmra.mxu0 %v3458
    %v3535 = vpop.f32.mrf.mxu0
    %v3536 = vadd.f32 %v3455, %v3535
    %v3537 = vpop.f32.mrf.mxu0
    %3538 = vmatprep.mubr.f32.mxu0 0.0
    %3539 = vmatmul.mubr.f32.gmra.mxu0 %v3461
    %v3540 = vpop.f32.mrf.mxu0
    %v3541 = vadd.f32 %v3455, %v3540
    %v3542 = vpop.f32.mrf.mxu0
    %3543 = vmatprep.mubr.f32.mxu0 0.0
    %3544 = vmatmul.mubr.f32.gmra.mxu0 %v3464
    %v3545 = vpop.f32.mrf.mxu0
    %v3546 = vadd.f32 %v3455, %v3545
    %v3547 = vpop.f32.mrf.mxu0
    %3548 = vmatprep.mubr.f32.mxu0 0.0
    %3549 = vmatmul.mubr.f32.gmra.mxu0 %v3467
    %v3550 = vpop.f32.mrf.mxu0
    %v3551 = vadd.f32 %v3455, %v3550
    %v3552 = vpop.f32.mrf.mxu0
    %3553 = vdwg.mxu0
    %3555 = vrot.lane.b32.xlu0 %v3536, 96
    %v3556 = vpop.permute.xlu0 %3555
    %v3557 = vsel %vm72, %v3536, 0
    %v3559 = vsel %vm72, %v3556, 0
    %3561 = vmatprep.subr.mxu0 0.0
    %3562 = vmatpush1.xpose.msra.mxu0 0.0
    %3563 = vmatprep.subr.mxu0 0.0
    %3564 = vmatpush1.xpose.msra.mxu0 0.0
    %3565 = vmatprep.subr.mxu0 0.0
    %3566 = vmatpush1.xpose.msra.mxu0 0.0
    %3567 = vmatprep.subr.mxu0 0.0
    %3568 = vmatpush1.xpose.msra.mxu0 0.0
    %3569 = vmatprep.subr.mxu0 0.0
    %3570 = vmatpush1.xpose.msra.mxu0 0.0
    %3571 = vmatprep.subr.mxu0 0.0
    %3572 = vmatpush1.xpose.msra.mxu0 0.0
    %3573 = vmatprep.subr.mxu0 0.0
    %3574 = vmatpush1.xpose.msra.mxu0 0.0
    %3575 = vmatprep.subr.mxu0 0.0
    %3576 = vmatpush1.xpose.msra.mxu0 0.0
    %3577 = vmatprep.subr.mxu0 0.0
    %3578 = vmatpush1.xpose.msra.mxu0 0.0
    %3579 = vmatprep.subr.mxu0 0.0
    %3580 = vmatpush1.xpose.msra.mxu0 0.0
    %3581 = vmatprep.subr.mxu0 0.0
    %3582 = vmatpush1.xpose.msra.mxu0 0.0
    %3583 = vmatprep.subr.mxu0 0.0
    %3584 = vmatpush1.xpose.msra.mxu0 0.0
    %3585 = vmatprep.subr.mxu0 0.0
    %3586 = vmatpush1.xpose.msra.mxu0 0.0
    %3587 = vmatprep.subr.mxu0 0.0
    %3588 = vmatpush1.xpose.msra.mxu0 0.0
    %3589 = vmatprep.subr.mxu0 0.0
    %3590 = vmatpush1.xpose.msra.mxu0 0.0
    %3591 = vmatprep.subr.mxu0 0.0
    %3592 = vmatpush1.xpose.msra.mxu0 %v3559
    %3593 = vmatprep.subr.mxu0 0.0
    %3594 = vmatpush2.xpose.msra.mxu0 0.0
    %3595 = vmatprep.subr.mxu0 0.0
    %3596 = vmatpush2.xpose.msra.mxu0 0.0
    %3597 = vmatprep.subr.mxu0 0.0
    %3598 = vmatpush2.xpose.msra.mxu0 0.0
    %3599 = vmatprep.subr.mxu0 0.0
    %3600 = vmatpush2.xpose.msra.mxu0 0.0
    %3601 = vmatprep.subr.mxu0 0.0
    %3602 = vmatpush2.xpose.msra.mxu0 0.0
    %3603 = vmatprep.subr.mxu0 0.0
    %3604 = vmatpush2.xpose.msra.mxu0 0.0
    %3605 = vmatprep.subr.mxu0 0.0
    %3606 = vmatpush2.xpose.msra.mxu0 0.0
    %3607 = vmatprep.subr.mxu0 0.0
    %3608 = vmatpush2.xpose.msra.mxu0 0.0
    %3609 = vmatprep.subr.mxu0 0.0
    %3610 = vmatpush2.xpose.msra.mxu0 0.0
    %3611 = vmatprep.subr.mxu0 0.0
    %3612 = vmatpush2.xpose.msra.mxu0 0.0
    %3613 = vmatprep.subr.mxu0 0.0
    %3614 = vmatpush2.xpose.msra.mxu0 0.0
    %3615 = vmatprep.subr.mxu0 0.0
    %3616 = vmatpush2.xpose.msra.mxu0 0.0
    %3617 = vmatprep.subr.mxu0 0.0
    %3618 = vmatpush2.xpose.msra.mxu0 0.0
    %3619 = vmatprep.subr.mxu0 0.0
    %3620 = vmatpush2.xpose.msra.mxu0 0.0
    %3621 = vmatprep.subr.mxu0 0.0
    %3622 = vmatpush2.xpose.msra.mxu0 0.0
    %3623 = vmatprep.subr.mxu0 0.0
    %3624 = vmatpush2.xpose.msra.mxu0 0.0
    %3625 = vmatprep.mubr.f32.mxu0 0.0
    %3626 = vmatmul.mubr.f32.gmra.mxu0 %v3557
    %v3627 = vpop.f32.mrf.mxu0
    %v3628 = vadd.f32 0.0, %v3627
    %v3629 = vpop.f32.mrf.mxu0
    %3630 = vdwg.mxu0
    %3632 = vrot.lane.b32.xlu0 %v3541, 96
    %v3633 = vpop.permute.xlu0 %3632
    %v3634 = vsel %vm72, %v3541, 0
    %v3636 = vsel %vm72, %v3633, 0
    %3638 = vmatprep.subr.mxu0 0.0
    %3639 = vmatpush1.xpose.msra.mxu0 0.0
    %3640 = vmatprep.subr.mxu0 0.0
    %3641 = vmatpush1.xpose.msra.mxu0 0.0
    %3642 = vmatprep.subr.mxu0 0.0
    %3643 = vmatpush1.xpose.msra.mxu0 0.0
    %3644 = vmatprep.subr.mxu0 0.0
    %3645 = vmatpush1.xpose.msra.mxu0 0.0
    %3646 = vmatprep.subr.mxu0 0.0
    %3647 = vmatpush1.xpose.msra.mxu0 0.0
    %3648 = vmatprep.subr.mxu0 0.0
    %3649 = vmatpush1.xpose.msra.mxu0 0.0
    %3650 = vmatprep.subr.mxu0 0.0
    %3651 = vmatpush1.xpose.msra.mxu0 0.0
    %3652 = vmatprep.subr.mxu0 0.0
    %3653 = vmatpush1.xpose.msra.mxu0 0.0
    %3654 = vmatprep.subr.mxu0 0.0
    %3655 = vmatpush1.xpose.msra.mxu0 0.0
    %3656 = vmatprep.subr.mxu0 0.0
    %3657 = vmatpush1.xpose.msra.mxu0 0.0
    %3658 = vmatprep.subr.mxu0 0.0
    %3659 = vmatpush1.xpose.msra.mxu0 0.0
    %3660 = vmatprep.subr.mxu0 0.0
    %3661 = vmatpush1.xpose.msra.mxu0 0.0
    %3662 = vmatprep.subr.mxu0 0.0
    %3663 = vmatpush1.xpose.msra.mxu0 0.0
    %3664 = vmatprep.subr.mxu0 0.0
    %3665 = vmatpush1.xpose.msra.mxu0 0.0
    %3666 = vmatprep.subr.mxu0 0.0
    %3667 = vmatpush1.xpose.msra.mxu0 0.0
    %3668 = vmatprep.subr.mxu0 0.0
    %3669 = vmatpush1.xpose.msra.mxu0 %v3636
    %3670 = vmatprep.subr.mxu0 0.0
    %3671 = vmatpush2.xpose.msra.mxu0 0.0
    %3672 = vmatprep.subr.mxu0 0.0
    %3673 = vmatpush2.xpose.msra.mxu0 0.0
    %3674 = vmatprep.subr.mxu0 0.0
    %3675 = vmatpush2.xpose.msra.mxu0 0.0
    %3676 = vmatprep.subr.mxu0 0.0
    %3677 = vmatpush2.xpose.msra.mxu0 0.0
    %3678 = vmatprep.subr.mxu0 0.0
    %3679 = vmatpush2.xpose.msra.mxu0 0.0
    %3680 = vmatprep.subr.mxu0 0.0
    %3681 = vmatpush2.xpose.msra.mxu0 0.0
    %3682 = vmatprep.subr.mxu0 0.0
    %3683 = vmatpush2.xpose.msra.mxu0 0.0
    %3684 = vmatprep.subr.mxu0 0.0
    %3685 = vmatpush2.xpose.msra.mxu0 0.0
    %3686 = vmatprep.subr.mxu0 0.0
    %3687 = vmatpush2.xpose.msra.mxu0 0.0
    %3688 = vmatprep.subr.mxu0 0.0
    %3689 = vmatpush2.xpose.msra.mxu0 0.0
    %3690 = vmatprep.subr.mxu0 0.0
    %3691 = vmatpush2.xpose.msra.mxu0 0.0
    %3692 = vmatprep.subr.mxu0 0.0
    %3693 = vmatpush2.xpose.msra.mxu0 0.0
    %3694 = vmatprep.subr.mxu0 0.0
    %3695 = vmatpush2.xpose.msra.mxu0 0.0
    %3696 = vmatprep.subr.mxu0 0.0
    %3697 = vmatpush2.xpose.msra.mxu0 0.0
    %3698 = vmatprep.subr.mxu0 0.0
    %3699 = vmatpush2.xpose.msra.mxu0 0.0
    %3700 = vmatprep.subr.mxu0 0.0
    %3701 = vmatpush2.xpose.msra.mxu0 0.0
    %3702 = vmatprep.mubr.f32.mxu0 0.0
    %3703 = vmatmul.mubr.f32.gmra.mxu0 %v3634
    %v3704 = vpop.f32.mrf.mxu0
    %v3705 = vadd.f32 0.0, %v3704
    %v3706 = vpop.f32.mrf.mxu0
    %3707 = vdwg.mxu0
    %3709 = vrot.lane.b32.xlu0 %v3546, 96
    %v3710 = vpop.permute.xlu0 %3709
    %v3711 = vsel %vm72, %v3546, 0
    %v3713 = vsel %vm72, %v3710, 0
    %3715 = vmatprep.subr.mxu0 0.0
    %3716 = vmatpush1.xpose.msra.mxu0 0.0
    %3717 = vmatprep.subr.mxu0 0.0
    %3718 = vmatpush1.xpose.msra.mxu0 0.0
    %3719 = vmatprep.subr.mxu0 0.0
    %3720 = vmatpush1.xpose.msra.mxu0 0.0
    %3721 = vmatprep.subr.mxu0 0.0
    %3722 = vmatpush1.xpose.msra.mxu0 0.0
    %3723 = vmatprep.subr.mxu0 0.0
    %3724 = vmatpush1.xpose.msra.mxu0 0.0
    %3725 = vmatprep.subr.mxu0 0.0
    %3726 = vmatpush1.xpose.msra.mxu0 0.0
    %3727 = vmatprep.subr.mxu0 0.0
    %3728 = vmatpush1.xpose.msra.mxu0 0.0
    %3729 = vmatprep.subr.mxu0 0.0
    %3730 = vmatpush1.xpose.msra.mxu0 0.0
    %3731 = vmatprep.subr.mxu0 0.0
    %3732 = vmatpush1.xpose.msra.mxu0 0.0
    %3733 = vmatprep.subr.mxu0 0.0
    %3734 = vmatpush1.xpose.msra.mxu0 0.0
    %3735 = vmatprep.subr.mxu0 0.0
    %3736 = vmatpush1.xpose.msra.mxu0 0.0
    %3737 = vmatprep.subr.mxu0 0.0
    %3738 = vmatpush1.xpose.msra.mxu0 0.0
    %3739 = vmatprep.subr.mxu0 0.0
    %3740 = vmatpush1.xpose.msra.mxu0 0.0
    %3741 = vmatprep.subr.mxu0 0.0
    %3742 = vmatpush1.xpose.msra.mxu0 0.0
    %3743 = vmatprep.subr.mxu0 0.0
    %3744 = vmatpush1.xpose.msra.mxu0 0.0
    %3745 = vmatprep.subr.mxu0 0.0
    %3746 = vmatpush1.xpose.msra.mxu0 %v3713
    %3747 = vmatprep.subr.mxu0 0.0
    %3748 = vmatpush2.xpose.msra.mxu0 0.0
    %3749 = vmatprep.subr.mxu0 0.0
    %3750 = vmatpush2.xpose.msra.mxu0 0.0
    %3751 = vmatprep.subr.mxu0 0.0
    %3752 = vmatpush2.xpose.msra.mxu0 0.0
    %3753 = vmatprep.subr.mxu0 0.0
    %3754 = vmatpush2.xpose.msra.mxu0 0.0
    %3755 = vmatprep.subr.mxu0 0.0
    %3756 = vmatpush2.xpose.msra.mxu0 0.0
    %3757 = vmatprep.subr.mxu0 0.0
    %3758 = vmatpush2.xpose.msra.mxu0 0.0
    %3759 = vmatprep.subr.mxu0 0.0
    %3760 = vmatpush2.xpose.msra.mxu0 0.0
    %3761 = vmatprep.subr.mxu0 0.0
    %3762 = vmatpush2.xpose.msra.mxu0 0.0
    %3763 = vmatprep.subr.mxu0 0.0
    %3764 = vmatpush2.xpose.msra.mxu0 0.0
    %3765 = vmatprep.subr.mxu0 0.0
    %3766 = vmatpush2.xpose.msra.mxu0 0.0
    %3767 = vmatprep.subr.mxu0 0.0
    %3768 = vmatpush2.xpose.msra.mxu0 0.0
    %3769 = vmatprep.subr.mxu0 0.0
    %3770 = vmatpush2.xpose.msra.mxu0 0.0
    %3771 = vmatprep.subr.mxu0 0.0
    %3772 = vmatpush2.xpose.msra.mxu0 0.0
    %3773 = vmatprep.subr.mxu0 0.0
    %3774 = vmatpush2.xpose.msra.mxu0 0.0
    %3775 = vmatprep.subr.mxu0 0.0
    %3776 = vmatpush2.xpose.msra.mxu0 0.0
    %3777 = vmatprep.subr.mxu0 0.0
    %3778 = vmatpush2.xpose.msra.mxu0 0.0
    %3779 = vmatprep.mubr.f32.mxu0 0.0
    %3780 = vmatmul.mubr.f32.gmra.mxu0 %v3711
    %v3781 = vpop.f32.mrf.mxu0
    %v3782 = vadd.f32 0.0, %v3781
    %v3783 = vpop.f32.mrf.mxu0
    %3784 = vdwg.mxu0
    %3786 = vrot.lane.b32.xlu0 %v3551, 96
    %v3787 = vpop.permute.xlu0 %3786
    %v3788 = vsel %vm72, %v3551, 0
    %v3790 = vsel %vm72, %v3787, 0
    %3792 = vmatprep.subr.mxu0 0.0
    %3793 = vmatpush1.xpose.msra.mxu0 0.0
    %3794 = vmatprep.subr.mxu0 0.0
    %3795 = vmatpush1.xpose.msra.mxu0 0.0
    %3796 = vmatprep.subr.mxu0 0.0
    %3797 = vmatpush1.xpose.msra.mxu0 0.0
    %3798 = vmatprep.subr.mxu0 0.0
    %3799 = vmatpush1.xpose.msra.mxu0 0.0
    %3800 = vmatprep.subr.mxu0 0.0
    %3801 = vmatpush1.xpose.msra.mxu0 0.0
    %3802 = vmatprep.subr.mxu0 0.0
    %3803 = vmatpush1.xpose.msra.mxu0 0.0
    %3804 = vmatprep.subr.mxu0 0.0
    %3805 = vmatpush1.xpose.msra.mxu0 0.0
    %3806 = vmatprep.subr.mxu0 0.0
    %3807 = vmatpush1.xpose.msra.mxu0 0.0
    %3808 = vmatprep.subr.mxu0 0.0
    %3809 = vmatpush1.xpose.msra.mxu0 0.0
    %3810 = vmatprep.subr.mxu0 0.0
    %3811 = vmatpush1.xpose.msra.mxu0 0.0
    %3812 = vmatprep.subr.mxu0 0.0
    %3813 = vmatpush1.xpose.msra.mxu0 0.0
    %3814 = vmatprep.subr.mxu0 0.0
    %3815 = vmatpush1.xpose.msra.mxu0 0.0
    %3816 = vmatprep.subr.mxu0 0.0
    %3817 = vmatpush1.xpose.msra.mxu0 0.0
    %3818 = vmatprep.subr.mxu0 0.0
    %3819 = vmatpush1.xpose.msra.mxu0 0.0
    %3820 = vmatprep.subr.mxu0 0.0
    %3821 = vmatpush1.xpose.msra.mxu0 0.0
    %3822 = vmatprep.subr.mxu0 0.0
    %3823 = vmatpush1.xpose.msra.mxu0 %v3790
    %3824 = vmatprep.subr.mxu0 0.0
    %3825 = vmatpush2.xpose.msra.mxu0 0.0
    %3826 = vmatprep.subr.mxu0 0.0
    %3827 = vmatpush2.xpose.msra.mxu0 0.0
    %3828 = vmatprep.subr.mxu0 0.0
    %3829 = vmatpush2.xpose.msra.mxu0 0.0
    %3830 = vmatprep.subr.mxu0 0.0
    %3831 = vmatpush2.xpose.msra.mxu0 0.0
    %3832 = vmatprep.subr.mxu0 0.0
    %3833 = vmatpush2.xpose.msra.mxu0 0.0
    %3834 = vmatprep.subr.mxu0 0.0
    %3835 = vmatpush2.xpose.msra.mxu0 0.0
    %3836 = vmatprep.subr.mxu0 0.0
    %3837 = vmatpush2.xpose.msra.mxu0 0.0
    %3838 = vmatprep.subr.mxu0 0.0
    %3839 = vmatpush2.xpose.msra.mxu0 0.0
    %3840 = vmatprep.subr.mxu0 0.0
    %3841 = vmatpush2.xpose.msra.mxu0 0.0
    %3842 = vmatprep.subr.mxu0 0.0
    %3843 = vmatpush2.xpose.msra.mxu0 0.0
    %3844 = vmatprep.subr.mxu0 0.0
    %3845 = vmatpush2.xpose.msra.mxu0 0.0
    %3846 = vmatprep.subr.mxu0 0.0
    %3847 = vmatpush2.xpose.msra.mxu0 0.0
    %3848 = vmatprep.subr.mxu0 0.0
    %3849 = vmatpush2.xpose.msra.mxu0 0.0
    %3850 = vmatprep.subr.mxu0 0.0
    %3851 = vmatpush2.xpose.msra.mxu0 0.0
    %3852 = vmatprep.subr.mxu0 0.0
    %3853 = vmatpush2.xpose.msra.mxu0 0.0
    %3854 = vmatprep.subr.mxu0 0.0
    %3855 = vmatpush2.xpose.msra.mxu0 0.0
    %3856 = vmatprep.mubr.f32.mxu0 0.0
    %3857 = vmatmul.mubr.f32.gmra.mxu0 %v3788
    %v3858 = vpop.f32.mrf.mxu0
    %v3859 = vadd.f32 0.0, %v3858
    %v3860 = vpop.f32.mrf.mxu0
    %3861 = vdwg.mxu0
    %v3862 = vsel %vm587, %v3628, -inf
    %3863 = vmax.xlane.f32.xlu0 %v3862
    %v3864 = vpop.xlane.xlu0 %3863
    %v3865 = vsel %vm587, %v3705, -inf
    %3866 = vmax.xlane.f32.xlu0 %v3865
    %v3867 = vpop.xlane.xlu0 %3866
    %v3868 = vsel %vm587, %v3782, -inf
    %3869 = vmax.xlane.f32.xlu0 %v3868
    %v3870 = vpop.xlane.xlu0 %3869
    %v3871 = vsel %vm587, %v3859, -inf
    %3872 = vmax.xlane.f32.xlu0 %v3871
    %v3873 = vpop.xlane.xlu0 %3872
    %v3874 = vsub.f32 %v3628, %v3864
    %v3875 = vsub.f32 %v3705, %v3867
    %v3876 = vsub.f32 %v3782, %v3870
    %v3877 = vsub.f32 %v3859, %v3873
    %v3878 = vmul.f32 %v3874, 1.442695
    %v3879 = vpow.pop %v3878
    %v3880 = vmul.f32 %v3875, 1.442695
    %v3881 = vpow.pop %v3880
    %v3882 = vmul.f32 %v3876, 1.442695
    %v3883 = vpow.pop %v3882
    %v3884 = vmul.f32 %v3877, 1.442695
    %v3885 = vpow.pop %v3884
    %v3886 = vsel %vm587, %v3879, 0.0
    %3887 = vadd.xlane.f32.xlu0 %v3886
    %v3888 = vpop.xlane.xlu0 %3887
    %v3889 = vsel %vm587, %v3881, 0.0
    %3890 = vadd.xlane.f32.xlu0 %v3889
    %v3891 = vpop.xlane.xlu0 %3890
    %v3892 = vsel %vm587, %v3883, 0.0
    %3893 = vadd.xlane.f32.xlu0 %v3892
    %v3894 = vpop.xlane.xlu0 %3893
    %v3895 = vsel %vm587, %v3885, 0.0
    %3896 = vadd.xlane.f32.xlu0 %v3895
    %v3897 = vpop.xlane.xlu0 %3896
    %v3898 = vrcp.pop %v3888
    %v3899 = vrcp.pop %v3891
    %v3900 = vrcp.pop %v3894
    %v3901 = vrcp.pop %v3897
    %v3902 = vmul.f32 %v3879, %v3898
    %v3903 = vmul.f32 %v3881, %v3899
    %v3904 = vmul.f32 %v3883, %v3900
    %v3905 = vmul.f32 %v3885, %v3901
    %3906 = vrot.lane.b32.xlu0 %v3536, 64
    %v3907 = vpop.permute.xlu0 %3906
    %v3910 = vsel %vm587, %v3902, 0
    %3912 = vmatprep.subr.mxu0 0.0
    %3913 = vmatpush1.msra.mxu0 0.0
    %3914 = vmatprep.subr.mxu0 0.0
    %3915 = vmatpush1.msra.mxu0 0.0
    %3916 = vmatprep.subr.mxu0 0.0
    %3917 = vmatpush1.msra.mxu0 0.0
    %3918 = vmatprep.subr.mxu0 0.0
    %3919 = vmatpush1.msra.mxu0 0.0
    %3920 = vmatprep.subr.mxu0 0.0
    %3921 = vmatpush1.msra.mxu0 0.0
    %3922 = vmatprep.subr.mxu0 0.0
    %3923 = vmatpush1.msra.mxu0 0.0
    %3924 = vmatprep.subr.mxu0 0.0
    %3925 = vmatpush1.msra.mxu0 0.0
    %3926 = vmatprep.subr.mxu0 0.0
    %3927 = vmatpush1.msra.mxu0 0.0
    %3928 = vmatprep.subr.mxu0 0.0
    %3929 = vmatpush1.msra.mxu0 0.0
    %3930 = vmatprep.subr.mxu0 0.0
    %3931 = vmatpush1.msra.mxu0 0.0
    %3932 = vmatprep.subr.mxu0 0.0
    %3933 = vmatpush1.msra.mxu0 0.0
    %3934 = vmatprep.subr.mxu0 0.0
    %3935 = vmatpush1.msra.mxu0 0.0
    %3936 = vmatprep.subr.mxu0 0.0
    %3937 = vmatpush1.msra.mxu0 0.0
    %3938 = vmatprep.subr.mxu0 0.0
    %3939 = vmatpush1.msra.mxu0 0.0
    %3940 = vmatprep.subr.mxu0 0.0
    %3941 = vmatpush1.msra.mxu0 0.0
    %3942 = vmatprep.subr.mxu0 0.0
    %3943 = vmatpush1.msra.mxu0 %v3907
    %3944 = vmatprep.subr.mxu0 0.0
    %3945 = vmatpush2.msra.mxu0 0.0
    %3946 = vmatprep.subr.mxu0 0.0
    %3947 = vmatpush2.msra.mxu0 0.0
    %3948 = vmatprep.subr.mxu0 0.0
    %3949 = vmatpush2.msra.mxu0 0.0
    %3950 = vmatprep.subr.mxu0 0.0
    %3951 = vmatpush2.msra.mxu0 0.0
    %3952 = vmatprep.subr.mxu0 0.0
    %3953 = vmatpush2.msra.mxu0 0.0
    %3954 = vmatprep.subr.mxu0 0.0
    %3955 = vmatpush2.msra.mxu0 0.0
    %3956 = vmatprep.subr.mxu0 0.0
    %3957 = vmatpush2.msra.mxu0 0.0
    %3958 = vmatprep.subr.mxu0 0.0
    %3959 = vmatpush2.msra.mxu0 0.0
    %3960 = vmatprep.subr.mxu0 0.0
    %3961 = vmatpush2.msra.mxu0 0.0
    %3962 = vmatprep.subr.mxu0 0.0
    %3963 = vmatpush2.msra.mxu0 0.0
    %3964 = vmatprep.subr.mxu0 0.0
    %3965 = vmatpush2.msra.mxu0 0.0
    %3966 = vmatprep.subr.mxu0 0.0
    %3967 = vmatpush2.msra.mxu0 0.0
    %3968 = vmatprep.subr.mxu0 0.0
    %3969 = vmatpush2.msra.mxu0 0.0
    %3970 = vmatprep.subr.mxu0 0.0
    %3971 = vmatpush2.msra.mxu0 0.0
    %3972 = vmatprep.subr.mxu0 0.0
    %3973 = vmatpush2.msra.mxu0 0.0
    %3974 = vmatprep.subr.mxu0 0.0
    %3975 = vmatpush2.msra.mxu0 0.0
    %3976 = vmatprep.mubr.f32.mxu0 0.0
    %3977 = vmatmul.mubr.f32.gmra.mxu0 %v3910
    %v3978 = vpop.f32.mrf.mxu0
    %v3979 = vadd.f32 0.0, %v3978
    %v3980 = vpop.f32.mrf.mxu0
    %3981 = vdwg.mxu0
    %3982 = vrot.lane.b32.xlu0 %v3541, 64
    %v3983 = vpop.permute.xlu0 %3982
    %v3986 = vsel %vm587, %v3903, 0
    %3988 = vmatprep.subr.mxu0 0.0
    %3989 = vmatpush1.msra.mxu0 0.0
    %3990 = vmatprep.subr.mxu0 0.0
    %3991 = vmatpush1.msra.mxu0 0.0
    %3992 = vmatprep.subr.mxu0 0.0
    %3993 = vmatpush1.msra.mxu0 0.0
    %3994 = vmatprep.subr.mxu0 0.0
    %3995 = vmatpush1.msra.mxu0 0.0
    %3996 = vmatprep.subr.mxu0 0.0
    %3997 = vmatpush1.msra.mxu0 0.0
    %3998 = vmatprep.subr.mxu0 0.0
    %3999 = vmatpush1.msra.mxu0 0.0
    %4000 = vmatprep.subr.mxu0 0.0
    %4001 = vmatpush1.msra.mxu0 0.0
    %4002 = vmatprep.subr.mxu0 0.0
    %4003 = vmatpush1.msra.mxu0 0.0
    %4004 = vmatprep.subr.mxu0 0.0
    %4005 = vmatpush1.msra.mxu0 0.0
    %4006 = vmatprep.subr.mxu0 0.0
    %4007 = vmatpush1.msra.mxu0 0.0
    %4008 = vmatprep.subr.mxu0 0.0
    %4009 = vmatpush1.msra.mxu0 0.0
    %4010 = vmatprep.subr.mxu0 0.0
    %4011 = vmatpush1.msra.mxu0 0.0
    %4012 = vmatprep.subr.mxu0 0.0
    %4013 = vmatpush1.msra.mxu0 0.0
    %4014 = vmatprep.subr.mxu0 0.0
    %4015 = vmatpush1.msra.mxu0 0.0
    %4016 = vmatprep.subr.mxu0 0.0
    %4017 = vmatpush1.msra.mxu0 0.0
    %4018 = vmatprep.subr.mxu0 0.0
    %4019 = vmatpush1.msra.mxu0 %v3983
    %4020 = vmatprep.subr.mxu0 0.0
    %4021 = vmatpush2.msra.mxu0 0.0
    %4022 = vmatprep.subr.mxu0 0.0
    %4023 = vmatpush2.msra.mxu0 0.0
    %4024 = vmatprep.subr.mxu0 0.0
    %4025 = vmatpush2.msra.mxu0 0.0
    %4026 = vmatprep.subr.mxu0 0.0
    %4027 = vmatpush2.msra.mxu0 0.0
    %4028 = vmatprep.subr.mxu0 0.0
    %4029 = vmatpush2.msra.mxu0 0.0
    %4030 = vmatprep.subr.mxu0 0.0
    %4031 = vmatpush2.msra.mxu0 0.0
    %4032 = vmatprep.subr.mxu0 0.0
    %4033 = vmatpush2.msra.mxu0 0.0
    %4034 = vmatprep.subr.mxu0 0.0
    %4035 = vmatpush2.msra.mxu0 0.0
    %4036 = vmatprep.subr.mxu0 0.0
    %4037 = vmatpush2.msra.mxu0 0.0
    %4038 = vmatprep.subr.mxu0 0.0
    %4039 = vmatpush2.msra.mxu0 0.0
    %4040 = vmatprep.subr.mxu0 0.0
    %4041 = vmatpush2.msra.mxu0 0.0
    %4042 = vmatprep.subr.mxu0 0.0
    %4043 = vmatpush2.msra.mxu0 0.0
    %4044 = vmatprep.subr.mxu0 0.0
    %4045 = vmatpush2.msra.mxu0 0.0
    %4046 = vmatprep.subr.mxu0 0.0
    %4047 = vmatpush2.msra.mxu0 0.0
    %4048 = vmatprep.subr.mxu0 0.0
    %4049 = vmatpush2.msra.mxu0 0.0
    %4050 = vmatprep.subr.mxu0 0.0
    %4051 = vmatpush2.msra.mxu0 0.0
    %4052 = vmatprep.mubr.f32.mxu0 0.0
    %4053 = vmatmul.mubr.f32.gmra.mxu0 %v3986
    %v4054 = vpop.f32.mrf.mxu0
    %v4055 = vadd.f32 0.0, %v4054
    %v4056 = vpop.f32.mrf.mxu0
    %4057 = vdwg.mxu0
    %4058 = vrot.lane.b32.xlu0 %v3546, 64
    %v4059 = vpop.permute.xlu0 %4058
    %v4062 = vsel %vm587, %v3904, 0
    %4064 = vmatprep.subr.mxu0 0.0
    %4065 = vmatpush1.msra.mxu0 0.0
    %4066 = vmatprep.subr.mxu0 0.0
    %4067 = vmatpush1.msra.mxu0 0.0
    %4068 = vmatprep.subr.mxu0 0.0
    %4069 = vmatpush1.msra.mxu0 0.0
    %4070 = vmatprep.subr.mxu0 0.0
    %4071 = vmatpush1.msra.mxu0 0.0
    %4072 = vmatprep.subr.mxu0 0.0
    %4073 = vmatpush1.msra.mxu0 0.0
    %4074 = vmatprep.subr.mxu0 0.0
    %4075 = vmatpush1.msra.mxu0 0.0
    %4076 = vmatprep.subr.mxu0 0.0
    %4077 = vmatpush1.msra.mxu0 0.0
    %4078 = vmatprep.subr.mxu0 0.0
    %4079 = vmatpush1.msra.mxu0 0.0
    %4080 = vmatprep.subr.mxu0 0.0
    %4081 = vmatpush1.msra.mxu0 0.0
    %4082 = vmatprep.subr.mxu0 0.0
    %4083 = vmatpush1.msra.mxu0 0.0
    %4084 = vmatprep.subr.mxu0 0.0
    %4085 = vmatpush1.msra.mxu0 0.0
    %4086 = vmatprep.subr.mxu0 0.0
    %4087 = vmatpush1.msra.mxu0 0.0
    %4088 = vmatprep.subr.mxu0 0.0
    %4089 = vmatpush1.msra.mxu0 0.0
    %4090 = vmatprep.subr.mxu0 0.0
    %4091 = vmatpush1.msra.mxu0 0.0
    %4092 = vmatprep.subr.mxu0 0.0
    %4093 = vmatpush1.msra.mxu0 0.0
    %4094 = vmatprep.subr.mxu0 0.0
    %4095 = vmatpush1.msra.mxu0 %v4059
    %4096 = vmatprep.subr.mxu0 0.0
    %4097 = vmatpush2.msra.mxu0 0.0
    %4098 = vmatprep.subr.mxu0 0.0
    %4099 = vmatpush2.msra.mxu0 0.0
    %4100 = vmatprep.subr.mxu0 0.0
    %4101 = vmatpush2.msra.mxu0 0.0
    %4102 = vmatprep.subr.mxu0 0.0
    %4103 = vmatpush2.msra.mxu0 0.0
    %4104 = vmatprep.subr.mxu0 0.0
    %4105 = vmatpush2.msra.mxu0 0.0
    %4106 = vmatprep.subr.mxu0 0.0
    %4107 = vmatpush2.msra.mxu0 0.0
    %4108 = vmatprep.subr.mxu0 0.0
    %4109 = vmatpush2.msra.mxu0 0.0
    %4110 = vmatprep.subr.mxu0 0.0
    %4111 = vmatpush2.msra.mxu0 0.0
    %4112 = vmatprep.subr.mxu0 0.0
    %4113 = vmatpush2.msra.mxu0 0.0
    %4114 = vmatprep.subr.mxu0 0.0
    %4115 = vmatpush2.msra.mxu0 0.0
    %4116 = vmatprep.subr.mxu0 0.0
    %4117 = vmatpush2.msra.mxu0 0.0
    %4118 = vmatprep.subr.mxu0 0.0
    %4119 = vmatpush2.msra.mxu0 0.0
    %4120 = vmatprep.subr.mxu0 0.0
    %4121 = vmatpush2.msra.mxu0 0.0
    %4122 = vmatprep.subr.mxu0 0.0
    %4123 = vmatpush2.msra.mxu0 0.0
    %4124 = vmatprep.subr.mxu0 0.0
    %4125 = vmatpush2.msra.mxu0 0.0
    %4126 = vmatprep.subr.mxu0 0.0
    %4127 = vmatpush2.msra.mxu0 0.0
    %4128 = vmatprep.mubr.f32.mxu0 0.0
    %4129 = vmatmul.mubr.f32.gmra.mxu0 %v4062
    %v4130 = vpop.f32.mrf.mxu0
    %v4131 = vadd.f32 0.0, %v4130
    %v4132 = vpop.f32.mrf.mxu0
    %4133 = vdwg.mxu0
    %4134 = vrot.lane.b32.xlu0 %v3551, 64
    %v4135 = vpop.permute.xlu0 %4134
    %v4138 = vsel %vm587, %v3905, 0
    %4140 = vmatprep.subr.mxu0 0.0
    %4141 = vmatpush1.msra.mxu0 0.0
    %4142 = vmatprep.subr.mxu0 0.0
    %4143 = vmatpush1.msra.mxu0 0.0
    %4144 = vmatprep.subr.mxu0 0.0
    %4145 = vmatpush1.msra.mxu0 0.0
    %4146 = vmatprep.subr.mxu0 0.0
    %4147 = vmatpush1.msra.mxu0 0.0
    %4148 = vmatprep.subr.mxu0 0.0
    %4149 = vmatpush1.msra.mxu0 0.0
    %4150 = vmatprep.subr.mxu0 0.0
    %4151 = vmatpush1.msra.mxu0 0.0
    %4152 = vmatprep.subr.mxu0 0.0
    %4153 = vmatpush1.msra.mxu0 0.0
    %4154 = vmatprep.subr.mxu0 0.0
    %4155 = vmatpush1.msra.mxu0 0.0
    %4156 = vmatprep.subr.mxu0 0.0
    %4157 = vmatpush1.msra.mxu0 0.0
    %4158 = vmatprep.subr.mxu0 0.0
    %4159 = vmatpush1.msra.mxu0 0.0
    %4160 = vmatprep.subr.mxu0 0.0
    %4161 = vmatpush1.msra.mxu0 0.0
    %4162 = vmatprep.subr.mxu0 0.0
    %4163 = vmatpush1.msra.mxu0 0.0
    %4164 = vmatprep.subr.mxu0 0.0
    %4165 = vmatpush1.msra.mxu0 0.0
    %4166 = vmatprep.subr.mxu0 0.0
    %4167 = vmatpush1.msra.mxu0 0.0
    %4168 = vmatprep.subr.mxu0 0.0
    %4169 = vmatpush1.msra.mxu0 0.0
    %4170 = vmatprep.subr.mxu0 0.0
    %4171 = vmatpush1.msra.mxu0 %v4135
    %4172 = vmatprep.subr.mxu0 0.0
    %4173 = vmatpush2.msra.mxu0 0.0
    %4174 = vmatprep.subr.mxu0 0.0
    %4175 = vmatpush2.msra.mxu0 0.0
    %4176 = vmatprep.subr.mxu0 0.0
    %4177 = vmatpush2.msra.mxu0 0.0
    %4178 = vmatprep.subr.mxu0 0.0
    %4179 = vmatpush2.msra.mxu0 0.0
    %4180 = vmatprep.subr.mxu0 0.0
    %4181 = vmatpush2.msra.mxu0 0.0
    %4182 = vmatprep.subr.mxu0 0.0
    %4183 = vmatpush2.msra.mxu0 0.0
    %4184 = vmatprep.subr.mxu0 0.0
    %4185 = vmatpush2.msra.mxu0 0.0
    %4186 = vmatprep.subr.mxu0 0.0
    %4187 = vmatpush2.msra.mxu0 0.0
    %4188 = vmatprep.subr.mxu0 0.0
    %4189 = vmatpush2.msra.mxu0 0.0
    %4190 = vmatprep.subr.mxu0 0.0
    %4191 = vmatpush2.msra.mxu0 0.0
    %4192 = vmatprep.subr.mxu0 0.0
    %4193 = vmatpush2.msra.mxu0 0.0
    %4194 = vmatprep.subr.mxu0 0.0
    %4195 = vmatpush2.msra.mxu0 0.0
    %4196 = vmatprep.subr.mxu0 0.0
    %4197 = vmatpush2.msra.mxu0 0.0
    %4198 = vmatprep.subr.mxu0 0.0
    %4199 = vmatpush2.msra.mxu0 0.0
    %4200 = vmatprep.subr.mxu0 0.0
    %4201 = vmatpush2.msra.mxu0 0.0
    %4202 = vmatprep.subr.mxu0 0.0
    %4203 = vmatpush2.msra.mxu0 0.0
    %4204 = vmatprep.mubr.f32.mxu0 0.0
    %4205 = vmatmul.mubr.f32.gmra.mxu0 %v4138
    %v4206 = vpop.f32.mrf.mxu0
    %v4207 = vadd.f32 0.0, %v4206
    %v4208 = vpop.f32.mrf.mxu0
    %4209 = vdwg.mxu0
    %s4210 = scalar_lea.vmem %s6, 64
    %v4211 = vld [vmem:[%s4210] sm:$0xff]
    %v4212 = vld [vmem:[%s4210 + $0x8] sm:$0xff]
    %4213 = vrot.lane.b32.xlu0 %v3536, 112
    %v4214 = vpop.permute.xlu0 %4213
    %4215 = vrot.lane.b32.xlu0 %v3536, 80
    %v4216 = vpop.permute.xlu0 %4215
    %v4217 = vsel %vm72, %v4214, 0
    %v4219 = vsel %vm72, %v4216, 0
    %4221 = vmatprep.subr.mxu0 0.0
    %4222 = vmatpush1.xpose.msra.mxu0 0.0
    %4223 = vmatprep.subr.mxu0 0.0
    %4224 = vmatpush1.xpose.msra.mxu0 0.0
    %4225 = vmatprep.subr.mxu0 0.0
    %4226 = vmatpush1.xpose.msra.mxu0 0.0
    %4227 = vmatprep.subr.mxu0 0.0
    %4228 = vmatpush1.xpose.msra.mxu0 0.0
    %4229 = vmatprep.subr.mxu0 0.0
    %4230 = vmatpush1.xpose.msra.mxu0 0.0
    %4231 = vmatprep.subr.mxu0 0.0
    %4232 = vmatpush1.xpose.msra.mxu0 0.0
    %4233 = vmatprep.subr.mxu0 0.0
    %4234 = vmatpush1.xpose.msra.mxu0 0.0
    %4235 = vmatprep.subr.mxu0 0.0
    %4236 = vmatpush1.xpose.msra.mxu0 0.0
    %4237 = vmatprep.subr.mxu0 0.0
    %4238 = vmatpush1.xpose.msra.mxu0 0.0
    %4239 = vmatprep.subr.mxu0 0.0
    %4240 = vmatpush1.xpose.msra.mxu0 0.0
    %4241 = vmatprep.subr.mxu0 0.0
    %4242 = vmatpush1.xpose.msra.mxu0 0.0
    %4243 = vmatprep.subr.mxu0 0.0
    %4244 = vmatpush1.xpose.msra.mxu0 0.0
    %4245 = vmatprep.subr.mxu0 0.0
    %4246 = vmatpush1.xpose.msra.mxu0 0.0
    %4247 = vmatprep.subr.mxu0 0.0
    %4248 = vmatpush1.xpose.msra.mxu0 0.0
    %4249 = vmatprep.subr.mxu0 0.0
    %4250 = vmatpush1.xpose.msra.mxu0 0.0
    %4251 = vmatprep.subr.mxu0 0.0
    %4252 = vmatpush1.xpose.msra.mxu0 %v4219
    %4253 = vmatprep.subr.mxu0 0.0
    %4254 = vmatpush2.xpose.msra.mxu0 0.0
    %4255 = vmatprep.subr.mxu0 0.0
    %4256 = vmatpush2.xpose.msra.mxu0 0.0
    %4257 = vmatprep.subr.mxu0 0.0
    %4258 = vmatpush2.xpose.msra.mxu0 0.0
    %4259 = vmatprep.subr.mxu0 0.0
    %4260 = vmatpush2.xpose.msra.mxu0 0.0
    %4261 = vmatprep.subr.mxu0 0.0
    %4262 = vmatpush2.xpose.msra.mxu0 0.0
    %4263 = vmatprep.subr.mxu0 0.0
    %4264 = vmatpush2.xpose.msra.mxu0 0.0
    %4265 = vmatprep.subr.mxu0 0.0
    %4266 = vmatpush2.xpose.msra.mxu0 0.0
    %4267 = vmatprep.subr.mxu0 0.0
    %4268 = vmatpush2.xpose.msra.mxu0 0.0
    %4269 = vmatprep.subr.mxu0 0.0
    %4270 = vmatpush2.xpose.msra.mxu0 0.0
    %4271 = vmatprep.subr.mxu0 0.0
    %4272 = vmatpush2.xpose.msra.mxu0 0.0
    %4273 = vmatprep.subr.mxu0 0.0
    %4274 = vmatpush2.xpose.msra.mxu0 0.0
    %4275 = vmatprep.subr.mxu0 0.0
    %4276 = vmatpush2.xpose.msra.mxu0 0.0
    %4277 = vmatprep.subr.mxu0 0.0
    %4278 = vmatpush2.xpose.msra.mxu0 0.0
    %4279 = vmatprep.subr.mxu0 0.0
    %4280 = vmatpush2.xpose.msra.mxu0 0.0
    %4281 = vmatprep.subr.mxu0 0.0
    %4282 = vmatpush2.xpose.msra.mxu0 0.0
    %4283 = vmatprep.subr.mxu0 0.0
    %4284 = vmatpush2.xpose.msra.mxu0 0.0
    %4285 = vmatprep.mubr.f32.mxu0 0.0
    %4286 = vmatmul.mubr.f32.gmra.mxu0 %v4217
    %v4287 = vpop.f32.mrf.mxu0
    %v4288 = vadd.f32 0.0, %v4287
    %v4289 = vpop.f32.mrf.mxu0
    %4290 = vdwg.mxu0
    %4291 = vrot.lane.b32.xlu0 %v3541, 112
    %v4292 = vpop.permute.xlu0 %4291
    %4293 = vrot.lane.b32.xlu0 %v3541, 80
    %v4294 = vpop.permute.xlu0 %4293
    %v4295 = vsel %vm72, %v4292, 0
    %v4297 = vsel %vm72, %v4294, 0
    %4299 = vmatprep.subr.mxu0 0.0
    %4300 = vmatpush1.xpose.msra.mxu0 0.0
    %4301 = vmatprep.subr.mxu0 0.0
    %4302 = vmatpush1.xpose.msra.mxu0 0.0
    %4303 = vmatprep.subr.mxu0 0.0
    %4304 = vmatpush1.xpose.msra.mxu0 0.0
    %4305 = vmatprep.subr.mxu0 0.0
    %4306 = vmatpush1.xpose.msra.mxu0 0.0
    %4307 = vmatprep.subr.mxu0 0.0
    %4308 = vmatpush1.xpose.msra.mxu0 0.0
    %4309 = vmatprep.subr.mxu0 0.0
    %4310 = vmatpush1.xpose.msra.mxu0 0.0
    %4311 = vmatprep.subr.mxu0 0.0
    %4312 = vmatpush1.xpose.msra.mxu0 0.0
    %4313 = vmatprep.subr.mxu0 0.0
    %4314 = vmatpush1.xpose.msra.mxu0 0.0
    %4315 = vmatprep.subr.mxu0 0.0
    %4316 = vmatpush1.xpose.msra.mxu0 0.0
    %4317 = vmatprep.subr.mxu0 0.0
    %4318 = vmatpush1.xpose.msra.mxu0 0.0
    %4319 = vmatprep.subr.mxu0 0.0
    %4320 = vmatpush1.xpose.msra.mxu0 0.0
    %4321 = vmatprep.subr.mxu0 0.0
    %4322 = vmatpush1.xpose.msra.mxu0 0.0
    %4323 = vmatprep.subr.mxu0 0.0
    %4324 = vmatpush1.xpose.msra.mxu0 0.0
    %4325 = vmatprep.subr.mxu0 0.0
    %4326 = vmatpush1.xpose.msra.mxu0 0.0
    %4327 = vmatprep.subr.mxu0 0.0
    %4328 = vmatpush1.xpose.msra.mxu0 0.0
    %4329 = vmatprep.subr.mxu0 0.0
    %4330 = vmatpush1.xpose.msra.mxu0 %v4297
    %4331 = vmatprep.subr.mxu0 0.0
    %4332 = vmatpush2.xpose.msra.mxu0 0.0
    %4333 = vmatprep.subr.mxu0 0.0
    %4334 = vmatpush2.xpose.msra.mxu0 0.0
    %4335 = vmatprep.subr.mxu0 0.0
    %4336 = vmatpush2.xpose.msra.mxu0 0.0
    %4337 = vmatprep.subr.mxu0 0.0
    %4338 = vmatpush2.xpose.msra.mxu0 0.0
    %4339 = vmatprep.subr.mxu0 0.0
    %4340 = vmatpush2.xpose.msra.mxu0 0.0
    %4341 = vmatprep.subr.mxu0 0.0
    %4342 = vmatpush2.xpose.msra.mxu0 0.0
    %4343 = vmatprep.subr.mxu0 0.0
    %4344 = vmatpush2.xpose.msra.mxu0 0.0
    %4345 = vmatprep.subr.mxu0 0.0
    %4346 = vmatpush2.xpose.msra.mxu0 0.0
    %4347 = vmatprep.subr.mxu0 0.0
    %4348 = vmatpush2.xpose.msra.mxu0 0.0
    %4349 = vmatprep.subr.mxu0 0.0
    %4350 = vmatpush2.xpose.msra.mxu0 0.0
    %4351 = vmatprep.subr.mxu0 0.0
    %4352 = vmatpush2.xpose.msra.mxu0 0.0
    %4353 = vmatprep.subr.mxu0 0.0
    %4354 = vmatpush2.xpose.msra.mxu0 0.0
    %4355 = vmatprep.subr.mxu0 0.0
    %4356 = vmatpush2.xpose.msra.mxu0 0.0
    %4357 = vmatprep.subr.mxu0 0.0
    %4358 = vmatpush2.xpose.msra.mxu0 0.0
    %4359 = vmatprep.subr.mxu0 0.0
    %4360 = vmatpush2.xpose.msra.mxu0 0.0
    %4361 = vmatprep.subr.mxu0 0.0
    %4362 = vmatpush2.xpose.msra.mxu0 0.0
    %4363 = vmatprep.mubr.f32.mxu0 0.0
    %4364 = vmatmul.mubr.f32.gmra.mxu0 %v4295
    %v4365 = vpop.f32.mrf.mxu0
    %v4366 = vadd.f32 0.0, %v4365
    %v4367 = vpop.f32.mrf.mxu0
    %4368 = vdwg.mxu0
    %4369 = vrot.lane.b32.xlu0 %v3546, 112
    %v4370 = vpop.permute.xlu0 %4369
    %4371 = vrot.lane.b32.xlu0 %v3546, 80
    %v4372 = vpop.permute.xlu0 %4371
    %v4373 = vsel %vm72, %v4370, 0
    %v4375 = vsel %vm72, %v4372, 0
    %4377 = vmatprep.subr.mxu0 0.0
    %4378 = vmatpush1.xpose.msra.mxu0 0.0
    %4379 = vmatprep.subr.mxu0 0.0
    %4380 = vmatpush1.xpose.msra.mxu0 0.0
    %4381 = vmatprep.subr.mxu0 0.0
    %4382 = vmatpush1.xpose.msra.mxu0 0.0
    %4383 = vmatprep.subr.mxu0 0.0
    %4384 = vmatpush1.xpose.msra.mxu0 0.0
    %4385 = vmatprep.subr.mxu0 0.0
    %4386 = vmatpush1.xpose.msra.mxu0 0.0
    %4387 = vmatprep.subr.mxu0 0.0
    %4388 = vmatpush1.xpose.msra.mxu0 0.0
    %4389 = vmatprep.subr.mxu0 0.0
    %4390 = vmatpush1.xpose.msra.mxu0 0.0
    %4391 = vmatprep.subr.mxu0 0.0
    %4392 = vmatpush1.xpose.msra.mxu0 0.0
    %4393 = vmatprep.subr.mxu0 0.0
    %4394 = vmatpush1.xpose.msra.mxu0 0.0
    %4395 = vmatprep.subr.mxu0 0.0
    %4396 = vmatpush1.xpose.msra.mxu0 0.0
    %4397 = vmatprep.subr.mxu0 0.0
    %4398 = vmatpush1.xpose.msra.mxu0 0.0
    %4399 = vmatprep.subr.mxu0 0.0
    %4400 = vmatpush1.xpose.msra.mxu0 0.0
    %4401 = vmatprep.subr.mxu0 0.0
    %4402 = vmatpush1.xpose.msra.mxu0 0.0
    %4403 = vmatprep.subr.mxu0 0.0
    %4404 = vmatpush1.xpose.msra.mxu0 0.0
    %4405 = vmatprep.subr.mxu0 0.0
    %4406 = vmatpush1.xpose.msra.mxu0 0.0
    %4407 = vmatprep.subr.mxu0 0.0
    %4408 = vmatpush1.xpose.msra.mxu0 %v4375
    %4409 = vmatprep.subr.mxu0 0.0
    %4410 = vmatpush2.xpose.msra.mxu0 0.0
    %4411 = vmatprep.subr.mxu0 0.0
    %4412 = vmatpush2.xpose.msra.mxu0 0.0
    %4413 = vmatprep.subr.mxu0 0.0
    %4414 = vmatpush2.xpose.msra.mxu0 0.0
    %4415 = vmatprep.subr.mxu0 0.0
    %4416 = vmatpush2.xpose.msra.mxu0 0.0
    %4417 = vmatprep.subr.mxu0 0.0
    %4418 = vmatpush2.xpose.msra.mxu0 0.0
    %4419 = vmatprep.subr.mxu0 0.0
    %4420 = vmatpush2.xpose.msra.mxu0 0.0
    %4421 = vmatprep.subr.mxu0 0.0
    %4422 = vmatpush2.xpose.msra.mxu0 0.0
    %4423 = vmatprep.subr.mxu0 0.0
    %4424 = vmatpush2.xpose.msra.mxu0 0.0
    %4425 = vmatprep.subr.mxu0 0.0
    %4426 = vmatpush2.xpose.msra.mxu0 0.0
    %4427 = vmatprep.subr.mxu0 0.0
    %4428 = vmatpush2.xpose.msra.mxu0 0.0
    %4429 = vmatprep.subr.mxu0 0.0
    %4430 = vmatpush2.xpose.msra.mxu0 0.0
    %4431 = vmatprep.subr.mxu0 0.0
    %4432 = vmatpush2.xpose.msra.mxu0 0.0
    %4433 = vmatprep.subr.mxu0 0.0
    %4434 = vmatpush2.xpose.msra.mxu0 0.0
    %4435 = vmatprep.subr.mxu0 0.0
    %4436 = vmatpush2.xpose.msra.mxu0 0.0
    %4437 = vmatprep.subr.mxu0 0.0
    %4438 = vmatpush2.xpose.msra.mxu0 0.0
    %4439 = vmatprep.subr.mxu0 0.0
    %4440 = vmatpush2.xpose.msra.mxu0 0.0
    %4441 = vmatprep.mubr.f32.mxu0 0.0
    %4442 = vmatmul.mubr.f32.gmra.mxu0 %v4373
    %v4443 = vpop.f32.mrf.mxu0
    %v4444 = vadd.f32 0.0, %v4443
    %v4445 = vpop.f32.mrf.mxu0
    %4446 = vdwg.mxu0
    %4447 = vrot.lane.b32.xlu0 %v3551, 112
    %v4448 = vpop.permute.xlu0 %4447
    %4449 = vrot.lane.b32.xlu0 %v3551, 80
    %v4450 = vpop.permute.xlu0 %4449
    %v4451 = vsel %vm72, %v4448, 0
    %v4453 = vsel %vm72, %v4450, 0
    %4455 = vmatprep.subr.mxu0 0.0
    %4456 = vmatpush1.xpose.msra.mxu0 0.0
    %4457 = vmatprep.subr.mxu0 0.0
    %4458 = vmatpush1.xpose.msra.mxu0 0.0
    %4459 = vmatprep.subr.mxu0 0.0
    %4460 = vmatpush1.xpose.msra.mxu0 0.0
    %4461 = vmatprep.subr.mxu0 0.0
    %4462 = vmatpush1.xpose.msra.mxu0 0.0
    %4463 = vmatprep.subr.mxu0 0.0
    %4464 = vmatpush1.xpose.msra.mxu0 0.0
    %4465 = vmatprep.subr.mxu0 0.0
    %4466 = vmatpush1.xpose.msra.mxu0 0.0
    %4467 = vmatprep.subr.mxu0 0.0
    %4468 = vmatpush1.xpose.msra.mxu0 0.0
    %4469 = vmatprep.subr.mxu0 0.0
    %4470 = vmatpush1.xpose.msra.mxu0 0.0
    %4471 = vmatprep.subr.mxu0 0.0
    %4472 = vmatpush1.xpose.msra.mxu0 0.0
    %4473 = vmatprep.subr.mxu0 0.0
    %4474 = vmatpush1.xpose.msra.mxu0 0.0
    %4475 = vmatprep.subr.mxu0 0.0
    %4476 = vmatpush1.xpose.msra.mxu0 0.0
    %4477 = vmatprep.subr.mxu0 0.0
    %4478 = vmatpush1.xpose.msra.mxu0 0.0
    %4479 = vmatprep.subr.mxu0 0.0
    %4480 = vmatpush1.xpose.msra.mxu0 0.0
    %4481 = vmatprep.subr.mxu0 0.0
    %4482 = vmatpush1.xpose.msra.mxu0 0.0
    %4483 = vmatprep.subr.mxu0 0.0
    %4484 = vmatpush1.xpose.msra.mxu0 0.0
    %4485 = vmatprep.subr.mxu0 0.0
    %4486 = vmatpush1.xpose.msra.mxu0 %v4453
    %4487 = vmatprep.subr.mxu0 0.0
    %4488 = vmatpush2.xpose.msra.mxu0 0.0
    %4489 = vmatprep.subr.mxu0 0.0
    %4490 = vmatpush2.xpose.msra.mxu0 0.0
    %4491 = vmatprep.subr.mxu0 0.0
    %4492 = vmatpush2.xpose.msra.mxu0 0.0
    %4493 = vmatprep.subr.mxu0 0.0
    %4494 = vmatpush2.xpose.msra.mxu0 0.0
    %4495 = vmatprep.subr.mxu0 0.0
    %4496 = vmatpush2.xpose.msra.mxu0 0.0
    %4497 = vmatprep.subr.mxu0 0.0
    %4498 = vmatpush2.xpose.msra.mxu0 0.0
    %4499 = vmatprep.subr.mxu0 0.0
    %4500 = vmatpush2.xpose.msra.mxu0 0.0
    %4501 = vmatprep.subr.mxu0 0.0
    %4502 = vmatpush2.xpose.msra.mxu0 0.0
    %4503 = vmatprep.subr.mxu0 0.0
    %4504 = vmatpush2.xpose.msra.mxu0 0.0
    %4505 = vmatprep.subr.mxu0 0.0
    %4506 = vmatpush2.xpose.msra.mxu0 0.0
    %4507 = vmatprep.subr.mxu0 0.0
    %4508 = vmatpush2.xpose.msra.mxu0 0.0
    %4509 = vmatprep.subr.mxu0 0.0
    %4510 = vmatpush2.xpose.msra.mxu0 0.0
    %4511 = vmatprep.subr.mxu0 0.0
    %4512 = vmatpush2.xpose.msra.mxu0 0.0
    %4513 = vmatprep.subr.mxu0 0.0
    %4514 = vmatpush2.xpose.msra.mxu0 0.0
    %4515 = vmatprep.subr.mxu0 0.0
    %4516 = vmatpush2.xpose.msra.mxu0 0.0
    %4517 = vmatprep.subr.mxu0 0.0
    %4518 = vmatpush2.xpose.msra.mxu0 0.0
    %4519 = vmatprep.mubr.f32.mxu0 0.0
    %4520 = vmatmul.mubr.f32.gmra.mxu0 %v4451
    %v4521 = vpop.f32.mrf.mxu0
    %v4522 = vadd.f32 0.0, %v4521
    %v4523 = vpop.f32.mrf.mxu0
    %4524 = vdwg.mxu0
    %v4525 = vsel %vm587, %v4288, -inf
    %4526 = vmax.xlane.f32.xlu0 %v4525
    %v4527 = vpop.xlane.xlu0 %4526
    %v4528 = vsel %vm587, %v4366, -inf
    %4529 = vmax.xlane.f32.xlu0 %v4528
    %v4530 = vpop.xlane.xlu0 %4529
    %v4531 = vsel %vm587, %v4444, -inf
    %4532 = vmax.xlane.f32.xlu0 %v4531
    %v4533 = vpop.xlane.xlu0 %4532
    %v4534 = vsel %vm587, %v4522, -inf
    %4535 = vmax.xlane.f32.xlu0 %v4534
    %v4536 = vpop.xlane.xlu0 %4535
    %v4537 = vsub.f32 %v4288, %v4527
    %v4538 = vsub.f32 %v4366, %v4530
    %v4539 = vsub.f32 %v4444, %v4533
    %v4540 = vsub.f32 %v4522, %v4536
    %v4541 = vmul.f32 %v4537, 1.442695
    %v4542 = vpow.pop %v4541
    %v4543 = vmul.f32 %v4538, 1.442695
    %v4544 = vpow.pop %v4543
    %v4545 = vmul.f32 %v4539, 1.442695
    %v4546 = vpow.pop %v4545
    %v4547 = vmul.f32 %v4540, 1.442695
    %v4548 = vpow.pop %v4547
    %v4549 = vsel %vm587, %v4542, 0.0
    %4550 = vadd.xlane.f32.xlu0 %v4549
    %v4551 = vpop.xlane.xlu0 %4550
    %v4552 = vsel %vm587, %v4544, 0.0
    %4553 = vadd.xlane.f32.xlu0 %v4552
    %v4554 = vpop.xlane.xlu0 %4553
    %v4555 = vsel %vm587, %v4546, 0.0
    %4556 = vadd.xlane.f32.xlu0 %v4555
    %v4557 = vpop.xlane.xlu0 %4556
    %v4558 = vsel %vm587, %v4548, 0.0
    %4559 = vadd.xlane.f32.xlu0 %v4558
    %v4560 = vpop.xlane.xlu0 %4559
    %v4561 = vrcp.pop %v4551
    %v4562 = vrcp.pop %v4554
    %v4563 = vrcp.pop %v4557
    %v4564 = vrcp.pop %v4560
    %v4565 = vmul.f32 %v4542, %v4561
    %v4566 = vmul.f32 %v4544, %v4562
    %v4567 = vmul.f32 %v4546, %v4563
    %v4568 = vmul.f32 %v4548, %v4564
    %4569 = vrot.lane.b32.xlu0 %v3536, 48
    %v4570 = vpop.permute.xlu0 %4569
    %v4573 = vsel %vm587, %v4565, 0
    %4575 = vmatprep.subr.mxu0 0.0
    %4576 = vmatpush1.msra.mxu0 0.0
    %4577 = vmatprep.subr.mxu0 0.0
    %4578 = vmatpush1.msra.mxu0 0.0
    %4579 = vmatprep.subr.mxu0 0.0
    %4580 = vmatpush1.msra.mxu0 0.0
    %4581 = vmatprep.subr.mxu0 0.0
    %4582 = vmatpush1.msra.mxu0 0.0
    %4583 = vmatprep.subr.mxu0 0.0
    %4584 = vmatpush1.msra.mxu0 0.0
    %4585 = vmatprep.subr.mxu0 0.0
    %4586 = vmatpush1.msra.mxu0 0.0
    %4587 = vmatprep.subr.mxu0 0.0
    %4588 = vmatpush1.msra.mxu0 0.0
    %4589 = vmatprep.subr.mxu0 0.0
    %4590 = vmatpush1.msra.mxu0 0.0
    %4591 = vmatprep.subr.mxu0 0.0
    %4592 = vmatpush1.msra.mxu0 0.0
    %4593 = vmatprep.subr.mxu0 0.0
    %4594 = vmatpush1.msra.mxu0 0.0
    %4595 = vmatprep.subr.mxu0 0.0
    %4596 = vmatpush1.msra.mxu0 0.0
    %4597 = vmatprep.subr.mxu0 0.0
    %4598 = vmatpush1.msra.mxu0 0.0
    %4599 = vmatprep.subr.mxu0 0.0
    %4600 = vmatpush1.msra.mxu0 0.0
    %4601 = vmatprep.subr.mxu0 0.0
    %4602 = vmatpush1.msra.mxu0 0.0
    %4603 = vmatprep.subr.mxu0 0.0
    %4604 = vmatpush1.msra.mxu0 0.0
    %4605 = vmatprep.subr.mxu0 0.0
    %4606 = vmatpush1.msra.mxu0 %v4570
    %4607 = vmatprep.subr.mxu0 0.0
    %4608 = vmatpush2.msra.mxu0 0.0
    %4609 = vmatprep.subr.mxu0 0.0
    %4610 = vmatpush2.msra.mxu0 0.0
    %4611 = vmatprep.subr.mxu0 0.0
    %4612 = vmatpush2.msra.mxu0 0.0
    %4613 = vmatprep.subr.mxu0 0.0
    %4614 = vmatpush2.msra.mxu0 0.0
    %4615 = vmatprep.subr.mxu0 0.0
    %4616 = vmatpush2.msra.mxu0 0.0
    %4617 = vmatprep.subr.mxu0 0.0
    %4618 = vmatpush2.msra.mxu0 0.0
    %4619 = vmatprep.subr.mxu0 0.0
    %4620 = vmatpush2.msra.mxu0 0.0
    %4621 = vmatprep.subr.mxu0 0.0
    %4622 = vmatpush2.msra.mxu0 0.0
    %4623 = vmatprep.subr.mxu0 0.0
    %4624 = vmatpush2.msra.mxu0 0.0
    %4625 = vmatprep.subr.mxu0 0.0
    %4626 = vmatpush2.msra.mxu0 0.0
    %4627 = vmatprep.subr.mxu0 0.0
    %4628 = vmatpush2.msra.mxu0 0.0
    %4629 = vmatprep.subr.mxu0 0.0
    %4630 = vmatpush2.msra.mxu0 0.0
    %4631 = vmatprep.subr.mxu0 0.0
    %4632 = vmatpush2.msra.mxu0 0.0
    %4633 = vmatprep.subr.mxu0 0.0
    %4634 = vmatpush2.msra.mxu0 0.0
    %4635 = vmatprep.subr.mxu0 0.0
    %4636 = vmatpush2.msra.mxu0 0.0
    %4637 = vmatprep.subr.mxu0 0.0
    %4638 = vmatpush2.msra.mxu0 0.0
    %4639 = vmatprep.mubr.f32.mxu0 0.0
    %4640 = vmatmul.mubr.f32.gmra.mxu0 %v4573
    %v4641 = vpop.f32.mrf.mxu0
    %v4642 = vadd.f32 0.0, %v4641
    %v4643 = vpop.f32.mrf.mxu0
    %4644 = vdwg.mxu0
    %4645 = vrot.lane.b32.xlu0 %v3541, 48
    %v4646 = vpop.permute.xlu0 %4645
    %v4649 = vsel %vm587, %v4566, 0
    %4651 = vmatprep.subr.mxu0 0.0
    %4652 = vmatpush1.msra.mxu0 0.0
    %4653 = vmatprep.subr.mxu0 0.0
    %4654 = vmatpush1.msra.mxu0 0.0
    %4655 = vmatprep.subr.mxu0 0.0
    %4656 = vmatpush1.msra.mxu0 0.0
    %4657 = vmatprep.subr.mxu0 0.0
    %4658 = vmatpush1.msra.mxu0 0.0
    %4659 = vmatprep.subr.mxu0 0.0
    %4660 = vmatpush1.msra.mxu0 0.0
    %4661 = vmatprep.subr.mxu0 0.0
    %4662 = vmatpush1.msra.mxu0 0.0
    %4663 = vmatprep.subr.mxu0 0.0
    %4664 = vmatpush1.msra.mxu0 0.0
    %4665 = vmatprep.subr.mxu0 0.0
    %4666 = vmatpush1.msra.mxu0 0.0
    %4667 = vmatprep.subr.mxu0 0.0
    %4668 = vmatpush1.msra.mxu0 0.0
    %4669 = vmatprep.subr.mxu0 0.0
    %4670 = vmatpush1.msra.mxu0 0.0
    %4671 = vmatprep.subr.mxu0 0.0
    %4672 = vmatpush1.msra.mxu0 0.0
    %4673 = vmatprep.subr.mxu0 0.0
    %4674 = vmatpush1.msra.mxu0 0.0
    %4675 = vmatprep.subr.mxu0 0.0
    %4676 = vmatpush1.msra.mxu0 0.0
    %4677 = vmatprep.subr.mxu0 0.0
    %4678 = vmatpush1.msra.mxu0 0.0
    %4679 = vmatprep.subr.mxu0 0.0
    %4680 = vmatpush1.msra.mxu0 0.0
    %4681 = vmatprep.subr.mxu0 0.0
    %4682 = vmatpush1.msra.mxu0 %v4646
    %4683 = vmatprep.subr.mxu0 0.0
    %4684 = vmatpush2.msra.mxu0 0.0
    %4685 = vmatprep.subr.mxu0 0.0
    %4686 = vmatpush2.msra.mxu0 0.0
    %4687 = vmatprep.subr.mxu0 0.0
    %4688 = vmatpush2.msra.mxu0 0.0
    %4689 = vmatprep.subr.mxu0 0.0
    %4690 = vmatpush2.msra.mxu0 0.0
    %4691 = vmatprep.subr.mxu0 0.0
    %4692 = vmatpush2.msra.mxu0 0.0
    %4693 = vmatprep.subr.mxu0 0.0
    %4694 = vmatpush2.msra.mxu0 0.0
    %4695 = vmatprep.subr.mxu0 0.0
    %4696 = vmatpush2.msra.mxu0 0.0
    %4697 = vmatprep.subr.mxu0 0.0
    %4698 = vmatpush2.msra.mxu0 0.0
    %4699 = vmatprep.subr.mxu0 0.0
    %4700 = vmatpush2.msra.mxu0 0.0
    %4701 = vmatprep.subr.mxu0 0.0
    %4702 = vmatpush2.msra.mxu0 0.0
    %4703 = vmatprep.subr.mxu0 0.0
    %4704 = vmatpush2.msra.mxu0 0.0
    %4705 = vmatprep.subr.mxu0 0.0
    %4706 = vmatpush2.msra.mxu0 0.0
    %4707 = vmatprep.subr.mxu0 0.0
    %4708 = vmatpush2.msra.mxu0 0.0
    %4709 = vmatprep.subr.mxu0 0.0
    %4710 = vmatpush2.msra.mxu0 0.0
    %4711 = vmatprep.subr.mxu0 0.0
    %4712 = vmatpush2.msra.mxu0 0.0
    %4713 = vmatprep.subr.mxu0 0.0
    %4714 = vmatpush2.msra.mxu0 0.0
    %4715 = vmatprep.mubr.f32.mxu0 0.0
    %4716 = vmatmul.mubr.f32.gmra.mxu0 %v4649
    %v4717 = vpop.f32.mrf.mxu0
    %v4718 = vadd.f32 0.0, %v4717
    %v4719 = vpop.f32.mrf.mxu0
    %4720 = vdwg.mxu0
    %4721 = vrot.lane.b32.xlu0 %v3546, 48
    %v4722 = vpop.permute.xlu0 %4721
    %v4725 = vsel %vm587, %v4567, 0
    %4727 = vmatprep.subr.mxu0 0.0
    %4728 = vmatpush1.msra.mxu0 0.0
    %4729 = vmatprep.subr.mxu0 0.0
    %4730 = vmatpush1.msra.mxu0 0.0
    %4731 = vmatprep.subr.mxu0 0.0
    %4732 = vmatpush1.msra.mxu0 0.0
    %4733 = vmatprep.subr.mxu0 0.0
    %4734 = vmatpush1.msra.mxu0 0.0
    %4735 = vmatprep.subr.mxu0 0.0
    %4736 = vmatpush1.msra.mxu0 0.0
    %4737 = vmatprep.subr.mxu0 0.0
    %4738 = vmatpush1.msra.mxu0 0.0
    %4739 = vmatprep.subr.mxu0 0.0
    %4740 = vmatpush1.msra.mxu0 0.0
    %4741 = vmatprep.subr.mxu0 0.0
    %4742 = vmatpush1.msra.mxu0 0.0
    %4743 = vmatprep.subr.mxu0 0.0
    %4744 = vmatpush1.msra.mxu0 0.0
    %4745 = vmatprep.subr.mxu0 0.0
    %4746 = vmatpush1.msra.mxu0 0.0
    %4747 = vmatprep.subr.mxu0 0.0
    %4748 = vmatpush1.msra.mxu0 0.0
    %4749 = vmatprep.subr.mxu0 0.0
    %4750 = vmatpush1.msra.mxu0 0.0
    %4751 = vmatprep.subr.mxu0 0.0
    %4752 = vmatpush1.msra.mxu0 0.0
    %4753 = vmatprep.subr.mxu0 0.0
    %4754 = vmatpush1.msra.mxu0 0.0
    %4755 = vmatprep.subr.mxu0 0.0
    %4756 = vmatpush1.msra.mxu0 0.0
    %4757 = vmatprep.subr.mxu0 0.0
    %4758 = vmatpush1.msra.mxu0 %v4722
    %4759 = vmatprep.subr.mxu0 0.0
    %4760 = vmatpush2.msra.mxu0 0.0
    %4761 = vmatprep.subr.mxu0 0.0
    %4762 = vmatpush2.msra.mxu0 0.0
    %4763 = vmatprep.subr.mxu0 0.0
    %4764 = vmatpush2.msra.mxu0 0.0
    %4765 = vmatprep.subr.mxu0 0.0
    %4766 = vmatpush2.msra.mxu0 0.0
    %4767 = vmatprep.subr.mxu0 0.0
    %4768 = vmatpush2.msra.mxu0 0.0
    %4769 = vmatprep.subr.mxu0 0.0
    %4770 = vmatpush2.msra.mxu0 0.0
    %4771 = vmatprep.subr.mxu0 0.0
    %4772 = vmatpush2.msra.mxu0 0.0
    %4773 = vmatprep.subr.mxu0 0.0
    %4774 = vmatpush2.msra.mxu0 0.0
    %4775 = vmatprep.subr.mxu0 0.0
    %4776 = vmatpush2.msra.mxu0 0.0
    %4777 = vmatprep.subr.mxu0 0.0
    %4778 = vmatpush2.msra.mxu0 0.0
    %4779 = vmatprep.subr.mxu0 0.0
    %4780 = vmatpush2.msra.mxu0 0.0
    %4781 = vmatprep.subr.mxu0 0.0
    %4782 = vmatpush2.msra.mxu0 0.0
    %4783 = vmatprep.subr.mxu0 0.0
    %4784 = vmatpush2.msra.mxu0 0.0
    %4785 = vmatprep.subr.mxu0 0.0
    %4786 = vmatpush2.msra.mxu0 0.0
    %4787 = vmatprep.subr.mxu0 0.0
    %4788 = vmatpush2.msra.mxu0 0.0
    %4789 = vmatprep.subr.mxu0 0.0
    %4790 = vmatpush2.msra.mxu0 0.0
    %4791 = vmatprep.mubr.f32.mxu0 0.0
    %4792 = vmatmul.mubr.f32.gmra.mxu0 %v4725
    %v4793 = vpop.f32.mrf.mxu0
    %v4794 = vadd.f32 0.0, %v4793
    %v4795 = vpop.f32.mrf.mxu0
    %4796 = vdwg.mxu0
    %4797 = vrot.lane.b32.xlu0 %v3551, 48
    %v4798 = vpop.permute.xlu0 %4797
    %v4801 = vsel %vm587, %v4568, 0
    %4803 = vmatprep.subr.mxu0 0.0
    %4804 = vmatpush1.msra.mxu0 0.0
    %4805 = vmatprep.subr.mxu0 0.0
    %4806 = vmatpush1.msra.mxu0 0.0
    %4807 = vmatprep.subr.mxu0 0.0
    %4808 = vmatpush1.msra.mxu0 0.0
    %4809 = vmatprep.subr.mxu0 0.0
    %4810 = vmatpush1.msra.mxu0 0.0
    %4811 = vmatprep.subr.mxu0 0.0
    %4812 = vmatpush1.msra.mxu0 0.0
    %4813 = vmatprep.subr.mxu0 0.0
    %4814 = vmatpush1.msra.mxu0 0.0
    %4815 = vmatprep.subr.mxu0 0.0
    %4816 = vmatpush1.msra.mxu0 0.0
    %4817 = vmatprep.subr.mxu0 0.0
    %4818 = vmatpush1.msra.mxu0 0.0
    %4819 = vmatprep.subr.mxu0 0.0
    %4820 = vmatpush1.msra.mxu0 0.0
    %4821 = vmatprep.subr.mxu0 0.0
    %4822 = vmatpush1.msra.mxu0 0.0
    %4823 = vmatprep.subr.mxu0 0.0
    %4824 = vmatpush1.msra.mxu0 0.0
    %4825 = vmatprep.subr.mxu0 0.0
    %4826 = vmatpush1.msra.mxu0 0.0
    %4827 = vmatprep.subr.mxu0 0.0
    %4828 = vmatpush1.msra.mxu0 0.0
    %4829 = vmatprep.subr.mxu0 0.0
    %4830 = vmatpush1.msra.mxu0 0.0
    %4831 = vmatprep.subr.mxu0 0.0
    %4832 = vmatpush1.msra.mxu0 0.0
    %4833 = vmatprep.subr.mxu0 0.0
    %4834 = vmatpush1.msra.mxu0 %v4798
    %4835 = vmatprep.subr.mxu0 0.0
    %4836 = vmatpush2.msra.mxu0 0.0
    %4837 = vmatprep.subr.mxu0 0.0
    %4838 = vmatpush2.msra.mxu0 0.0
    %4839 = vmatprep.subr.mxu0 0.0
    %4840 = vmatpush2.msra.mxu0 0.0
    %4841 = vmatprep.subr.mxu0 0.0
    %4842 = vmatpush2.msra.mxu0 0.0
    %4843 = vmatprep.subr.mxu0 0.0
    %4844 = vmatpush2.msra.mxu0 0.0
    %4845 = vmatprep.subr.mxu0 0.0
    %4846 = vmatpush2.msra.mxu0 0.0
    %4847 = vmatprep.subr.mxu0 0.0
    %4848 = vmatpush2.msra.mxu0 0.0
    %4849 = vmatprep.subr.mxu0 0.0
    %4850 = vmatpush2.msra.mxu0 0.0
    %4851 = vmatprep.subr.mxu0 0.0
    %4852 = vmatpush2.msra.mxu0 0.0
    %4853 = vmatprep.subr.mxu0 0.0
    %4854 = vmatpush2.msra.mxu0 0.0
    %4855 = vmatprep.subr.mxu0 0.0
    %4856 = vmatpush2.msra.mxu0 0.0
    %4857 = vmatprep.subr.mxu0 0.0
    %4858 = vmatpush2.msra.mxu0 0.0
    %4859 = vmatprep.subr.mxu0 0.0
    %4860 = vmatpush2.msra.mxu0 0.0
    %4861 = vmatprep.subr.mxu0 0.0
    %4862 = vmatpush2.msra.mxu0 0.0
    %4863 = vmatprep.subr.mxu0 0.0
    %4864 = vmatpush2.msra.mxu0 0.0
    %4865 = vmatprep.subr.mxu0 0.0
    %4866 = vmatpush2.msra.mxu0 0.0
    %4867 = vmatprep.mubr.f32.mxu0 0.0
    %4868 = vmatmul.mubr.f32.gmra.mxu0 %v4801
    %v4869 = vpop.f32.mrf.mxu0
    %v4870 = vadd.f32 0.0, %v4869
    %v4871 = vpop.f32.mrf.mxu0
    %4872 = vdwg.mxu0
    %s4873 = scalar_lea.vmem %s6, 80
    %v4874 = vld [vmem:[%s4873] sm:$0xff]
    %v4875 = vld [vmem:[%s4873 + $0x8] sm:$0xff]
    %v4877 = vsel %vm72, %v4642, 0
    %v4880 = vsel %vm72, %v4718, 0
    %v4883 = vsel %vm72, %v4794, 0
    %v4886 = vsel %vm72, %v4870, 0
    %4888 = vmatprep.subr.mxu0 0.0
    %4889 = vmatpush1.msra.mxu0 0.0
    %4890 = vmatprep.subr.mxu0 0.0
    %4891 = vmatpush1.msra.mxu0 0.0
    %4892 = vmatprep.subr.mxu0 0.0
    %4893 = vmatpush1.msra.mxu0 0.0
    %4894 = vmatprep.subr.mxu0 0.0
    %4895 = vmatpush1.msra.mxu0 0.0
    %4896 = vmatprep.subr.mxu0 0.0
    %4897 = vmatpush1.msra.mxu0 0.0
    %4898 = vmatprep.subr.mxu0 0.0
    %4899 = vmatpush1.msra.mxu0 0.0
    %4900 = vmatprep.subr.mxu0 0.0
    %4901 = vmatpush1.msra.mxu0 0.0
    %4902 = vmatprep.subr.mxu0 0.0
    %4903 = vmatpush1.msra.mxu0 0.0
    %4904 = vmatprep.subr.mxu0 0.0
    %4905 = vmatpush1.msra.mxu0 0.0
    %4906 = vmatprep.subr.mxu0 0.0
    %4907 = vmatpush1.msra.mxu0 0.0
    %4908 = vmatprep.subr.mxu0 0.0
    %4909 = vmatpush1.msra.mxu0 0.0
    %4910 = vmatprep.subr.mxu0 0.0
    %4911 = vmatpush1.msra.mxu0 0.0
    %4912 = vmatprep.subr.mxu0 0.0
    %4913 = vmatpush1.msra.mxu0 0.0
    %4914 = vmatprep.subr.mxu0 0.0
    %4915 = vmatpush1.msra.mxu0 0.0
    %4916 = vmatprep.subr.mxu0 0.0
    %4917 = vmatpush1.msra.mxu0 %v4875
    %4918 = vmatprep.subr.mxu0 0.0
    %4919 = vmatpush1.msra.mxu0 %v4874
    %4920 = vmatprep.subr.mxu0 0.0
    %4921 = vmatpush2.msra.mxu0 0.0
    %4922 = vmatprep.subr.mxu0 0.0
    %4923 = vmatpush2.msra.mxu0 0.0
    %4924 = vmatprep.subr.mxu0 0.0
    %4925 = vmatpush2.msra.mxu0 0.0
    %4926 = vmatprep.subr.mxu0 0.0
    %4927 = vmatpush2.msra.mxu0 0.0
    %4928 = vmatprep.subr.mxu0 0.0
    %4929 = vmatpush2.msra.mxu0 0.0
    %4930 = vmatprep.subr.mxu0 0.0
    %4931 = vmatpush2.msra.mxu0 0.0
    %4932 = vmatprep.subr.mxu0 0.0
    %4933 = vmatpush2.msra.mxu0 0.0
    %4934 = vmatprep.subr.mxu0 0.0
    %4935 = vmatpush2.msra.mxu0 0.0
    %4936 = vmatprep.subr.mxu0 0.0
    %4937 = vmatpush2.msra.mxu0 0.0
    %4938 = vmatprep.subr.mxu0 0.0
    %4939 = vmatpush2.msra.mxu0 0.0
    %4940 = vmatprep.subr.mxu0 0.0
    %4941 = vmatpush2.msra.mxu0 0.0
    %4942 = vmatprep.subr.mxu0 0.0
    %4943 = vmatpush2.msra.mxu0 0.0
    %4944 = vmatprep.subr.mxu0 0.0
    %4945 = vmatpush2.msra.mxu0 0.0
    %4946 = vmatprep.subr.mxu0 0.0
    %4947 = vmatpush2.msra.mxu0 0.0
    %4948 = vmatprep.subr.mxu0 0.0
    %4949 = vmatpush2.msra.mxu0 0.0
    %4950 = vmatprep.subr.mxu0 0.0
    %4951 = vmatpush2.msra.mxu0 0.0
    %4952 = vmatprep.mubr.f32.mxu0 0.0
    %4953 = vmatmul.mubr.f32.gmra.mxu0 %v4877
    %v4954 = vpop.f32.mrf.mxu0
    %v4955 = vadd.f32 0.0, %v4954
    %v4956 = vpop.f32.mrf.mxu0
    %4957 = vmatprep.mubr.f32.mxu0 0.0
    %4958 = vmatmul.mubr.f32.gmra.mxu0 %v4880
    %v4959 = vpop.f32.mrf.mxu0
    %v4960 = vadd.f32 0.0, %v4959
    %v4961 = vpop.f32.mrf.mxu0
    %4962 = vmatprep.mubr.f32.mxu0 0.0
    %4963 = vmatmul.mubr.f32.gmra.mxu0 %v4883
    %v4964 = vpop.f32.mrf.mxu0
    %v4965 = vadd.f32 0.0, %v4964
    %v4966 = vpop.f32.mrf.mxu0
    %4967 = vmatprep.mubr.f32.mxu0 0.0
    %4968 = vmatmul.mubr.f32.gmra.mxu0 %v4886
    %v4969 = vpop.f32.mrf.mxu0
    %v4970 = vadd.f32 0.0, %v4969
    %v4971 = vpop.f32.mrf.mxu0
    %4972 = vdwg.mxu0
    %v4974 = vsel %vm72, %v3979, 0
    %v4977 = vsel %vm72, %v4055, 0
    %v4980 = vsel %vm72, %v4131, 0
    %v4983 = vsel %vm72, %v4207, 0
    %4985 = vmatprep.subr.mxu0 0.0
    %4986 = vmatpush1.msra.mxu0 0.0
    %4987 = vmatprep.subr.mxu0 0.0
    %4988 = vmatpush1.msra.mxu0 0.0
    %4989 = vmatprep.subr.mxu0 0.0
    %4990 = vmatpush1.msra.mxu0 0.0
    %4991 = vmatprep.subr.mxu0 0.0
    %4992 = vmatpush1.msra.mxu0 0.0
    %4993 = vmatprep.subr.mxu0 0.0
    %4994 = vmatpush1.msra.mxu0 0.0
    %4995 = vmatprep.subr.mxu0 0.0
    %4996 = vmatpush1.msra.mxu0 0.0
    %4997 = vmatprep.subr.mxu0 0.0
    %4998 = vmatpush1.msra.mxu0 0.0
    %4999 = vmatprep.subr.mxu0 0.0
    %5000 = vmatpush1.msra.mxu0 0.0
    %5001 = vmatprep.subr.mxu0 0.0
    %5002 = vmatpush1.msra.mxu0 0.0
    %5003 = vmatprep.subr.mxu0 0.0
    %5004 = vmatpush1.msra.mxu0 0.0
    %5005 = vmatprep.subr.mxu0 0.0
    %5006 = vmatpush1.msra.mxu0 0.0
    %5007 = vmatprep.subr.mxu0 0.0
    %5008 = vmatpush1.msra.mxu0 0.0
    %5009 = vmatprep.subr.mxu0 0.0
    %5010 = vmatpush1.msra.mxu0 0.0
    %5011 = vmatprep.subr.mxu0 0.0
    %5012 = vmatpush1.msra.mxu0 0.0
    %5013 = vmatprep.subr.mxu0 0.0
    %5014 = vmatpush1.msra.mxu0 %v4212
    %5015 = vmatprep.subr.mxu0 0.0
    %5016 = vmatpush1.msra.mxu0 %v4211
    %5017 = vmatprep.subr.mxu0 0.0
    %5018 = vmatpush2.msra.mxu0 0.0
    %5019 = vmatprep.subr.mxu0 0.0
    %5020 = vmatpush2.msra.mxu0 0.0
    %5021 = vmatprep.subr.mxu0 0.0
    %5022 = vmatpush2.msra.mxu0 0.0
    %5023 = vmatprep.subr.mxu0 0.0
    %5024 = vmatpush2.msra.mxu0 0.0
    %5025 = vmatprep.subr.mxu0 0.0
    %5026 = vmatpush2.msra.mxu0 0.0
    %5027 = vmatprep.subr.mxu0 0.0
    %5028 = vmatpush2.msra.mxu0 0.0
    %5029 = vmatprep.subr.mxu0 0.0
    %5030 = vmatpush2.msra.mxu0 0.0
    %5031 = vmatprep.subr.mxu0 0.0
    %5032 = vmatpush2.msra.mxu0 0.0
    %5033 = vmatprep.subr.mxu0 0.0
    %5034 = vmatpush2.msra.mxu0 0.0
    %5035 = vmatprep.subr.mxu0 0.0
    %5036 = vmatpush2.msra.mxu0 0.0
    %5037 = vmatprep.subr.mxu0 0.0
    %5038 = vmatpush2.msra.mxu0 0.0
    %5039 = vmatprep.subr.mxu0 0.0
    %5040 = vmatpush2.msra.mxu0 0.0
    %5041 = vmatprep.subr.mxu0 0.0
    %5042 = vmatpush2.msra.mxu0 0.0
    %5043 = vmatprep.subr.mxu0 0.0
    %5044 = vmatpush2.msra.mxu0 0.0
    %5045 = vmatprep.subr.mxu0 0.0
    %5046 = vmatpush2.msra.mxu0 0.0
    %5047 = vmatprep.subr.mxu0 0.0
    %5048 = vmatpush2.msra.mxu0 0.0
    %5049 = vmatprep.mubr.f32.mxu0 0.0
    %5050 = vmatmul.mubr.f32.gmra.mxu0 %v4974
    %v5051 = vpop.f32.mrf.mxu0
    %v5052 = vadd.f32 %v4955, %v5051
    %v5053 = vpop.f32.mrf.mxu0
    %5054 = vmatprep.mubr.f32.mxu0 0.0
    %5055 = vmatmul.mubr.f32.gmra.mxu0 %v4977
    %v5056 = vpop.f32.mrf.mxu0
    %v5057 = vadd.f32 %v4960, %v5056
    %v5058 = vpop.f32.mrf.mxu0
    %5059 = vmatprep.mubr.f32.mxu0 0.0
    %5060 = vmatmul.mubr.f32.gmra.mxu0 %v4980
    %v5061 = vpop.f32.mrf.mxu0
    %v5062 = vadd.f32 %v4965, %v5061
    %v5063 = vpop.f32.mrf.mxu0
    %5064 = vmatprep.mubr.f32.mxu0 0.0
    %5065 = vmatmul.mubr.f32.gmra.mxu0 %v4983
    %v5066 = vpop.f32.mrf.mxu0
    %v5067 = vadd.f32 %v4970, %v5066
    %v5068 = vpop.f32.mrf.mxu0
    %5069 = vdwg.mxu0
    %s5070 = scalar_lea.vmem %s7, 2
    %v5071 = vld [vmem:[%s5070] sm:$0x1]
    %v5073 = vlaneseq
    %v5074 = vshrl.u32 %v5073, 7
    %v5075 = vsub.s32 0, %v5074
    %v5076 = vrot.slane %v5071, %v5075
    %v5078 = vadd.f32 %v5052, %v5076
    %v5079 = vadd.f32 %v5057, %v5076
    %v5080 = vadd.f32 %v5062, %v5076
    %v5081 = vadd.f32 %v5067, %v5076
    %5082 = vrot.lane.b32.xlu0 %v152, 96
    %v5083 = vpop.permute.xlu0 %5082
    %5084 = vrot.lane.b32.xlu0 %v157, 96
    %v5085 = vpop.permute.xlu0 %5084
    %5086 = vrot.lane.b32.xlu0 %v162, 96
    %v5087 = vpop.permute.xlu0 %5086
    %5088 = vrot.lane.b32.xlu0 %v167, 96
    %v5089 = vpop.permute.xlu0 %5088
    %v5094 = vadd.f32 %v5078, %v5083
    %v5095 = vadd.f32 %v5079, %v5085
    %v5096 = vadd.f32 %v5080, %v5087
    %v5097 = vadd.f32 %v5081, %v5089
    %v5098 = vmax.f32 %v5094, 0.0
    %v5099 = vmax.f32 %v5095, 0.0
    %v5100 = vmax.f32 %v5096, 0.0
    %v5101 = vmax.f32 %v5097, 0.0
    %v5102 = vld [vmem:[%s8] sm:$0xff]
    %v5103 = vmul.f32 %v5098, %v5102
    %v5104 = vmul.f32 %v5099, %v5102
    %v5105 = vmul.f32 %v5100, %v5102
    %v5106 = vmul.f32 %v5101, %v5102
    %v5107 = vsel %vm181, %v5103, 0.0
    %5108 = vadd.xlane.f32.xlu0 %v5107
    %v5109 = vpop.xlane.xlu0 %5108
    %v5110 = vsel %vm181, %v5104, 0.0
    %5111 = vadd.xlane.f32.xlu0 %v5110
    %v5112 = vpop.xlane.xlu0 %5111
    %v5113 = vsel %vm181, %v5105, 0.0
    %5114 = vadd.xlane.f32.xlu0 %v5113
    %v5115 = vpop.xlane.xlu0 %5114
    %v5116 = vsel %vm181, %v5106, 0.0
    %5117 = vadd.xlane.f32.xlu0 %v5116
    %v5118 = vpop.xlane.xlu0 %5117
    %v5123 = vlaneseq
    %v5124 = vand.u32 %v5123, 127
    %v5125 = vlaneseq
    %v5126 = vshrl.u32 %v5125, 7
    %v5127 = vsub.s32 %v5124, %v5126
    %v5128 = vrot.slane %v5109, %v5127
    %v5129 = vlaneseq
    %v5130 = vshrl.u32 %v5129, 7
    %v5131 = vsub.s32 %v5124, %v5130
    %v5132 = vrot.slane %v5112, %v5131
    %v5133 = vlaneseq
    %v5134 = vshrl.u32 %v5133, 7
    %v5135 = vsub.s32 %v5124, %v5134
    %v5136 = vrot.slane %v5115, %v5135
    %v5137 = vlaneseq
    %v5138 = vshrl.u32 %v5137, 7
    %v5139 = vsub.s32 %v5124, %v5138
    %v5140 = vrot.slane %v5118, %v5139
    %vm5141 = vcmask 1041409
    %v5142 = vsel %vm5141, %v5132, %v5128
    %vm5143 = vcmask 1042434
    %v5144 = vsel %vm5143, %v5136, %v5142
    %vm5145 = vcmask 1043459
    %v5146 = vsel %vm5145, %v5140, %v5144
    %vm5148 = vcmask 60416
    %v5149 = vsel %vm5148, %v5146, 0.0
    %5150 = vadd.xlane.f32.xlu0 %v5149
    %v5151 = vpop.xlane.xlu0 %5150
    %v5152 = vld [vmem:[%s1] sm:$0xf]
    %v5153 = vsel %vm5148, %v5152, 0.0
    %5154 = vadd.xlane.f32.xlu0 %v5153
    %v5155 = vpop.xlane.xlu0 %5154
    %v5156 = vcombine.low %v59, %v61
    %v5157 = vcombine.high %v59, %v61
    %v5159 = vunpack.c.l.s4 1983009808
    %v5160 = vunpack.c.0.s8 %v5159
    %v5161 = vlaneseq
    %v5162 = vshrl.u32 %v5161, 7
    %v5163 = vsub.s32 %v5160, %v5162
    %v5164 = vrot.slane %v5156, %v5163
    %v5166 = vunpack.c.l.s4 1983009808
    %v5167 = vunpack.c.0.s8 %v5166
    %v5168 = vlaneseq
    %v5169 = vshrl.u32 %v5168, 7
    %v5170 = vsub.s32 %v5167, %v5169
    %v5171 = vrot.slane %v5157, %v5170
    %v5172 = vcombine.low %v60, %v62
    %v5173 = vcombine.high %v60, %v62
    %v5175 = vunpack.c.l.s4 1983009808
    %v5176 = vunpack.c.0.s8 %v5175
    %v5177 = vlaneseq
    %v5178 = vshrl.u32 %v5177, 7
    %v5179 = vsub.s32 %v5176, %v5178
    %v5180 = vrot.slane %v5172, %v5179
    %v5182 = vunpack.c.l.s4 1983009808
    %v5183 = vunpack.c.0.s8 %v5182
    %v5184 = vlaneseq
    %v5185 = vshrl.u32 %v5184, 7
    %v5186 = vsub.s32 %v5183, %v5185
    %v5187 = vrot.slane %v5173, %v5186
    %v5188 = vcombine.low %v5164, %v5180
    %v5189 = vcombine.high %v5164, %v5180
    %v5191 = vunpack.c.l.s4 1934713408
    %v5192 = vunpack.c.0.s8 %v5191
    %v5193 = vlaneseq
    %v5194 = vshrl.u32 %v5193, 7
    %v5195 = vsub.s32 %v5192, %v5194
    %v5196 = vrot.slane %v5188, %v5195
    %v5198 = vunpack.c.l.s4 1934713408
    %v5199 = vunpack.c.0.s8 %v5198
    %v5200 = vlaneseq
    %v5201 = vshrl.u32 %v5200, 7
    %v5202 = vsub.s32 %v5199, %v5201
    %v5203 = vrot.slane %v5189, %v5202
    %v5204 = vcombine.low %v5171, %v5187
    %v5205 = vcombine.high %v5171, %v5187
    %v5207 = vunpack.c.l.s4 1934713408
    %v5208 = vunpack.c.0.s8 %v5207
    %v5209 = vlaneseq
    %v5210 = vshrl.u32 %v5209, 7
    %v5211 = vsub.s32 %v5208, %v5210
    %v5212 = vrot.slane %v5204, %v5211
    %v5214 = vunpack.c.l.s4 1934713408
    %v5215 = vunpack.c.0.s8 %v5214
    %v5216 = vlaneseq
    %v5217 = vshrl.u32 %v5216, 7
    %v5218 = vsub.s32 %v5215, %v5217
    %v5219 = vrot.slane %v5205, %v5218
    %v5220 = vcombine.high %v5196, 0.0
    %v5221 = vcombine.high %v5203, 0.0
    %v5222 = vcombine.high %v5212, 0.0
    %v5223 = vcombine.high %v5219, 0.0
    %5225 = vrot.lane.b32.xlu0 %v5220, 16
    %v5226 = vpop.permute.xlu0 %5225
    %5229 = vrot.lane.b32.xlu0 %v5203, 32
    %v5230 = vpop.permute.xlu0 %5229
    %5233 = vrot.lane.b32.xlu0 %v5221, 48
    %v5234 = vpop.permute.xlu0 %5233
    %5237 = vrot.lane.b32.xlu0 %v5212, 64
    %v5238 = vpop.permute.xlu0 %5237
    %5241 = vrot.lane.b32.xlu0 %v5222, 80
    %v5242 = vpop.permute.xlu0 %5241
    %5245 = vrot.lane.b32.xlu0 %v5219, 96
    %v5246 = vpop.permute.xlu0 %5245
    %5249 = vrot.lane.b32.xlu0 %v5223, 112
    %v5250 = vpop.permute.xlu0 %5249
    %v5252 = vsel %vm72, %v5196, %v5226
    %v5253 = vsel %vm181, %v5252, %v5230
    %vm5254 = vcmask 392192
    %v5255 = vsel %vm5254, %v5253, %v5234
    %vm5256 = vcmask 523264
    %v5257 = vsel %vm5256, %v5255, %v5238
    %vm5258 = vcmask 654336
    %v5259 = vsel %vm5258, %v5257, %v5242
    %vm5260 = vcmask 785408
    %v5261 = vsel %vm5260, %v5259, %v5246
    %vm5262 = vcmask 916480
    %v5263 = vsel %vm5262, %v5261, %v5250
    %v5264 = vld [vmem:[%s9] sm:$0xff]
    %v5265 = vld [vmem:[%s9 + $0x8] sm:$0xff]
    %v5266 = vld [vmem:[%s9 + $0x10] sm:$0xff]
    %v5267 = vld [vmem:[%s9 + $0x18] sm:$0xff]
    %v5268 = vld [vmem:[%s9 + $0x20] sm:$0xff]
    %v5269 = vld [vmem:[%s9 + $0x28] sm:$0xff]
    %v5270 = vld [vmem:[%s9 + $0x30] sm:$0xff]
    %v5271 = vld [vmem:[%s9 + $0x38] sm:$0xff]
    %v5272 = vld [vmem:[%s9 + $0x40] sm:$0xff]
    %v5273 = vld [vmem:[%s9 + $0x48] sm:$0xff]
    %v5274 = vld [vmem:[%s9 + $0x50] sm:$0xff]
    %v5275 = vld [vmem:[%s9 + $0x58] sm:$0xff]
    %v5276 = vld [vmem:[%s9 + $0x60] sm:$0xff]
    %v5277 = vld [vmem:[%s9 + $0x68] sm:$0xff]
    %v5278 = vld [vmem:[%s9 + $0x70] sm:$0xff]
    %v5279 = vld [vmem:[%s9 + $0x78] sm:$0xff]
    %v5280 = vld [vmem:[%s10] sm:$0x1]
    %v5282 = vlaneseq
    %v5283 = vshrl.u32 %v5282, 7
    %v5284 = vsub.s32 0, %v5283
    %v5285 = vrot.slane %v5280, %v5284
    %5287 = vmatprep.subr.mxu0 0.0
    %5288 = vmatpush1.msra.mxu0 %v5279
    %5289 = vmatprep.subr.mxu0 0.0
    %5290 = vmatpush1.msra.mxu0 %v5278
    %5291 = vmatprep.subr.mxu0 0.0
    %5292 = vmatpush1.msra.mxu0 %v5277
    %5293 = vmatprep.subr.mxu0 0.0
    %5294 = vmatpush1.msra.mxu0 %v5276
    %5295 = vmatprep.subr.mxu0 0.0
    %5296 = vmatpush1.msra.mxu0 %v5275
    %5297 = vmatprep.subr.mxu0 0.0
    %5298 = vmatpush1.msra.mxu0 %v5274
    %5299 = vmatprep.subr.mxu0 0.0
    %5300 = vmatpush1.msra.mxu0 %v5273
    %5301 = vmatprep.subr.mxu0 0.0
    %5302 = vmatpush1.msra.mxu0 %v5272
    %5303 = vmatprep.subr.mxu0 0.0
    %5304 = vmatpush1.msra.mxu0 %v5271
    %5305 = vmatprep.subr.mxu0 0.0
    %5306 = vmatpush1.msra.mxu0 %v5270
    %5307 = vmatprep.subr.mxu0 0.0
    %5308 = vmatpush1.msra.mxu0 %v5269
    %5309 = vmatprep.subr.mxu0 0.0
    %5310 = vmatpush1.msra.mxu0 %v5268
    %5311 = vmatprep.subr.mxu0 0.0
    %5312 = vmatpush1.msra.mxu0 %v5267
    %5313 = vmatprep.subr.mxu0 0.0
    %5314 = vmatpush1.msra.mxu0 %v5266
    %5315 = vmatprep.subr.mxu0 0.0
    %5316 = vmatpush1.msra.mxu0 %v5265
    %5317 = vmatprep.subr.mxu0 0.0
    %5318 = vmatpush1.msra.mxu0 %v5264
    %5319 = vmatprep.subr.mxu0 0.0
    %5320 = vmatpush2.msra.mxu0 0.0
    %5321 = vmatprep.subr.mxu0 0.0
    %5322 = vmatpush2.msra.mxu0 0.0
    %5323 = vmatprep.subr.mxu0 0.0
    %5324 = vmatpush2.msra.mxu0 0.0
    %5325 = vmatprep.subr.mxu0 0.0
    %5326 = vmatpush2.msra.mxu0 0.0
    %5327 = vmatprep.subr.mxu0 0.0
    %5328 = vmatpush2.msra.mxu0 0.0
    %5329 = vmatprep.subr.mxu0 0.0
    %5330 = vmatpush2.msra.mxu0 0.0
    %5331 = vmatprep.subr.mxu0 0.0
    %5332 = vmatpush2.msra.mxu0 0.0
    %5333 = vmatprep.subr.mxu0 0.0
    %5334 = vmatpush2.msra.mxu0 0.0
    %5335 = vmatprep.subr.mxu0 0.0
    %5336 = vmatpush2.msra.mxu0 0.0
    %5337 = vmatprep.subr.mxu0 0.0
    %5338 = vmatpush2.msra.mxu0 0.0
    %5339 = vmatprep.subr.mxu0 0.0
    %5340 = vmatpush2.msra.mxu0 0.0
    %5341 = vmatprep.subr.mxu0 0.0
    %5342 = vmatpush2.msra.mxu0 0.0
    %5343 = vmatprep.subr.mxu0 0.0
    %5344 = vmatpush2.msra.mxu0 0.0
    %5345 = vmatprep.subr.mxu0 0.0
    %5346 = vmatpush2.msra.mxu0 0.0
    %5347 = vmatprep.subr.mxu0 0.0
    %5348 = vmatpush2.msra.mxu0 0.0
    %5349 = vmatprep.subr.mxu0 0.0
    %5350 = vmatpush2.msra.mxu0 0.0
    %5351 = vmatprep.mubr.f32.mxu0 0.0
    %5352 = vmatmul.mubr.f32.gmra.mxu0 %v5263
    %v5353 = vpop.f32.mrf.mxu0
    %v5354 = vadd.f32 %v5285, %v5353
    %v5355 = vpop.f32.mrf.mxu0
    %5356 = vdwg.mxu0
    %v5357 = vmax.f32 %v5354, 0.0
    %v5358 = vld [vmem:[%s11] sm:$0xff]
    %v5359 = vld [vmem:[%s11 + $0x8] sm:$0xff]
    %v5360 = vld [vmem:[%s11 + $0x10] sm:$0xff]
    %v5361 = vld [vmem:[%s11 + $0x18] sm:$0xff]
    %v5362 = vld [vmem:[%s11 + $0x20] sm:$0xff]
    %v5363 = vld [vmem:[%s11 + $0x28] sm:$0xff]
    %v5364 = vld [vmem:[%s11 + $0x30] sm:$0xff]
    %v5365 = vld [vmem:[%s11 + $0x38] sm:$0xff]
    %v5366 = vld [vmem:[%s12] sm:$0x1]
    %v5368 = vlaneseq
    %v5369 = vshrl.u32 %v5368, 7
    %v5370 = vsub.s32 0, %v5369
    %v5371 = vrot.slane %v5366, %v5370
    %v5374 = vsel %vm5256, %v5357, 0
    %5376 = vmatprep.subr.mxu0 0.0
    %5377 = vmatpush1.msra.mxu0 0.0
    %5378 = vmatprep.subr.mxu0 0.0
    %5379 = vmatpush1.msra.mxu0 0.0
    %5380 = vmatprep.subr.mxu0 0.0
    %5381 = vmatpush1.msra.mxu0 0.0
    %5382 = vmatprep.subr.mxu0 0.0
    %5383 = vmatpush1.msra.mxu0 0.0
    %5384 = vmatprep.subr.mxu0 0.0
    %5385 = vmatpush1.msra.mxu0 0.0
    %5386 = vmatprep.subr.mxu0 0.0
    %5387 = vmatpush1.msra.mxu0 0.0
    %5388 = vmatprep.subr.mxu0 0.0
    %5389 = vmatpush1.msra.mxu0 0.0
    %5390 = vmatprep.subr.mxu0 0.0
    %5391 = vmatpush1.msra.mxu0 0.0
    %5392 = vmatprep.subr.mxu0 0.0
    %5393 = vmatpush1.msra.mxu0 %v5365
    %5394 = vmatprep.subr.mxu0 0.0
    %5395 = vmatpush1.msra.mxu0 %v5364
    %5396 = vmatprep.subr.mxu0 0.0
    %5397 = vmatpush1.msra.mxu0 %v5363
    %5398 = vmatprep.subr.mxu0 0.0
    %5399 = vmatpush1.msra.mxu0 %v5362
    %5400 = vmatprep.subr.mxu0 0.0
    %5401 = vmatpush1.msra.mxu0 %v5361
    %5402 = vmatprep.subr.mxu0 0.0
    %5403 = vmatpush1.msra.mxu0 %v5360
    %5404 = vmatprep.subr.mxu0 0.0
    %5405 = vmatpush1.msra.mxu0 %v5359
    %5406 = vmatprep.subr.mxu0 0.0
    %5407 = vmatpush1.msra.mxu0 %v5358
    %5408 = vmatprep.subr.mxu0 0.0
    %5409 = vmatpush2.msra.mxu0 0.0
    %5410 = vmatprep.subr.mxu0 0.0
    %5411 = vmatpush2.msra.mxu0 0.0
    %5412 = vmatprep.subr.mxu0 0.0
    %5413 = vmatpush2.msra.mxu0 0.0
    %5414 = vmatprep.subr.mxu0 0.0
    %5415 = vmatpush2.msra.mxu0 0.0
    %5416 = vmatprep.subr.mxu0 0.0
    %5417 = vmatpush2.msra.mxu0 0.0
    %5418 = vmatprep.subr.mxu0 0.0
    %5419 = vmatpush2.msra.mxu0 0.0
    %5420 = vmatprep.subr.mxu0 0.0
    %5421 = vmatpush2.msra.mxu0 0.0
    %5422 = vmatprep.subr.mxu0 0.0
    %5423 = vmatpush2.msra.mxu0 0.0
    %5424 = vmatprep.subr.mxu0 0.0
    %5425 = vmatpush2.msra.mxu0 0.0
    %5426 = vmatprep.subr.mxu0 0.0
    %5427 = vmatpush2.msra.mxu0 0.0
    %5428 = vmatprep.subr.mxu0 0.0
    %5429 = vmatpush2.msra.mxu0 0.0
    %5430 = vmatprep.subr.mxu0 0.0
    %5431 = vmatpush2.msra.mxu0 0.0
    %5432 = vmatprep.subr.mxu0 0.0
    %5433 = vmatpush2.msra.mxu0 0.0
    %5434 = vmatprep.subr.mxu0 0.0
    %5435 = vmatpush2.msra.mxu0 0.0
    %5436 = vmatprep.subr.mxu0 0.0
    %5437 = vmatpush2.msra.mxu0 0.0
    %5438 = vmatprep.subr.mxu0 0.0
    %5439 = vmatpush2.msra.mxu0 0.0
    %5440 = vmatprep.mubr.f32.mxu0 0.0
    %5441 = vmatmul.mubr.f32.gmra.mxu0 %v5374
    %v5442 = vpop.f32.mrf.mxu0
    %v5443 = vadd.f32 %v5371, %v5442
    %v5444 = vpop.f32.mrf.mxu0
    %5445 = vdwg.mxu0
    %v5446 = vmax.f32 %v5443, 0.0
    %v5447 = vld [vmem:[%s13] sm:$0xff]
    %v5448 = vld [vmem:[%s13 + $0x8] sm:$0xff]
    %v5449 = vld [vmem:[%s13 + $0x10] sm:$0xff]
    %v5450 = vld [vmem:[%s13 + $0x18] sm:$0xff]
    %v5451 = vld [vmem:[%s13 + $0x20] sm:$0xff]
    %v5452 = vld [vmem:[%s13 + $0x28] sm:$0xff]
    %v5453 = vld [vmem:[%s13 + $0x30] sm:$0xff]
    %v5454 = vld [vmem:[%s13 + $0x38] sm:$0xff]
    %v5455 = vld [vmem:[%s14] sm:$0x1]
    %v5457 = vlaneseq
    %v5458 = vshrl.u32 %v5457, 7
    %v5459 = vsub.s32 0, %v5458
    %v5460 = vrot.slane %v5455, %v5459
    %v5463 = vsel %vm5256, %v5446, 0
    %5465 = vmatprep.subr.mxu0 0.0
    %5466 = vmatpush1.msra.mxu0 0.0
    %5467 = vmatprep.subr.mxu0 0.0
    %5468 = vmatpush1.msra.mxu0 0.0
    %5469 = vmatprep.subr.mxu0 0.0
    %5470 = vmatpush1.msra.mxu0 0.0
    %5471 = vmatprep.subr.mxu0 0.0
    %5472 = vmatpush1.msra.mxu0 0.0
    %5473 = vmatprep.subr.mxu0 0.0
    %5474 = vmatpush1.msra.mxu0 0.0
    %5475 = vmatprep.subr.mxu0 0.0
    %5476 = vmatpush1.msra.mxu0 0.0
    %5477 = vmatprep.subr.mxu0 0.0
    %5478 = vmatpush1.msra.mxu0 0.0
    %5479 = vmatprep.subr.mxu0 0.0
    %5480 = vmatpush1.msra.mxu0 0.0
    %5481 = vmatprep.subr.mxu0 0.0
    %5482 = vmatpush1.msra.mxu0 %v5454
    %5483 = vmatprep.subr.mxu0 0.0
    %5484 = vmatpush1.msra.mxu0 %v5453
    %5485 = vmatprep.subr.mxu0 0.0
    %5486 = vmatpush1.msra.mxu0 %v5452
    %5487 = vmatprep.subr.mxu0 0.0
    %5488 = vmatpush1.msra.mxu0 %v5451
    %5489 = vmatprep.subr.mxu0 0.0
    %5490 = vmatpush1.msra.mxu0 %v5450
    %5491 = vmatprep.subr.mxu0 0.0
    %5492 = vmatpush1.msra.mxu0 %v5449
    %5493 = vmatprep.subr.mxu0 0.0
    %5494 = vmatpush1.msra.mxu0 %v5448
    %5495 = vmatprep.subr.mxu0 0.0
    %5496 = vmatpush1.msra.mxu0 %v5447
    %5497 = vmatprep.subr.mxu0 0.0
    %5498 = vmatpush2.msra.mxu0 0.0
    %5499 = vmatprep.subr.mxu0 0.0
    %5500 = vmatpush2.msra.mxu0 0.0
    %5501 = vmatprep.subr.mxu0 0.0
    %5502 = vmatpush2.msra.mxu0 0.0
    %5503 = vmatprep.subr.mxu0 0.0
    %5504 = vmatpush2.msra.mxu0 0.0
    %5505 = vmatprep.subr.mxu0 0.0
    %5506 = vmatpush2.msra.mxu0 0.0
    %5507 = vmatprep.subr.mxu0 0.0
    %5508 = vmatpush2.msra.mxu0 0.0
    %5509 = vmatprep.subr.mxu0 0.0
    %5510 = vmatpush2.msra.mxu0 0.0
    %5511 = vmatprep.subr.mxu0 0.0
    %5512 = vmatpush2.msra.mxu0 0.0
    %5513 = vmatprep.subr.mxu0 0.0
    %5514 = vmatpush2.msra.mxu0 0.0
    %5515 = vmatprep.subr.mxu0 0.0
    %5516 = vmatpush2.msra.mxu0 0.0
    %5517 = vmatprep.subr.mxu0 0.0
    %5518 = vmatpush2.msra.mxu0 0.0
    %5519 = vmatprep.subr.mxu0 0.0
    %5520 = vmatpush2.msra.mxu0 0.0
    %5521 = vmatprep.subr.mxu0 0.0
    %5522 = vmatpush2.msra.mxu0 0.0
    %5523 = vmatprep.subr.mxu0 0.0
    %5524 = vmatpush2.msra.mxu0 0.0
    %5525 = vmatprep.subr.mxu0 0.0
    %5526 = vmatpush2.msra.mxu0 0.0
    %5527 = vmatprep.subr.mxu0 0.0
    %5528 = vmatpush2.msra.mxu0 0.0
    %5529 = vmatprep.mubr.f32.mxu0 0.0
    %5530 = vmatmul.mubr.f32.gmra.mxu0 %v5463
    %v5531 = vpop.f32.mrf.mxu0
    %v5532 = vadd.f32 %v5460, %v5531
    %v5533 = vpop.f32.mrf.mxu0
    %5534 = vdwg.mxu0
    %v5535 = vmax.f32 %v5532, 0.0
    %v5536 = vld [vmem:[%s15] sm:$0x1]
    %v5538 = vlaneseq
    %v5539 = vshrl.u32 %v5538, 7
    %v5540 = vsub.s32 0, %v5539
    %v5541 = vrot.slane %v5536, %v5540
    %v5543 = vmul.f32 %v5535, %v5541
    %vm5544 = vcmask 519168
    %v5545 = vsel %vm5544, %v5543, 0.0
    %5546 = vadd.xlane.f32.xlu0 %v5545
    %v5547 = vpop.xlane.xlu0 %5546
    %v5548 = vadd.f32 %v5155, %v5151
    %v5549 = vadd.f32 %v5548, %v5547
    %v5550 = vld [vmem:[#allocation2] sm:$0x1]
    %5552 = vset.pattern.permute.xlu0 0
    %5553 = vperm.xlu0 %5552, %v5550
    %v5554 = vpop.permute.xlu0 %5553
    %v5556 = vlaneseq
    %v5557 = vshrl.u32 %v5556, 7
    %v5558 = vsub.s32 0, %v5557
    %v5559 = vrot.slane %v5554, %v5558
    %v5560 = vadd.f32 %v5549, %v5559
    %v5562 = vlaneseq
    %v5563 = vshrl.u32 %v5562, 7
    %v5564 = vsub.s32 %v5124, %v5563
    %v5565 = vrot.slane %v5560, %v5564
    %vm5567 = vcmask 24576
    %5568 = vst.msk [vmem:[#allocation3] sm:$0x1] %vm5567, %v5565
    // Predicated region
    $region70: #{autoint_plus_frn.1} parent=1 // pred_check
      _
    $region71: #{autoint_plus_frn.1} parent=1 // pred_check_branch
      %5570 = sbr.rel (0) target = $region73
    $region72: #{autoint_plus_frn.1} parent=1 // pred_region
      %s5572 = ssub.s32 16, 16
      %5573 = vsyncadd [#allocation4], %s5572
      %s5575 = sshll.u32 [#allocation3], 4
      %s5576 = int_to_ptr.vmem [resolvable:$true] %s5575
      %5578 = dma.vmem_to_hbm [thread:$0]  %s5576, 16, %s17, [#allocation4]
    $region73: #{autoint_plus_frn.1} parent=1 // pred_fallthru
      _
    // Predicated region
    $region74: #{autoint_plus_frn.1} parent=1 // pred_check
      _
    $region75: #{autoint_plus_frn.1} parent=1 // pred_check_branch
      %5580 = sbr.rel (0) target = $region77
    $region76: #{autoint_plus_frn.1} parent=1 // pred_region
      %5581 = dma.done [#allocation4], 16
    $region77: #{autoint_plus_frn.1} parent=1 // pred_fallthru
      _
    %5582 = vsyncpa [#allocation4], 1

</llo_original>
